<compile_context>
chip_gen: v5e
topology: v5e:2x2
jax: 0.10.0
libtpu: 0.0.40
codegen_flags: <defaults>
</compile_context>

<pallas_src>
import functools
import math

import jax
import jax.numpy as jnp
from jax import lax
from jax.experimental import pallas as pl
from jax.experimental.pallas import tpu as pltpu

LANE = 128  # every feature block is padded to a full 128-lane boundary


def _forecast_kernel(
    obs_ref,                 # (Np, T*2)            one batch element, rows padded to Np
    w_in_ref,                # (T*2, T*4*LANE)      hoisted LSTM input projection (block-diag over t)
    b_all_ref,               # (1, T*4*LANE)        (b_ih + b_hh), gate-padded, tiled over t
    w_hh_ref,                # (LANE, 4*LANE)
    w_e1_ref, b_e1_ref,      # (LANE, LANE), (1, LANE)
    w_e2_ref, b_e2_ref,
    w_hd_ref, b_hd_ref,
    w_qkv_ref, b_qkv_ref,    # (LANE, 3*LANE), (1, 3*LANE)   fused q/k/v
    w_f_ref, b_f_ref,        # (2*LANE, LANE), (1, LANE)      forecaster
    forecast_ref,            # (Np, LANE)   out (first horizon*2 lanes valid)
    cat_ref,                 # (Np, 2*LANE) out ([v | attn], each LANE-padded)
    *, num_human, history,
):
    Np = obs_ref.shape[0]
    T = history + 1
    G = 4 * LANE

    # ---- LSTM over history; input projection hoisted out of the recurrence ----
    gates_x = (jnp.dot(obs_ref[...], w_in_ref[...], preferred_element_type=jnp.float32)
               + b_all_ref[...])                                     # (Np, T*4*LANE)
    w_hh = w_hh_ref[...]

    h = jnp.zeros((Np, LANE), jnp.float32)
    c = jnp.zeros((Np, LANE), jnp.float32)
    for t in range(T):  # T = 9, statically unrolled; only h @ w_hh on the critical path
        gates = gates_x[:, t * G:(t + 1) * G] + jnp.dot(
            h, w_hh, preferred_element_type=jnp.float32)             # (Np, 4*LANE)
        i_g = jax.nn.sigmoid(gates[:, 0 * LANE:1 * LANE])            # 128-aligned slices
        f_g = jax.nn.sigmoid(gates[:, 1 * LANE:2 * LANE])
        g_g = jnp.tanh(gates[:, 2 * LANE:3 * LANE])
        o_g = jax.nn.sigmoid(gates[:, 3 * LANE:4 * LANE])
        c = f_g * c + i_g * g_g
        h = o_g * jnp.tanh(c)
    # padding lanes of h remain exactly 0 (zero-padded weight cols / biases)

    # ---- human_encoder: ReLU -> Linear -> ReLU -> Linear -> ReLU ----
    x = jnp.maximum(h, 0.0)
    x = jnp.maximum(jnp.dot(x, w_e1_ref[...], preferred_element_type=jnp.float32)
                    + b_e1_ref[...], 0.0)
    x = jnp.maximum(jnp.dot(x, w_e2_ref[...], preferred_element_type=jnp.float32)
                    + b_e2_ref[...], 0.0)
    # ---- human_head: Linear -> ReLU ----
    hid = jnp.maximum(jnp.dot(x, w_hd_ref[...], preferred_element_type=jnp.float32)
                      + b_hd_ref[...], 0.0)

    # ---- fused q/k/v projection, 128-lane aligned slices ----
    qkv = jnp.dot(hid, w_qkv_ref[...], preferred_element_type=jnp.float32) + b_qkv_ref[...]
    q = qkv[:, 0 * LANE:1 * LANE]
    k = qkv[:, 1 * LANE:2 * LANE]
    v = qkv[:, 2 * LANE:3 * LANE]

    # ---- per-batch-element attention over the num_human agents (no k.T materialized) ----
    logits = lax.dot_general(q, k, (((1,), (1,)), ((), ())),
                             preferred_element_type=jnp.float32)     # (Np, Np)
    col = lax.broadcasted_iota(jnp.int32, (Np, Np), 1)
    valid = col < num_human                                          # mask padded agent rows
    logits = jnp.where(valid, logits, -1e30)
    m = jnp.max(logits, axis=-1, keepdims=True)
    e = jnp.where(valid, jnp.exp(logits - m), 0.0)
    softmax = e * pl.reciprocal(jnp.sum(e, axis=-1, keepdims=True), approx=True)
    attn = jnp.dot(softmax, v, preferred_element_type=jnp.float32)   # (Np, LANE)

    # ---- concat + forecaster; lane-dense output stores ----
    cat = jnp.concatenate([v, attn], axis=-1)                        # (Np, 2*LANE)
    forecast_ref[...] = (jnp.dot(cat, w_f_ref[...], preferred_element_type=jnp.float32)
                         + b_f_ref[...])
    cat_ref[...] = cat


def init_params(key, num_human=5, hidden_dim=64, history=8, horizon=12):
    """PyTorch-layout parameters (same shapes/init style as nn.LSTM / nn.Linear)."""
    H = hidden_dim
    ks = jax.random.split(key, 18)

    def uni(k, shape, fan_in):
        b = 1.0 / math.sqrt(fan_in)
        return jax.random.uniform(k, shape, jnp.float32, -b, b)

    return dict(
        w_ih=uni(ks[0], (4 * H, 2), H), w_hh=uni(ks[1], (4 * H, H), H),
        b_ih=uni(ks[2], (4 * H,), H), b_hh=uni(ks[3], (4 * H,), H),
        w_e1=uni(ks[4], (H, H), H), b_e1=uni(ks[5], (H,), H),
        w_e2=uni(ks[6], (H, H), H), b_e2=uni(ks[7], (H,), H),
        w_hd=uni(ks[8], (H, H), H), b_hd=uni(ks[9], (H,), H),
        w_q=uni(ks[10], (H, H), H), b_q=uni(ks[11], (H,), H),
        w_k=uni(ks[12], (H, H), H), b_k=uni(ks[13], (H,), H),
        w_v=uni(ks[14], (H, H), H), b_v=uni(ks[15], (H,), H),
        w_f=uni(ks[16], (horizon * 2, 2 * H), 2 * H),
        b_f=uni(ks[17], (horizon * 2,), 2 * H),
    )


def prep_params(p, *, hidden_dim=64, history=8, horizon=12):
    """Fold all static parameter math into init: transpose, gate/lane padding, fusion."""
    H = hidden_dim
    assert H <= LANE
    T = history + 1
    G = 4 * LANE

    def pad_gate_cols(w):   # (rows, 4H) -> (rows, 4*LANE): gate g in lanes [g*LANE, g*LANE+H)
        out = jnp.zeros((w.shape[0], G), jnp.float32)
        for g in range(4):
            out = out.at[:, g * LANE:g * LANE + H].set(w[:, g * H:(g + 1) * H])
        return out

    def pad2(w, r, cl):
        return jnp.zeros((r, cl), jnp.float32).at[:w.shape[0], :w.shape[1]].set(w)

    def pad_bias(b, cl):
        return jnp.zeros((1, cl), jnp.float32).at[0, :b.shape[0]].set(b)

    # LSTM: PyTorch weights are (4H, in); transpose -> (in, 4H) -> gate-pad to 128-lane blocks.
    w_ih_p = pad_gate_cols(p["w_ih"].T)                                # (2, 4*LANE)
    w_hh_p = pad2(pad_gate_cols(p["w_hh"].T), LANE, G)                 # (LANE, 4*LANE)
    bias_p = pad_gate_cols((p["b_ih"] + p["b_hh"]).reshape(1, 4 * H))  # (1, 4*LANE), fused bias

    # Hoisted input projection: obs (., T*2) @ w_in -> all per-timestep gate contributions.
    w_in = jnp.zeros((T * 2, T * G), jnp.float32)
    for t in range(T):
        w_in = w_in.at[2 * t:2 * t + 2, t * G:(t + 1) * G].set(w_ih_p)
    b_all = jnp.tile(bias_p, (1, T))                                   # (1, T*4*LANE)

    def lin(w, b):   # torch (out, in) Linear -> padded (LANE, LANE), (1, LANE)
        return pad2(w.T, LANE, LANE), pad_bias(b, LANE)

    w_e1, b_e1 = lin(p["w_e1"], p["b_e1"])
    w_e2, b_e2 = lin(p["w_e2"], p["b_e2"])
    w_hd, b_hd = lin(p["w_hd"], p["b_hd"])

    # Fused q/k/v: each head padded to its own 128-lane block.
    w_qkv = jnp.zeros((LANE, 3 * LANE), jnp.float32)
    b_qkv = jnp.zeros((1, 3 * LANE), jnp.float32)
    for i, (w, b) in enumerate(((p["w_q"], p["b_q"]), (p["w_k"], p["b_k"]),
                                (p["w_v"], p["b_v"]))):
        w_qkv = w_qkv.at[:H, i * LANE:i * LANE + H].set(w.T)
        b_qkv = b_qkv.at[0, i * LANE:i * LANE + H].set(b)

    # Forecaster: cat is [v (LANE-padded) | attn (LANE-padded)], output padded to 128 lanes.
    wfT = p["w_f"].T                                                   # (2H, horizon*2)
    w_f = jnp.zeros((2 * LANE, LANE), jnp.float32)
    w_f = w_f.at[:H, :2 * horizon].set(wfT[:H])
    w_f = w_f.at[LANE:LANE + H, :2 * horizon].set(wfT[H:])
    b_f = pad_bias(p["b_f"], LANE)

    return [w_in, b_all, w_hh_p, w_e1, b_e1, w_e2, b_e2, w_hd, b_hd,
            w_qkv, b_qkv, w_f, b_f]


def forecast_network_attention(crowd_obsv, kernel_params, *, num_human=5, hidden_dim=64,
                               history=8, horizon=12):
    # NOTE: self.transform (MultiAgentTransform) is constructed but unused in forward().
    if crowd_obsv.ndim < 4:
        crowd_obsv = crowd_obsv[None, ...]
    B = crowd_obsv.shape[0]
    H = hidden_dim
    T = history + 1
    Np = max(8, ((num_human + 7) // 8) * 8)      # sublane-pad agents per batch element

    obs = crowd_obsv.reshape(B, num_human, T * 2).astype(jnp.float32)
    obs = jnp.pad(obs, ((0, 0), (0, Np - num_human), (0, 0))).reshape(B * Np, T * 2)

    kernel = functools.partial(_forecast_kernel, num_human=num_human, history=history)

    # Weights are resident in VMEM across the whole grid (constant index_map -> no re-DMA);
    # obs / outputs are streamed one batch element (Np rows) per grid step.
    resident = [pl.BlockSpec(a.shape, lambda b: (0, 0)) for a in kernel_params]
    in_specs = [pl.BlockSpec((Np, T * 2), lambda b: (b, 0))] + resident
    out_specs = (pl.BlockSpec((Np, LANE), lambda b: (b, 0)),
                 pl.BlockSpec((Np, 2 * LANE), lambda b: (b, 0)))

    forecast_pad, cat_pad = pl.pallas_call(
        kernel,
        grid=(B,),
        out_shape=(jax.ShapeDtypeStruct((B * Np, LANE), jnp.float32),
                   jax.ShapeDtypeStruct((B * Np, 2 * LANE), jnp.float32)),
        in_specs=in_specs,
        out_specs=out_specs,
        compiler_params=pltpu.CompilerParams(dimension_semantics=("parallel",)),
    )(obs, *kernel_params)

    forecast = (forecast_pad.reshape(B, Np, LANE)[:, :num_human, :horizon * 2]
                .reshape(B, num_human, horizon, 2))
    cat_pad = cat_pad.reshape(B, Np, 2 * LANE)[:, :num_human]
    cat = jnp.concatenate([cat_pad[..., :H], cat_pad[..., LANE:LANE + H]], axis=-1)
    return forecast, cat


if __name__ == "__main__":
    key = jax.random.PRNGKey(0)
    pkey, xkey = jax.random.split(key)

    NUM_HUMAN, HIDDEN, HISTORY, HORIZON = 5, 64, 8, 12
    B = 2

    torch_layout = init_params(pkey, num_human=NUM_HUMAN, hidden_dim=HIDDEN,
                               history=HISTORY, horizon=HORIZON)
    kparams = prep_params(torch_layout, hidden_dim=HIDDEN, history=HISTORY, horizon=HORIZON)
    crowd_obsv = jax.random.normal(xkey, (B, NUM_HUMAN, HISTORY + 1, 2), jnp.float32)

    forecast, cat = forecast_network_attention(
        crowd_obsv, kparams, num_human=NUM_HUMAN, hidden_dim=HIDDEN,
        history=HISTORY, horizon=HORIZON)
    jax.block_until_ready((forecast, cat))

    assert forecast.shape == (B, NUM_HUMAN, HORIZON, 2)
    assert cat.shape == (B, NUM_HUMAN, 2 * HIDDEN)
    assert bool(jnp.all(jnp.isfinite(forecast))) and bool(jnp.all(jnp.isfinite(cat)))
    print("KERNEL_OK")
</pallas_src>

<mosaic_0001>
module attributes {stable_mosaic.version = 11 : i64} {
  func.func @_forecast_kernel(%arg0: i32, %arg1: memref<8x18xf32, #tpu.memory_space<vmem>>, %arg2: memref<18x4608xf32, #tpu.memory_space<vmem>>, %arg3: memref<1x4608xf32, #tpu.memory_space<vmem>>, %arg4: memref<128x512xf32, #tpu.memory_space<vmem>>, %arg5: memref<128x128xf32, #tpu.memory_space<vmem>>, %arg6: memref<1x128xf32, #tpu.memory_space<vmem>>, %arg7: memref<128x128xf32, #tpu.memory_space<vmem>>, %arg8: memref<1x128xf32, #tpu.memory_space<vmem>>, %arg9: memref<128x128xf32, #tpu.memory_space<vmem>>, %arg10: memref<1x128xf32, #tpu.memory_space<vmem>>, %arg11: memref<128x384xf32, #tpu.memory_space<vmem>>, %arg12: memref<1x384xf32, #tpu.memory_space<vmem>>, %arg13: memref<256x128xf32, #tpu.memory_space<vmem>>, %arg14: memref<1x128xf32, #tpu.memory_space<vmem>>, %arg15: memref<8x128xf32, #tpu.memory_space<vmem>>, %arg16: memref<8x256xf32, #tpu.memory_space<vmem>>) attributes {dimension_semantics = [#tpu.dimension_semantics<parallel>], iteration_bounds = array<i64: 2>, scalar_prefetch = 0 : i64, scratch_operands = 0 : i64, tpu.core_type = #tpu.core_type<tc>, window_params = [{transform_indices = @transform_0, window_bounds = array<i64: 8, 18>}, {pipeline_mode = #tpu.pipeline_mode<synchronous>, transform_indices = @transform_1, window_bounds = array<i64: 18, 4608>}, {pipeline_mode = #tpu.pipeline_mode<synchronous>, transform_indices = @transform_2, window_bounds = array<i64: 1, 4608>}, {pipeline_mode = #tpu.pipeline_mode<synchronous>, transform_indices = @transform_3, window_bounds = array<i64: 128, 512>}, {pipeline_mode = #tpu.pipeline_mode<synchronous>, transform_indices = @transform_4, window_bounds = array<i64: 128, 128>}, {pipeline_mode = #tpu.pipeline_mode<synchronous>, transform_indices = @transform_5, window_bounds = array<i64: 1, 128>}, {pipeline_mode = #tpu.pipeline_mode<synchronous>, transform_indices = @transform_6, window_bounds = array<i64: 128, 128>}, {pipeline_mode = #tpu.pipeline_mode<synchronous>, transform_indices = @transform_7, window_bounds = array<i64: 1, 128>}, {pipeline_mode = #tpu.pipeline_mode<synchronous>, transform_indices = @transform_8, window_bounds = array<i64: 128, 128>}, {pipeline_mode = #tpu.pipeline_mode<synchronous>, transform_indices = @transform_9, window_bounds = array<i64: 1, 128>}, {pipeline_mode = #tpu.pipeline_mode<synchronous>, transform_indices = @transform_10, window_bounds = array<i64: 128, 384>}, {pipeline_mode = #tpu.pipeline_mode<synchronous>, transform_indices = @transform_11, window_bounds = array<i64: 1, 384>}, {pipeline_mode = #tpu.pipeline_mode<synchronous>, transform_indices = @transform_12, window_bounds = array<i64: 256, 128>}, {pipeline_mode = #tpu.pipeline_mode<synchronous>, transform_indices = @transform_13, window_bounds = array<i64: 1, 128>}, {transform_indices = @transform_14, window_bounds = array<i64: 8, 128>}, {transform_indices = @transform_15, window_bounds = array<i64: 8, 256>}]} {
    %c0 = arith.constant 0 : index
    %c0_0 = arith.constant 0 : index
    %0 = vector.load %arg1[%c0, %c0_0] : memref<8x18xf32, #tpu.memory_space<vmem>>, vector<8x18xf32>
    %c0_1 = arith.constant 0 : index
    %c0_2 = arith.constant 0 : index
    %1 = vector.load %arg2[%c0_1, %c0_2] : memref<18x4608xf32, #tpu.memory_space<vmem>>, vector<18x4608xf32>
    %cst = arith.constant dense<0.000000e+00> : vector<8x4608xf32>
    %2 = tpu.matmul %0, %1, %cst {dimension_numbers = #tpu.dot_dimension_numbers<[1], [0], [0], [1], [0, 0, 1, 1], [], []>} : vector<8x18xf32>, vector<18x4608xf32>, vector<8x4608xf32> -> vector<8x4608xf32>
    %c0_3 = arith.constant 0 : index
    %c0_4 = arith.constant 0 : index
    %3 = vector.load %arg3[%c0_3, %c0_4] : memref<1x4608xf32, #tpu.memory_space<vmem>>, vector<1x4608xf32>
    %4 = vector.broadcast %3 : vector<1x4608xf32> to vector<8x4608xf32>
    %5 = arith.addf %2, %4 : vector<8x4608xf32>
    %c0_5 = arith.constant 0 : index
    %c0_6 = arith.constant 0 : index
    %6 = vector.load %arg4[%c0_5, %c0_6] : memref<128x512xf32, #tpu.memory_space<vmem>>, vector<128x512xf32>
    %cst_7 = arith.constant 0.000000e+00 : f32
    %7 = vector.broadcast %cst_7 : f32 to vector<8x128xf32>
    %cst_8 = arith.constant 0.000000e+00 : f32
    %8 = vector.broadcast %cst_8 : f32 to vector<8x128xf32>
    %9 = vector.extract_strided_slice %5 {offsets = [0, 0], sizes = [8, 512], strides = [1, 1]} : vector<8x4608xf32> to vector<8x512xf32>
    %cst_9 = arith.constant dense<0.000000e+00> : vector<8x512xf32>
    %10 = tpu.matmul %7, %6, %cst_9 {dimension_numbers = #tpu.dot_dimension_numbers<[1], [0], [0], [1], [0, 0, 1, 1], [], []>} : vector<8x128xf32>, vector<128x512xf32>, vector<8x512xf32> -> vector<8x512xf32>
    %11 = arith.addf %9, %10 : vector<8x512xf32>
    %12 = vector.extract_strided_slice %11 {offsets = [0, 0], sizes = [8, 128], strides = [1, 1]} : vector<8x512xf32> to vector<8x128xf32>
    %13 = arith.negf %12 : vector<8x128xf32>
    %14 = math.exp %13 : vector<8x128xf32>
    %cst_10 = arith.constant 1.000000e+00 : f32
    %15 = vector.broadcast %cst_10 : f32 to vector<8x128xf32>
    %16 = arith.addf %15, %14 : vector<8x128xf32>
    %17 = arith.divf %15, %16 : vector<8x128xf32>
    %18 = vector.extract_strided_slice %11 {offsets = [0, 128], sizes = [8, 128], strides = [1, 1]} : vector<8x512xf32> to vector<8x128xf32>
    %19 = arith.negf %18 : vector<8x128xf32>
    %20 = math.exp %19 : vector<8x128xf32>
    %cst_11 = arith.constant 1.000000e+00 : f32
    %21 = vector.broadcast %cst_11 : f32 to vector<8x128xf32>
    %22 = arith.addf %21, %20 : vector<8x128xf32>
    %23 = arith.divf %21, %22 : vector<8x128xf32>
    %24 = vector.extract_strided_slice %11 {offsets = [0, 256], sizes = [8, 128], strides = [1, 1]} : vector<8x512xf32> to vector<8x128xf32>
    %25 = math.tanh %24 : vector<8x128xf32>
    %26 = vector.extract_strided_slice %11 {offsets = [0, 384], sizes = [8, 128], strides = [1, 1]} : vector<8x512xf32> to vector<8x128xf32>
    %27 = arith.negf %26 : vector<8x128xf32>
    %28 = math.exp %27 : vector<8x128xf32>
    %cst_12 = arith.constant 1.000000e+00 : f32
    %29 = vector.broadcast %cst_12 : f32 to vector<8x128xf32>
    %30 = arith.addf %29, %28 : vector<8x128xf32>
    %31 = arith.divf %29, %30 : vector<8x128xf32>
    %32 = arith.mulf %23, %8 : vector<8x128xf32>
    %33 = arith.mulf %17, %25 : vector<8x128xf32>
    %34 = arith.addf %32, %33 : vector<8x128xf32>
    %35 = math.tanh %34 : vector<8x128xf32>
    %36 = arith.mulf %31, %35 : vector<8x128xf32>
    %37 = vector.extract_strided_slice %5 {offsets = [0, 512], sizes = [8, 512], strides = [1, 1]} : vector<8x4608xf32> to vector<8x512xf32>
    %cst_13 = arith.constant dense<0.000000e+00> : vector<8x512xf32>
    %38 = tpu.matmul %36, %6, %cst_13 {dimension_numbers = #tpu.dot_dimension_numbers<[1], [0], [0], [1], [0, 0, 1, 1], [], []>} : vector<8x128xf32>, vector<128x512xf32>, vector<8x512xf32> -> vector<8x512xf32>
    %39 = arith.addf %37, %38 : vector<8x512xf32>
    %40 = vector.extract_strided_slice %39 {offsets = [0, 0], sizes = [8, 128], strides = [1, 1]} : vector<8x512xf32> to vector<8x128xf32>
    %41 = arith.negf %40 : vector<8x128xf32>
    %42 = math.exp %41 : vector<8x128xf32>
    %cst_14 = arith.constant 1.000000e+00 : f32
    %43 = vector.broadcast %cst_14 : f32 to vector<8x128xf32>
    %44 = arith.addf %43, %42 : vector<8x128xf32>
    %45 = arith.divf %43, %44 : vector<8x128xf32>
    %46 = vector.extract_strided_slice %39 {offsets = [0, 128], sizes = [8, 128], strides = [1, 1]} : vector<8x512xf32> to vector<8x128xf32>
    %47 = arith.negf %46 : vector<8x128xf32>
    %48 = math.exp %47 : vector<8x128xf32>
    %cst_15 = arith.constant 1.000000e+00 : f32
    %49 = vector.broadcast %cst_15 : f32 to vector<8x128xf32>
    %50 = arith.addf %49, %48 : vector<8x128xf32>
    %51 = arith.divf %49, %50 : vector<8x128xf32>
    %52 = vector.extract_strided_slice %39 {offsets = [0, 256], sizes = [8, 128], strides = [1, 1]} : vector<8x512xf32> to vector<8x128xf32>
    %53 = math.tanh %52 : vector<8x128xf32>
    %54 = vector.extract_strided_slice %39 {offsets = [0, 384], sizes = [8, 128], strides = [1, 1]} : vector<8x512xf32> to vector<8x128xf32>
    %55 = arith.negf %54 : vector<8x128xf32>
    %56 = math.exp %55 : vector<8x128xf32>
    %cst_16 = arith.constant 1.000000e+00 : f32
    %57 = vector.broadcast %cst_16 : f32 to vector<8x128xf32>
    %58 = arith.addf %57, %56 : vector<8x128xf32>
    %59 = arith.divf %57, %58 : vector<8x128xf32>
    %60 = arith.mulf %51, %34 : vector<8x128xf32>
    %61 = arith.mulf %45, %53 : vector<8x128xf32>
    %62 = arith.addf %60, %61 : vector<8x128xf32>
    %63 = math.tanh %62 : vector<8x128xf32>
    %64 = arith.mulf %59, %63 : vector<8x128xf32>
    %65 = vector.extract_strided_slice %5 {offsets = [0, 1024], sizes = [8, 512], strides = [1, 1]} : vector<8x4608xf32> to vector<8x512xf32>
    %cst_17 = arith.constant dense<0.000000e+00> : vector<8x512xf32>
    %66 = tpu.matmul %64, %6, %cst_17 {dimension_numbers = #tpu.dot_dimension_numbers<[1], [0], [0], [1], [0, 0, 1, 1], [], []>} : vector<8x128xf32>, vector<128x512xf32>, vector<8x512xf32> -> vector<8x512xf32>
    %67 = arith.addf %65, %66 : vector<8x512xf32>
    %68 = vector.extract_strided_slice %67 {offsets = [0, 0], sizes = [8, 128], strides = [1, 1]} : vector<8x512xf32> to vector<8x128xf32>
    %69 = arith.negf %68 : vector<8x128xf32>
    %70 = math.exp %69 : vector<8x128xf32>
    %cst_18 = arith.constant 1.000000e+00 : f32
    %71 = vector.broadcast %cst_18 : f32 to vector<8x128xf32>
    %72 = arith.addf %71, %70 : vector<8x128xf32>
    %73 = arith.divf %71, %72 : vector<8x128xf32>
    %74 = vector.extract_strided_slice %67 {offsets = [0, 128], sizes = [8, 128], strides = [1, 1]} : vector<8x512xf32> to vector<8x128xf32>
    %75 = arith.negf %74 : vector<8x128xf32>
    %76 = math.exp %75 : vector<8x128xf32>
    %cst_19 = arith.constant 1.000000e+00 : f32
    %77 = vector.broadcast %cst_19 : f32 to vector<8x128xf32>
    %78 = arith.addf %77, %76 : vector<8x128xf32>
    %79 = arith.divf %77, %78 : vector<8x128xf32>
    %80 = vector.extract_strided_slice %67 {offsets = [0, 256], sizes = [8, 128], strides = [1, 1]} : vector<8x512xf32> to vector<8x128xf32>
    %81 = math.tanh %80 : vector<8x128xf32>
    %82 = vector.extract_strided_slice %67 {offsets = [0, 384], sizes = [8, 128], strides = [1, 1]} : vector<8x512xf32> to vector<8x128xf32>
    %83 = arith.negf %82 : vector<8x128xf32>
    %84 = math.exp %83 : vector<8x128xf32>
    %cst_20 = arith.constant 1.000000e+00 : f32
    %85 = vector.broadcast %cst_20 : f32 to vector<8x128xf32>
    %86 = arith.addf %85, %84 : vector<8x128xf32>
    %87 = arith.divf %85, %86 : vector<8x128xf32>
    %88 = arith.mulf %79, %62 : vector<8x128xf32>
    %89 = arith.mulf %73, %81 : vector<8x128xf32>
    %90 = arith.addf %88, %89 : vector<8x128xf32>
    %91 = math.tanh %90 : vector<8x128xf32>
    %92 = arith.mulf %87, %91 : vector<8x128xf32>
    %93 = vector.extract_strided_slice %5 {offsets = [0, 1536], sizes = [8, 512], strides = [1, 1]} : vector<8x4608xf32> to vector<8x512xf32>
    %cst_21 = arith.constant dense<0.000000e+00> : vector<8x512xf32>
    %94 = tpu.matmul %92, %6, %cst_21 {dimension_numbers = #tpu.dot_dimension_numbers<[1], [0], [0], [1], [0, 0, 1, 1], [], []>} : vector<8x128xf32>, vector<128x512xf32>, vector<8x512xf32> -> vector<8x512xf32>
    %95 = arith.addf %93, %94 : vector<8x512xf32>
    %96 = vector.extract_strided_slice %95 {offsets = [0, 0], sizes = [8, 128], strides = [1, 1]} : vector<8x512xf32> to vector<8x128xf32>
    %97 = arith.negf %96 : vector<8x128xf32>
    %98 = math.exp %97 : vector<8x128xf32>
    %cst_22 = arith.constant 1.000000e+00 : f32
    %99 = vector.broadcast %cst_22 : f32 to vector<8x128xf32>
    %100 = arith.addf %99, %98 : vector<8x128xf32>
    %101 = arith.divf %99, %100 : vector<8x128xf32>
    %102 = vector.extract_strided_slice %95 {offsets = [0, 128], sizes = [8, 128], strides = [1, 1]} : vector<8x512xf32> to vector<8x128xf32>
    %103 = arith.negf %102 : vector<8x128xf32>
    %104 = math.exp %103 : vector<8x128xf32>
    %cst_23 = arith.constant 1.000000e+00 : f32
    %105 = vector.broadcast %cst_23 : f32 to vector<8x128xf32>
    %106 = arith.addf %105, %104 : vector<8x128xf32>
    %107 = arith.divf %105, %106 : vector<8x128xf32>
    %108 = vector.extract_strided_slice %95 {offsets = [0, 256], sizes = [8, 128], strides = [1, 1]} : vector<8x512xf32> to vector<8x128xf32>
    %109 = math.tanh %108 : vector<8x128xf32>
    %110 = vector.extract_strided_slice %95 {offsets = [0, 384], sizes = [8, 128], strides = [1, 1]} : vector<8x512xf32> to vector<8x128xf32>
    %111 = arith.negf %110 : vector<8x128xf32>
    %112 = math.exp %111 : vector<8x128xf32>
    %cst_24 = arith.constant 1.000000e+00 : f32
    %113 = vector.broadcast %cst_24 : f32 to vector<8x128xf32>
    %114 = arith.addf %113, %112 : vector<8x128xf32>
    %115 = arith.divf %113, %114 : vector<8x128xf32>
    %116 = arith.mulf %107, %90 : vector<8x128xf32>
    %117 = arith.mulf %101, %109 : vector<8x128xf32>
    %118 = arith.addf %116, %117 : vector<8x128xf32>
    %119 = math.tanh %118 : vector<8x128xf32>
    %120 = arith.mulf %115, %119 : vector<8x128xf32>
    %121 = vector.extract_strided_slice %5 {offsets = [0, 2048], sizes = [8, 512], strides = [1, 1]} : vector<8x4608xf32> to vector<8x512xf32>
    %cst_25 = arith.constant dense<0.000000e+00> : vector<8x512xf32>
    %122 = tpu.matmul %120, %6, %cst_25 {dimension_numbers = #tpu.dot_dimension_numbers<[1], [0], [0], [1], [0, 0, 1, 1], [], []>} : vector<8x128xf32>, vector<128x512xf32>, vector<8x512xf32> -> vector<8x512xf32>
    %123 = arith.addf %121, %122 : vector<8x512xf32>
    %124 = vector.extract_strided_slice %123 {offsets = [0, 0], sizes = [8, 128], strides = [1, 1]} : vector<8x512xf32> to vector<8x128xf32>
    %125 = arith.negf %124 : vector<8x128xf32>
    %126 = math.exp %125 : vector<8x128xf32>
    %cst_26 = arith.constant 1.000000e+00 : f32
    %127 = vector.broadcast %cst_26 : f32 to vector<8x128xf32>
    %128 = arith.addf %127, %126 : vector<8x128xf32>
    %129 = arith.divf %127, %128 : vector<8x128xf32>
    %130 = vector.extract_strided_slice %123 {offsets = [0, 128], sizes = [8, 128], strides = [1, 1]} : vector<8x512xf32> to vector<8x128xf32>
    %131 = arith.negf %130 : vector<8x128xf32>
    %132 = math.exp %131 : vector<8x128xf32>
    %cst_27 = arith.constant 1.000000e+00 : f32
    %133 = vector.broadcast %cst_27 : f32 to vector<8x128xf32>
    %134 = arith.addf %133, %132 : vector<8x128xf32>
    %135 = arith.divf %133, %134 : vector<8x128xf32>
    %136 = vector.extract_strided_slice %123 {offsets = [0, 256], sizes = [8, 128], strides = [1, 1]} : vector<8x512xf32> to vector<8x128xf32>
    %137 = math.tanh %136 : vector<8x128xf32>
    %138 = vector.extract_strided_slice %123 {offsets = [0, 384], sizes = [8, 128], strides = [1, 1]} : vector<8x512xf32> to vector<8x128xf32>
    %139 = arith.negf %138 : vector<8x128xf32>
    %140 = math.exp %139 : vector<8x128xf32>
    %cst_28 = arith.constant 1.000000e+00 : f32
    %141 = vector.broadcast %cst_28 : f32 to vector<8x128xf32>
    %142 = arith.addf %141, %140 : vector<8x128xf32>
    %143 = arith.divf %141, %142 : vector<8x128xf32>
    %144 = arith.mulf %135, %118 : vector<8x128xf32>
    %145 = arith.mulf %129, %137 : vector<8x128xf32>
    %146 = arith.addf %144, %145 : vector<8x128xf32>
    %147 = math.tanh %146 : vector<8x128xf32>
    %148 = arith.mulf %143, %147 : vector<8x128xf32>
    %149 = vector.extract_strided_slice %5 {offsets = [0, 2560], sizes = [8, 512], strides = [1, 1]} : vector<8x4608xf32> to vector<8x512xf32>
    %cst_29 = arith.constant dense<0.000000e+00> : vector<8x512xf32>
    %150 = tpu.matmul %148, %6, %cst_29 {dimension_numbers = #tpu.dot_dimension_numbers<[1], [0], [0], [1], [0, 0, 1, 1], [], []>} : vector<8x128xf32>, vector<128x512xf32>, vector<8x512xf32> -> vector<8x512xf32>
    %151 = arith.addf %149, %150 : vector<8x512xf32>
    %152 = vector.extract_strided_slice %151 {offsets = [0, 0], sizes = [8, 128], strides = [1, 1]} : vector<8x512xf32> to vector<8x128xf32>
    %153 = arith.negf %152 : vector<8x128xf32>
    %154 = math.exp %153 : vector<8x128xf32>
    %cst_30 = arith.constant 1.000000e+00 : f32
    %155 = vector.broadcast %cst_30 : f32 to vector<8x128xf32>
    %156 = arith.addf %155, %154 : vector<8x128xf32>
    %157 = arith.divf %155, %156 : vector<8x128xf32>
    %158 = vector.extract_strided_slice %151 {offsets = [0, 128], sizes = [8, 128], strides = [1, 1]} : vector<8x512xf32> to vector<8x128xf32>
    %159 = arith.negf %158 : vector<8x128xf32>
    %160 = math.exp %159 : vector<8x128xf32>
    %cst_31 = arith.constant 1.000000e+00 : f32
    %161 = vector.broadcast %cst_31 : f32 to vector<8x128xf32>
    %162 = arith.addf %161, %160 : vector<8x128xf32>
    %163 = arith.divf %161, %162 : vector<8x128xf32>
    %164 = vector.extract_strided_slice %151 {offsets = [0, 256], sizes = [8, 128], strides = [1, 1]} : vector<8x512xf32> to vector<8x128xf32>
    %165 = math.tanh %164 : vector<8x128xf32>
    %166 = vector.extract_strided_slice %151 {offsets = [0, 384], sizes = [8, 128], strides = [1, 1]} : vector<8x512xf32> to vector<8x128xf32>
    %167 = arith.negf %166 : vector<8x128xf32>
    %168 = math.exp %167 : vector<8x128xf32>
    %cst_32 = arith.constant 1.000000e+00 : f32
    %169 = vector.broadcast %cst_32 : f32 to vector<8x128xf32>
    %170 = arith.addf %169, %168 : vector<8x128xf32>
    %171 = arith.divf %169, %170 : vector<8x128xf32>
    %172 = arith.mulf %163, %146 : vector<8x128xf32>
    %173 = arith.mulf %157, %165 : vector<8x128xf32>
    %174 = arith.addf %172, %173 : vector<8x128xf32>
    %175 = math.tanh %174 : vector<8x128xf32>
    %176 = arith.mulf %171, %175 : vector<8x128xf32>
    %177 = vector.extract_strided_slice %5 {offsets = [0, 3072], sizes = [8, 512], strides = [1, 1]} : vector<8x4608xf32> to vector<8x512xf32>
    %cst_33 = arith.constant dense<0.000000e+00> : vector<8x512xf32>
    %178 = tpu.matmul %176, %6, %cst_33 {dimension_numbers = #tpu.dot_dimension_numbers<[1], [0], [0], [1], [0, 0, 1, 1], [], []>} : vector<8x128xf32>, vector<128x512xf32>, vector<8x512xf32> -> vector<8x512xf32>
    %179 = arith.addf %177, %178 : vector<8x512xf32>
    %180 = vector.extract_strided_slice %179 {offsets = [0, 0], sizes = [8, 128], strides = [1, 1]} : vector<8x512xf32> to vector<8x128xf32>
    %181 = arith.negf %180 : vector<8x128xf32>
    %182 = math.exp %181 : vector<8x128xf32>
    %cst_34 = arith.constant 1.000000e+00 : f32
    %183 = vector.broadcast %cst_34 : f32 to vector<8x128xf32>
    %184 = arith.addf %183, %182 : vector<8x128xf32>
    %185 = arith.divf %183, %184 : vector<8x128xf32>
    %186 = vector.extract_strided_slice %179 {offsets = [0, 128], sizes = [8, 128], strides = [1, 1]} : vector<8x512xf32> to vector<8x128xf32>
    %187 = arith.negf %186 : vector<8x128xf32>
    %188 = math.exp %187 : vector<8x128xf32>
    %cst_35 = arith.constant 1.000000e+00 : f32
    %189 = vector.broadcast %cst_35 : f32 to vector<8x128xf32>
    %190 = arith.addf %189, %188 : vector<8x128xf32>
    %191 = arith.divf %189, %190 : vector<8x128xf32>
    %192 = vector.extract_strided_slice %179 {offsets = [0, 256], sizes = [8, 128], strides = [1, 1]} : vector<8x512xf32> to vector<8x128xf32>
    %193 = math.tanh %192 : vector<8x128xf32>
    %194 = vector.extract_strided_slice %179 {offsets = [0, 384], sizes = [8, 128], strides = [1, 1]} : vector<8x512xf32> to vector<8x128xf32>
    %195 = arith.negf %194 : vector<8x128xf32>
    %196 = math.exp %195 : vector<8x128xf32>
    %cst_36 = arith.constant 1.000000e+00 : f32
    %197 = vector.broadcast %cst_36 : f32 to vector<8x128xf32>
    %198 = arith.addf %197, %196 : vector<8x128xf32>
    %199 = arith.divf %197, %198 : vector<8x128xf32>
    %200 = arith.mulf %191, %174 : vector<8x128xf32>
    %201 = arith.mulf %185, %193 : vector<8x128xf32>
    %202 = arith.addf %200, %201 : vector<8x128xf32>
    %203 = math.tanh %202 : vector<8x128xf32>
    %204 = arith.mulf %199, %203 : vector<8x128xf32>
    %205 = vector.extract_strided_slice %5 {offsets = [0, 3584], sizes = [8, 512], strides = [1, 1]} : vector<8x4608xf32> to vector<8x512xf32>
    %cst_37 = arith.constant dense<0.000000e+00> : vector<8x512xf32>
    %206 = tpu.matmul %204, %6, %cst_37 {dimension_numbers = #tpu.dot_dimension_numbers<[1], [0], [0], [1], [0, 0, 1, 1], [], []>} : vector<8x128xf32>, vector<128x512xf32>, vector<8x512xf32> -> vector<8x512xf32>
    %207 = arith.addf %205, %206 : vector<8x512xf32>
    %208 = vector.extract_strided_slice %207 {offsets = [0, 0], sizes = [8, 128], strides = [1, 1]} : vector<8x512xf32> to vector<8x128xf32>
    %209 = arith.negf %208 : vector<8x128xf32>
    %210 = math.exp %209 : vector<8x128xf32>
    %cst_38 = arith.constant 1.000000e+00 : f32
    %211 = vector.broadcast %cst_38 : f32 to vector<8x128xf32>
    %212 = arith.addf %211, %210 : vector<8x128xf32>
    %213 = arith.divf %211, %212 : vector<8x128xf32>
    %214 = vector.extract_strided_slice %207 {offsets = [0, 128], sizes = [8, 128], strides = [1, 1]} : vector<8x512xf32> to vector<8x128xf32>
    %215 = arith.negf %214 : vector<8x128xf32>
    %216 = math.exp %215 : vector<8x128xf32>
    %cst_39 = arith.constant 1.000000e+00 : f32
    %217 = vector.broadcast %cst_39 : f32 to vector<8x128xf32>
    %218 = arith.addf %217, %216 : vector<8x128xf32>
    %219 = arith.divf %217, %218 : vector<8x128xf32>
    %220 = vector.extract_strided_slice %207 {offsets = [0, 256], sizes = [8, 128], strides = [1, 1]} : vector<8x512xf32> to vector<8x128xf32>
    %221 = math.tanh %220 : vector<8x128xf32>
    %222 = vector.extract_strided_slice %207 {offsets = [0, 384], sizes = [8, 128], strides = [1, 1]} : vector<8x512xf32> to vector<8x128xf32>
    %223 = arith.negf %222 : vector<8x128xf32>
    %224 = math.exp %223 : vector<8x128xf32>
    %cst_40 = arith.constant 1.000000e+00 : f32
    %225 = vector.broadcast %cst_40 : f32 to vector<8x128xf32>
    %226 = arith.addf %225, %224 : vector<8x128xf32>
    %227 = arith.divf %225, %226 : vector<8x128xf32>
    %228 = arith.mulf %219, %202 : vector<8x128xf32>
    %229 = arith.mulf %213, %221 : vector<8x128xf32>
    %230 = arith.addf %228, %229 : vector<8x128xf32>
    %231 = math.tanh %230 : vector<8x128xf32>
    %232 = arith.mulf %227, %231 : vector<8x128xf32>
    %233 = vector.extract_strided_slice %5 {offsets = [0, 4096], sizes = [8, 512], strides = [1, 1]} : vector<8x4608xf32> to vector<8x512xf32>
    %cst_41 = arith.constant dense<0.000000e+00> : vector<8x512xf32>
    %234 = tpu.matmul %232, %6, %cst_41 {dimension_numbers = #tpu.dot_dimension_numbers<[1], [0], [0], [1], [0, 0, 1, 1], [], []>} : vector<8x128xf32>, vector<128x512xf32>, vector<8x512xf32> -> vector<8x512xf32>
    %235 = arith.addf %233, %234 : vector<8x512xf32>
    %236 = vector.extract_strided_slice %235 {offsets = [0, 0], sizes = [8, 128], strides = [1, 1]} : vector<8x512xf32> to vector<8x128xf32>
    %237 = arith.negf %236 : vector<8x128xf32>
    %238 = math.exp %237 : vector<8x128xf32>
    %cst_42 = arith.constant 1.000000e+00 : f32
    %239 = vector.broadcast %cst_42 : f32 to vector<8x128xf32>
    %240 = arith.addf %239, %238 : vector<8x128xf32>
    %241 = arith.divf %239, %240 : vector<8x128xf32>
    %242 = vector.extract_strided_slice %235 {offsets = [0, 128], sizes = [8, 128], strides = [1, 1]} : vector<8x512xf32> to vector<8x128xf32>
    %243 = arith.negf %242 : vector<8x128xf32>
    %244 = math.exp %243 : vector<8x128xf32>
    %cst_43 = arith.constant 1.000000e+00 : f32
    %245 = vector.broadcast %cst_43 : f32 to vector<8x128xf32>
    %246 = arith.addf %245, %244 : vector<8x128xf32>
    %247 = arith.divf %245, %246 : vector<8x128xf32>
    %248 = vector.extract_strided_slice %235 {offsets = [0, 256], sizes = [8, 128], strides = [1, 1]} : vector<8x512xf32> to vector<8x128xf32>
    %249 = math.tanh %248 : vector<8x128xf32>
    %250 = vector.extract_strided_slice %235 {offsets = [0, 384], sizes = [8, 128], strides = [1, 1]} : vector<8x512xf32> to vector<8x128xf32>
    %251 = arith.negf %250 : vector<8x128xf32>
    %252 = math.exp %251 : vector<8x128xf32>
    %cst_44 = arith.constant 1.000000e+00 : f32
    %253 = vector.broadcast %cst_44 : f32 to vector<8x128xf32>
    %254 = arith.addf %253, %252 : vector<8x128xf32>
    %255 = arith.divf %253, %254 : vector<8x128xf32>
    %256 = arith.mulf %247, %230 : vector<8x128xf32>
    %257 = arith.mulf %241, %249 : vector<8x128xf32>
    %258 = arith.addf %256, %257 : vector<8x128xf32>
    %259 = math.tanh %258 : vector<8x128xf32>
    %260 = arith.mulf %255, %259 : vector<8x128xf32>
    %cst_45 = arith.constant 0.000000e+00 : f32
    %261 = vector.broadcast %cst_45 : f32 to vector<8x128xf32>
    %262 = arith.maximumf %260, %261 : vector<8x128xf32>
    %c0_46 = arith.constant 0 : index
    %c0_47 = arith.constant 0 : index
    %263 = vector.load %arg5[%c0_46, %c0_47] : memref<128x128xf32, #tpu.memory_space<vmem>>, vector<128x128xf32>
    %cst_48 = arith.constant dense<0.000000e+00> : vector<8x128xf32>
    %264 = tpu.matmul %262, %263, %cst_48 {dimension_numbers = #tpu.dot_dimension_numbers<[1], [0], [0], [1], [0, 0, 1, 1], [], []>} : vector<8x128xf32>, vector<128x128xf32>, vector<8x128xf32> -> vector<8x128xf32>
    %c0_49 = arith.constant 0 : index
    %c0_50 = arith.constant 0 : index
    %265 = vector.load %arg6[%c0_49, %c0_50] : memref<1x128xf32, #tpu.memory_space<vmem>>, vector<1x128xf32>
    %266 = vector.broadcast %265 : vector<1x128xf32> to vector<8x128xf32>
    %267 = arith.addf %264, %266 : vector<8x128xf32>
    %cst_51 = arith.constant 0.000000e+00 : f32
    %268 = vector.broadcast %cst_51 : f32 to vector<8x128xf32>
    %269 = arith.maximumf %267, %268 : vector<8x128xf32>
    %c0_52 = arith.constant 0 : index
    %c0_53 = arith.constant 0 : index
    %270 = vector.load %arg7[%c0_52, %c0_53] : memref<128x128xf32, #tpu.memory_space<vmem>>, vector<128x128xf32>
    %cst_54 = arith.constant dense<0.000000e+00> : vector<8x128xf32>
    %271 = tpu.matmul %269, %270, %cst_54 {dimension_numbers = #tpu.dot_dimension_numbers<[1], [0], [0], [1], [0, 0, 1, 1], [], []>} : vector<8x128xf32>, vector<128x128xf32>, vector<8x128xf32> -> vector<8x128xf32>
    %c0_55 = arith.constant 0 : index
    %c0_56 = arith.constant 0 : index
    %272 = vector.load %arg8[%c0_55, %c0_56] : memref<1x128xf32, #tpu.memory_space<vmem>>, vector<1x128xf32>
    %273 = vector.broadcast %272 : vector<1x128xf32> to vector<8x128xf32>
    %274 = arith.addf %271, %273 : vector<8x128xf32>
    %cst_57 = arith.constant 0.000000e+00 : f32
    %275 = vector.broadcast %cst_57 : f32 to vector<8x128xf32>
    %276 = arith.maximumf %274, %275 : vector<8x128xf32>
    %c0_58 = arith.constant 0 : index
    %c0_59 = arith.constant 0 : index
    %277 = vector.load %arg9[%c0_58, %c0_59] : memref<128x128xf32, #tpu.memory_space<vmem>>, vector<128x128xf32>
    %cst_60 = arith.constant dense<0.000000e+00> : vector<8x128xf32>
    %278 = tpu.matmul %276, %277, %cst_60 {dimension_numbers = #tpu.dot_dimension_numbers<[1], [0], [0], [1], [0, 0, 1, 1], [], []>} : vector<8x128xf32>, vector<128x128xf32>, vector<8x128xf32> -> vector<8x128xf32>
    %c0_61 = arith.constant 0 : index
    %c0_62 = arith.constant 0 : index
    %279 = vector.load %arg10[%c0_61, %c0_62] : memref<1x128xf32, #tpu.memory_space<vmem>>, vector<1x128xf32>
    %280 = vector.broadcast %279 : vector<1x128xf32> to vector<8x128xf32>
    %281 = arith.addf %278, %280 : vector<8x128xf32>
    %cst_63 = arith.constant 0.000000e+00 : f32
    %282 = vector.broadcast %cst_63 : f32 to vector<8x128xf32>
    %283 = arith.maximumf %281, %282 : vector<8x128xf32>
    %c0_64 = arith.constant 0 : index
    %c0_65 = arith.constant 0 : index
    %284 = vector.load %arg11[%c0_64, %c0_65] : memref<128x384xf32, #tpu.memory_space<vmem>>, vector<128x384xf32>
    %cst_66 = arith.constant dense<0.000000e+00> : vector<8x384xf32>
    %285 = tpu.matmul %283, %284, %cst_66 {dimension_numbers = #tpu.dot_dimension_numbers<[1], [0], [0], [1], [0, 0, 1, 1], [], []>} : vector<8x128xf32>, vector<128x384xf32>, vector<8x384xf32> -> vector<8x384xf32>
    %c0_67 = arith.constant 0 : index
    %c0_68 = arith.constant 0 : index
    %286 = vector.load %arg12[%c0_67, %c0_68] : memref<1x384xf32, #tpu.memory_space<vmem>>, vector<1x384xf32>
    %287 = vector.broadcast %286 : vector<1x384xf32> to vector<8x384xf32>
    %288 = arith.addf %285, %287 : vector<8x384xf32>
    %289 = vector.extract_strided_slice %288 {offsets = [0, 0], sizes = [8, 128], strides = [1, 1]} : vector<8x384xf32> to vector<8x128xf32>
    %290 = vector.extract_strided_slice %288 {offsets = [0, 128], sizes = [8, 128], strides = [1, 1]} : vector<8x384xf32> to vector<8x128xf32>
    %291 = vector.extract_strided_slice %288 {offsets = [0, 256], sizes = [8, 128], strides = [1, 1]} : vector<8x384xf32> to vector<8x128xf32>
    %cst_69 = arith.constant dense<0.000000e+00> : vector<8x8xf32>
    %292 = tpu.matmul %289, %290, %cst_69 {dimension_numbers = #tpu.dot_dimension_numbers<[1], [1], [0], [0], [0, 0, 1, 0], [], []>} : vector<8x128xf32>, vector<8x128xf32>, vector<8x8xf32> -> vector<8x8xf32>
    %293 = tpu.iota {dimensions = array<i32: 1>} : vector<8x8xi32>
    %c5_i32 = arith.constant 5 : i32
    %294 = vector.broadcast %c5_i32 : i32 to vector<8x8xi32>
    %295 = arith.cmpi slt, %293, %294 : vector<8x8xi32>
    %cst_70 = arith.constant -1.000000e+30 : f32
    %296 = vector.broadcast %cst_70 : f32 to vector<8x8xf32>
    %297 = arith.select %295, %292, %296 : vector<8x8xi1>, vector<8x8xf32>
    %cst_71 = arith.constant dense<0xFF800000> : vector<8xf32>
    %298 = vector.multi_reduction <maximumf>, %297, %cst_71 [1] : vector<8x8xf32> to vector<8xf32>
    %299 = vector.shape_cast %298 : vector<8xf32> to vector<8x1xf32>
    %300 = vector.broadcast %299 : vector<8x1xf32> to vector<8x8xf32>
    %301 = arith.subf %297, %300 : vector<8x8xf32>
    %302 = math.exp %301 : vector<8x8xf32>
    %cst_72 = arith.constant 0.000000e+00 : f32
    %303 = vector.broadcast %cst_72 : f32 to vector<8x8xf32>
    %304 = arith.select %295, %302, %303 : vector<8x8xi1>, vector<8x8xf32>
    %cst_73 = arith.constant dense<0.000000e+00> : vector<8xf32>
    %305 = vector.multi_reduction <add>, %304, %cst_73 [1] : vector<8x8xf32> to vector<8xf32>
    %306 = vector.shape_cast %305 : vector<8xf32> to vector<8x1xf32>
    %307 = tpu.reciprocal %306 {approx = true} : vector<8x1xf32> -> vector<8x1xf32>
    %308 = vector.broadcast %307 : vector<8x1xf32> to vector<8x8xf32>
    %309 = arith.mulf %304, %308 : vector<8x8xf32>
    %cst_74 = arith.constant dense<0.000000e+00> : vector<8x128xf32>
    %310 = tpu.matmul %309, %291, %cst_74 {dimension_numbers = #tpu.dot_dimension_numbers<[1], [0], [0], [1], [0, 0, 1, 1], [], []>} : vector<8x8xf32>, vector<8x128xf32>, vector<8x128xf32> -> vector<8x128xf32>
    %311 = tpu.concatenate %291, %310 in 1 : vector<8x128xf32>, vector<8x128xf32> -> vector<8x256xf32>
    %c0_75 = arith.constant 0 : index
    %c0_76 = arith.constant 0 : index
    %312 = vector.load %arg13[%c0_75, %c0_76] : memref<256x128xf32, #tpu.memory_space<vmem>>, vector<256x128xf32>
    %cst_77 = arith.constant dense<0.000000e+00> : vector<8x128xf32>
    %313 = tpu.matmul %311, %312, %cst_77 {dimension_numbers = #tpu.dot_dimension_numbers<[1], [0], [0], [1], [0, 0, 1, 1], [], []>} : vector<8x256xf32>, vector<256x128xf32>, vector<8x128xf32> -> vector<8x128xf32>
    %c0_78 = arith.constant 0 : index
    %c0_79 = arith.constant 0 : index
    %314 = vector.load %arg14[%c0_78, %c0_79] : memref<1x128xf32, #tpu.memory_space<vmem>>, vector<1x128xf32>
    %315 = vector.broadcast %314 : vector<1x128xf32> to vector<8x128xf32>
    %316 = arith.addf %313, %315 : vector<8x128xf32>
    %c0_80 = arith.constant 0 : index
    %c0_81 = arith.constant 0 : index
    %317 = vector.load %arg15[%c0_80, %c0_81] : memref<8x128xf32, #tpu.memory_space<vmem>>, vector<8x128xf32>
    tpu.vector_store %arg15[%c0_80, %c0_81], %316 {strides = array<i32>} : memref<8x128xf32, #tpu.memory_space<vmem>>, vector<8x128xf32>,
    %c0_82 = arith.constant 0 : index
    %c0_83 = arith.constant 0 : index
    %318 = vector.load %arg16[%c0_82, %c0_83] : memref<8x256xf32, #tpu.memory_space<vmem>>, vector<8x256xf32>
    tpu.vector_store %arg16[%c0_82, %c0_83], %311 {strides = array<i32>} : memref<8x256xf32, #tpu.memory_space<vmem>>, vector<8x256xf32>,
    return
  }
  func.func @transform_0(%arg0: i32) -> (i32, i32) {
    %c0_i32 = arith.constant 0 : i32
    %c0_i32_0 = arith.constant 0 : i32
    return %arg0, %c0_i32 : i32, i32
  }
  func.func @transform_1(%arg0: i32) -> (i32, i32) {
    %c0_i32 = arith.constant 0 : i32
    %c0_i32_0 = arith.constant 0 : i32
    %c0_i32_1 = arith.constant 0 : i32
    return %c0_i32, %c0_i32_0 : i32, i32
  }
  func.func @transform_2(%arg0: i32) -> (i32, i32) {
    %c0_i32 = arith.constant 0 : i32
    %c0_i32_0 = arith.constant 0 : i32
    %c0_i32_1 = arith.constant 0 : i32
    return %c0_i32, %c0_i32_0 : i32, i32
  }
  func.func @transform_3(%arg0: i32) -> (i32, i32) {
    %c0_i32 = arith.constant 0 : i32
    %c0_i32_0 = arith.constant 0 : i32
    %c0_i32_1 = arith.constant 0 : i32
    return %c0_i32, %c0_i32_0 : i32, i32
  }
  func.func @transform_4(%arg0: i32) -> (i32, i32) {
    %c0_i32 = arith.constant 0 : i32
    %c0_i32_0 = arith.constant 0 : i32
    %c0_i32_1 = arith.constant 0 : i32
    return %c0_i32, %c0_i32_0 : i32, i32
  }
  func.func @transform_5(%arg0: i32) -> (i32, i32) {
    %c0_i32 = arith.constant 0 : i32
    %c0_i32_0 = arith.constant 0 : i32
    %c0_i32_1 = arith.constant 0 : i32
    return %c0_i32, %c0_i32_0 : i32, i32
  }
  func.func @transform_6(%arg0: i32) -> (i32, i32) {
    %c0_i32 = arith.constant 0 : i32
    %c0_i32_0 = arith.constant 0 : i32
    %c0_i32_1 = arith.constant 0 : i32
    return %c0_i32, %c0_i32_0 : i32, i32
  }
  func.func @transform_7(%arg0: i32) -> (i32, i32) {
    %c0_i32 = arith.constant 0 : i32
    %c0_i32_0 = arith.constant 0 : i32
    %c0_i32_1 = arith.constant 0 : i32
    return %c0_i32, %c0_i32_0 : i32, i32
  }
  func.func @transform_8(%arg0: i32) -> (i32, i32) {
    %c0_i32 = arith.constant 0 : i32
    %c0_i32_0 = arith.constant 0 : i32
    %c0_i32_1 = arith.constant 0 : i32
    return %c0_i32, %c0_i32_0 : i32, i32
  }
  func.func @transform_9(%arg0: i32) -> (i32, i32) {
    %c0_i32 = arith.constant 0 : i32
    %c0_i32_0 = arith.constant 0 : i32
    %c0_i32_1 = arith.constant 0 : i32
    return %c0_i32, %c0_i32_0 : i32, i32
  }
  func.func @transform_10(%arg0: i32) -> (i32, i32) {
    %c0_i32 = arith.constant 0 : i32
    %c0_i32_0 = arith.constant 0 : i32
    %c0_i32_1 = arith.constant 0 : i32
    return %c0_i32, %c0_i32_0 : i32, i32
  }
  func.func @transform_11(%arg0: i32) -> (i32, i32) {
    %c0_i32 = arith.constant 0 : i32
    %c0_i32_0 = arith.constant 0 : i32
    %c0_i32_1 = arith.constant 0 : i32
    return %c0_i32, %c0_i32_0 : i32, i32
  }
  func.func @transform_12(%arg0: i32) -> (i32, i32) {
    %c0_i32 = arith.constant 0 : i32
    %c0_i32_0 = arith.constant 0 : i32
    %c0_i32_1 = arith.constant 0 : i32
    return %c0_i32, %c0_i32_0 : i32, i32
  }
  func.func @transform_13(%arg0: i32) -> (i32, i32) {
    %c0_i32 = arith.constant 0 : i32
    %c0_i32_0 = arith.constant 0 : i32
    %c0_i32_1 = arith.constant 0 : i32
    return %c0_i32, %c0_i32_0 : i32, i32
  }
  func.func @transform_14(%arg0: i32) -> (i32, i32) {
    %c0_i32 = arith.constant 0 : i32
    %c0_i32_0 = arith.constant 0 : i32
    return %arg0, %c0_i32 : i32, i32
  }
  func.func @transform_15(%arg0: i32) -> (i32, i32) {
    %c0_i32 = arith.constant 0 : i32
    %c0_i32_0 = arith.constant 0 : i32
    return %arg0, %c0_i32 : i32, i32
  }
}

</mosaic_0001>

<llo_original>
// kernel: tpu_custom_call.1
$region0: #{tpu_custom_call.1}
  #allocation0 [shape = 'u32[]', space=smem, size = 0x4, offset = 0x4, fixed_abs, tag = 'smem constant byte address 0x4 - core index']
  #allocation1 [shape = 'u32[72,128]{1,0:T(1,128)}', space=vmem, size = 0x9000, scoped, tag = 'internal scratch']
  %s0 = inlined_call_operand.hbm [shape: f32[16,18], index: 0, kind: input, shape index: {}]
  %s1 = inlined_call_operand.hbm [shape: f32[18,4608], index: 1, kind: input, shape index: {}]
  %s2 = inlined_call_operand.hbm [shape: f32[1,4608], index: 2, kind: input, shape index: {}]
  %s3 = inlined_call_operand.hbm [shape: f32[128,512], index: 3, kind: input, shape index: {}]
  %s4 = inlined_call_operand.hbm [shape: f32[128,128], index: 4, kind: input, shape index: {}]
  %s5 = inlined_call_operand.vmem [shape: f32[1,128], index: 5, kind: input, shape index: {}]
  %s6 = inlined_call_operand.hbm [shape: f32[128,128], index: 6, kind: input, shape index: {}]
  %s7 = inlined_call_operand.vmem [shape: f32[1,128], index: 7, kind: input, shape index: {}]
  %s8 = inlined_call_operand.hbm [shape: f32[128,128], index: 8, kind: input, shape index: {}]
  %s9 = inlined_call_operand.vmem [shape: f32[1,128], index: 9, kind: input, shape index: {}]
  %s10 = inlined_call_operand.hbm [shape: f32[128,384], index: 10, kind: input, shape index: {}]
  %s11 = inlined_call_operand.vmem [shape: f32[1,384], index: 11, kind: input, shape index: {}]
  %s12 = inlined_call_operand.hbm [shape: f32[256,128], index: 12, kind: input, shape index: {}]
  %s13 = inlined_call_operand.vmem [shape: f32[1,128], index: 13, kind: input, shape index: {}]
  %s14 = inlined_call_operand.hbm [shape: f32[16,128], index: 14, kind: output, shape index: {0}]
  %s15 = inlined_call_operand.hbm [shape: f32[16,256], index: 15, kind: output, shape index: {1}]
  %16 = xla_tuple %s14, %s15
  %s17 = sld [smem:[#allocation0]]
  $region133: #{tpu_custom_call.1} parent=0
    _
  %s19 = ssub.s32 1, %s17
  %s20 = scalar_select 0, %s19, %s17
  $region1: #{tpu_custom_call.1} parent=0
    #allocation2 [shape = 'u8[8192]{0}', space=vmem, size = 0x2000, scoped, tag = 'input window, operand 0']
    #allocation3 [shape = 's32[2]{0}', space=sflag, size = 0x8, scoped, tag = 'scoped memory for tpu_custom_call.1']
    #allocation4 [shape = 's32[2]{0}', space=sflag, size = 0x8, scoped, tag = 'scoped memory for tpu_custom_call.1']
    #allocation5 [shape = 'u8[442368]{0}', space=vmem, size = 0x6c000, scoped, tag = 'input window, operand 1, single buffered']
    #allocation6 [shape = 's32[1]{0}', space=sflag, size = 0x4, scoped, tag = 'scoped memory for tpu_custom_call.1']
    #allocation7 [shape = 'u8[18432]{0}', space=vmem, size = 0x4800, scoped, tag = 'input window, operand 2, single buffered']
    #allocation8 [shape = 'u8[262144]{0}', space=vmem, size = 0x40000, scoped, tag = 'input window, operand 3, single buffered']
    #allocation9 [shape = 's32[1]{0}', space=sflag, size = 0x4, scoped, tag = 'scoped memory for tpu_custom_call.1']
    #allocation10 [shape = 'u8[65536]{0}', space=vmem, size = 0x10000, scoped, tag = 'input window, operand 4, single buffered']
    #allocation11 [shape = 'u8[65536]{0}', space=vmem, size = 0x10000, scoped, tag = 'input window, operand 6, single buffered']
    #allocation12 [shape = 's32[1]{0}', space=sflag, size = 0x4, scoped, tag = 'scoped memory for tpu_custom_call.1']
    #allocation13 [shape = 'u8[65536]{0}', space=vmem, size = 0x10000, scoped, tag = 'input window, operand 8, single buffered']
    #allocation14 [shape = 'u8[196608]{0}', space=vmem, size = 0x30000, scoped, tag = 'input window, operand 10, single buffered']
    #allocation15 [shape = 's32[1]{0}', space=sflag, size = 0x4, scoped, tag = 'scoped memory for tpu_custom_call.1']
    #allocation16 [shape = 'u8[131072]{0}', space=vmem, size = 0x20000, scoped, tag = 'input window, operand 12, single buffered']
    #allocation17 [shape = 'u8[8192]{0}', space=vmem, size = 0x2000, scoped, tag = 'output window, operand 0']
    #allocation18 [shape = 'u8[16384]{0}', space=vmem, size = 0x4000, scoped, tag = 'output window, operand 1']
    #allocation19 [shape = 's32[2]{0}', space=sflag, size = 0x8, scoped, tag = 'scoped memory for tpu_custom_call.1']
    %21 = vsyncpa [#allocation3], 0
    %s22 = scalar_lea.sflag [#allocation3], 1
    %23 = vsyncpa %s22, 0
    %24 = vsyncpa [#allocation6], 0
    %25 = vsyncpa [#allocation9], 0
    %26 = vsyncpa [#allocation12], 0
    %27 = vsyncpa [#allocation15], 0
    %28 = vsyncpa [#allocation4], 0
    %s29 = scalar_lea.sflag [#allocation4], 1
    %30 = vsyncpa %s29, 0
    %31 = vsyncpa [#allocation19], 0
    %s32 = scalar_lea.sflag [#allocation19], 1
    %33 = vsyncpa %s32, 0
    loop: start=0, step=1, limit=4
    $region2: #{tpu_custom_call.1} parent=1 // loop_pre_header
      _
    $region3: #{tpu_custom_call.1} parent=1 // loop_header
      %s35 = sphi 0, %s39
      %p36 = scmp.ge.s32.totalorder %s35, 4
      %s45 = sphi 0, %s47
      %s48 = sphi 0, %s45
      %s49 = sphi 0, %s48
      %s65 = sphi 0, %s49
      %s69 = sphi 0, %s69
      %s71 = sphi 0, %s69
      %s72 = sphi 0, %s71
      %s86 = sphi 0, %s72
      %s90 = sphi 0, %s90
      %s92 = sphi 0, %s90
      %s93 = sphi 0, %s92
      %s107 = sphi 0, %s93
      %s111 = sphi 0, %s111
      %s113 = sphi 0, %s111
      %s114 = sphi 0, %s113
      %s128 = sphi 0, %s114
      %s132 = sphi 0, %s132
      %s134 = sphi 0, %s132
      %s135 = sphi 0, %s134
      %s149 = sphi 0, %s135
      %s153 = sphi 0, %s153
      %s155 = sphi 0, %s153
      %s156 = sphi 0, %s155
      %s170 = sphi 0, %s156
      %s174 = sphi 0, %s174
      %s176 = sphi 0, %s174
      %s177 = sphi 0, %s176
      %s191 = sphi 0, %s177
      %s195 = sphi 0, %s195
      %s197 = sphi 0, %s195
      %s198 = sphi 0, %s197
      %s212 = sphi 0, %s198
      %s216 = sphi 0, %s216
      %s218 = sphi 0, %s216
      %s219 = sphi 0, %s218
      %s233 = sphi 0, %s219
      %s237 = sphi 0, %s237
      %s239 = sphi 0, %s237
      %s240 = sphi 0, %s239
      %s254 = sphi 0, %s240
      %s258 = sphi 0, %s258
      %s260 = sphi 0, %s258
      %s261 = sphi 0, %s260
      %s275 = sphi 0, %s261
      %s279 = sphi 0, %s279
      %s281 = sphi 0, %s279
      %s282 = sphi 0, %s281
      %s296 = sphi 0, %s282
      %s300 = sphi 0, %s300
      %s302 = sphi 0, %s300
      %s303 = sphi 0, %s302
      %s317 = sphi 0, %s303
      %s321 = sphi 0, %s321
      %s323 = sphi 0, %s321
      %s324 = sphi 0, %s323
      %s338 = sphi 0, %s324
      %s344 = sphi 0, %s346
      %s347 = sphi 0, %s344
      %s348 = sphi 0, %s347
      %s364 = sphi 0, %s348
      %s370 = sphi 0, %s372
      %s373 = sphi 0, %s370
      %s374 = sphi 0, %s373
      %s390 = sphi 0, %s374
    $region4: #{tpu_custom_call.1} parent=1 // loop_header_branch
      %38 = sbr.rel (%p36) target = $region8
    $region5: #{tpu_custom_call.1} parent=1 // loop_body
      %s40 = ssub.s32 %s35, 1
      %s41 = ssub.s32 %s35, 2
      %s42 = sadd.s32 %s35, 1
      %s43 = ssub.s32 %s35, %s42
      %p44 = scmp.eq.s32.totalorder %s43, 0
      %s46 = sadd.s32 %s45, 1
      %s47 = scalar_select %p44, %s45, %s46
      %p50 = pneg %p44
      %p51 = scmp.eq.s32.totalorder %s35, 1
      %p52 = por %p50, %p51
      %p53 = scmp.ne.s32.totalorder %s45, %s48
      %p54 = scmp.eq.s32.totalorder %s35, 0
      %p55 = por %p53, %p54
      %p56 = scmp.ne.s32.totalorder %s45, %s48
      %p57 = scmp.eq.s32.totalorder %s40, 1
      %p58 = por %p56, %p57
      %p59 = scmp.ne.s32.totalorder %s48, %s49
      %p60 = scmp.eq.s32.totalorder %s40, 0
      %p61 = por %p59, %p60
      %p62 = scmp.ne.s32.totalorder %s48, %s49
      %p63 = scmp.eq.s32.totalorder %s41, 1
      %p64 = por %p62, %p63
      %p66 = scmp.ne.s32.totalorder %s49, %s65
      %p67 = scmp.eq.s32.totalorder %s41, 0
      %p68 = por %p66, %p67
      %s70 = sadd.s32 %s69, 1
      %p73 = scmp.eq.s32.totalorder %s35, 1
      %p74 = scmp.ne.s32.totalorder %s69, %s71
      %p75 = scmp.eq.s32.totalorder %s35, 0
      %p76 = por %p74, %p75
      %p77 = scmp.ne.s32.totalorder %s69, %s71
      %p78 = scmp.eq.s32.totalorder %s40, 1
      %p79 = por %p77, %p78
      %p80 = scmp.ne.s32.totalorder %s71, %s72
      %p81 = scmp.eq.s32.totalorder %s40, 0
      %p82 = por %p80, %p81
      %p83 = scmp.ne.s32.totalorder %s71, %s72
      %p84 = scmp.eq.s32.totalorder %s41, 1
      %p85 = por %p83, %p84
      %p87 = scmp.ne.s32.totalorder %s72, %s86
      %p88 = scmp.eq.s32.totalorder %s41, 0
      %p89 = por %p87, %p88
      %s91 = sadd.s32 %s90, 1
      %p94 = scmp.eq.s32.totalorder %s35, 1
      %p95 = scmp.ne.s32.totalorder %s90, %s92
      %p96 = scmp.eq.s32.totalorder %s35, 0
      %p97 = por %p95, %p96
      %p98 = scmp.ne.s32.totalorder %s90, %s92
      %p99 = scmp.eq.s32.totalorder %s40, 1
      %p100 = por %p98, %p99
      %p101 = scmp.ne.s32.totalorder %s92, %s93
      %p102 = scmp.eq.s32.totalorder %s40, 0
      %p103 = por %p101, %p102
      %p104 = scmp.ne.s32.totalorder %s92, %s93
      %p105 = scmp.eq.s32.totalorder %s41, 1
      %p106 = por %p104, %p105
      %p108 = scmp.ne.s32.totalorder %s93, %s107
      %p109 = scmp.eq.s32.totalorder %s41, 0
      %p110 = por %p108, %p109
      %s112 = sadd.s32 %s111, 1
      %p115 = scmp.eq.s32.totalorder %s35, 1
      %p116 = scmp.ne.s32.totalorder %s111, %s113
      %p117 = scmp.eq.s32.totalorder %s35, 0
      %p118 = por %p116, %p117
      %p119 = scmp.ne.s32.totalorder %s111, %s113
      %p120 = scmp.eq.s32.totalorder %s40, 1
      %p121 = por %p119, %p120
      %p122 = scmp.ne.s32.totalorder %s113, %s114
      %p123 = scmp.eq.s32.totalorder %s40, 0
      %p124 = por %p122, %p123
      %p125 = scmp.ne.s32.totalorder %s113, %s114
      %p126 = scmp.eq.s32.totalorder %s41, 1
      %p127 = por %p125, %p126
      %p129 = scmp.ne.s32.totalorder %s114, %s128
      %p130 = scmp.eq.s32.totalorder %s41, 0
      %p131 = por %p129, %p130
      %s133 = sadd.s32 %s132, 1
      %p136 = scmp.eq.s32.totalorder %s35, 1
      %p137 = scmp.ne.s32.totalorder %s132, %s134
      %p138 = scmp.eq.s32.totalorder %s35, 0
      %p139 = por %p137, %p138
      %p140 = scmp.ne.s32.totalorder %s132, %s134
      %p141 = scmp.eq.s32.totalorder %s40, 1
      %p142 = por %p140, %p141
      %p143 = scmp.ne.s32.totalorder %s134, %s135
      %p144 = scmp.eq.s32.totalorder %s40, 0
      %p145 = por %p143, %p144
      %p146 = scmp.ne.s32.totalorder %s134, %s135
      %p147 = scmp.eq.s32.totalorder %s41, 1
      %p148 = por %p146, %p147
      %p150 = scmp.ne.s32.totalorder %s135, %s149
      %p151 = scmp.eq.s32.totalorder %s41, 0
      %p152 = por %p150, %p151
      %s154 = sadd.s32 %s153, 1
      %p157 = scmp.eq.s32.totalorder %s35, 1
      %p158 = scmp.ne.s32.totalorder %s153, %s155
      %p159 = scmp.eq.s32.totalorder %s35, 0
      %p160 = por %p158, %p159
      %p161 = scmp.ne.s32.totalorder %s153, %s155
      %p162 = scmp.eq.s32.totalorder %s40, 1
      %p163 = por %p161, %p162
      %p164 = scmp.ne.s32.totalorder %s155, %s156
      %p165 = scmp.eq.s32.totalorder %s40, 0
      %p166 = por %p164, %p165
      %p167 = scmp.ne.s32.totalorder %s155, %s156
      %p168 = scmp.eq.s32.totalorder %s41, 1
      %p169 = por %p167, %p168
      %p171 = scmp.ne.s32.totalorder %s156, %s170
      %p172 = scmp.eq.s32.totalorder %s41, 0
      %p173 = por %p171, %p172
      %s175 = sadd.s32 %s174, 1
      %p178 = scmp.eq.s32.totalorder %s35, 1
      %p179 = scmp.ne.s32.totalorder %s174, %s176
      %p180 = scmp.eq.s32.totalorder %s35, 0
      %p181 = por %p179, %p180
      %p182 = scmp.ne.s32.totalorder %s174, %s176
      %p183 = scmp.eq.s32.totalorder %s40, 1
      %p184 = por %p182, %p183
      %p185 = scmp.ne.s32.totalorder %s176, %s177
      %p186 = scmp.eq.s32.totalorder %s40, 0
      %p187 = por %p185, %p186
      %p188 = scmp.ne.s32.totalorder %s176, %s177
      %p189 = scmp.eq.s32.totalorder %s41, 1
      %p190 = por %p188, %p189
      %p192 = scmp.ne.s32.totalorder %s177, %s191
      %p193 = scmp.eq.s32.totalorder %s41, 0
      %p194 = por %p192, %p193
      %s196 = sadd.s32 %s195, 1
      %p199 = scmp.eq.s32.totalorder %s35, 1
      %p200 = scmp.ne.s32.totalorder %s195, %s197
      %p201 = scmp.eq.s32.totalorder %s35, 0
      %p202 = por %p200, %p201
      %p203 = scmp.ne.s32.totalorder %s195, %s197
      %p204 = scmp.eq.s32.totalorder %s40, 1
      %p205 = por %p203, %p204
      %p206 = scmp.ne.s32.totalorder %s197, %s198
      %p207 = scmp.eq.s32.totalorder %s40, 0
      %p208 = por %p206, %p207
      %p209 = scmp.ne.s32.totalorder %s197, %s198
      %p210 = scmp.eq.s32.totalorder %s41, 1
      %p211 = por %p209, %p210
      %p213 = scmp.ne.s32.totalorder %s198, %s212
      %p214 = scmp.eq.s32.totalorder %s41, 0
      %p215 = por %p213, %p214
      %s217 = sadd.s32 %s216, 1
      %p220 = scmp.eq.s32.totalorder %s35, 1
      %p221 = scmp.ne.s32.totalorder %s216, %s218
      %p222 = scmp.eq.s32.totalorder %s35, 0
      %p223 = por %p221, %p222
      %p224 = scmp.ne.s32.totalorder %s216, %s218
      %p225 = scmp.eq.s32.totalorder %s40, 1
      %p226 = por %p224, %p225
      %p227 = scmp.ne.s32.totalorder %s218, %s219
      %p228 = scmp.eq.s32.totalorder %s40, 0
      %p229 = por %p227, %p228
      %p230 = scmp.ne.s32.totalorder %s218, %s219
      %p231 = scmp.eq.s32.totalorder %s41, 1
      %p232 = por %p230, %p231
      %p234 = scmp.ne.s32.totalorder %s219, %s233
      %p235 = scmp.eq.s32.totalorder %s41, 0
      %p236 = por %p234, %p235
      %s238 = sadd.s32 %s237, 1
      %p241 = scmp.eq.s32.totalorder %s35, 1
      %p242 = scmp.ne.s32.totalorder %s237, %s239
      %p243 = scmp.eq.s32.totalorder %s35, 0
      %p244 = por %p242, %p243
      %p245 = scmp.ne.s32.totalorder %s237, %s239
      %p246 = scmp.eq.s32.totalorder %s40, 1
      %p247 = por %p245, %p246
      %p248 = scmp.ne.s32.totalorder %s239, %s240
      %p249 = scmp.eq.s32.totalorder %s40, 0
      %p250 = por %p248, %p249
      %p251 = scmp.ne.s32.totalorder %s239, %s240
      %p252 = scmp.eq.s32.totalorder %s41, 1
      %p253 = por %p251, %p252
      %p255 = scmp.ne.s32.totalorder %s240, %s254
      %p256 = scmp.eq.s32.totalorder %s41, 0
      %p257 = por %p255, %p256
      %s259 = sadd.s32 %s258, 1
      %p262 = scmp.eq.s32.totalorder %s35, 1
      %p263 = scmp.ne.s32.totalorder %s258, %s260
      %p264 = scmp.eq.s32.totalorder %s35, 0
      %p265 = por %p263, %p264
      %p266 = scmp.ne.s32.totalorder %s258, %s260
      %p267 = scmp.eq.s32.totalorder %s40, 1
      %p268 = por %p266, %p267
      %p269 = scmp.ne.s32.totalorder %s260, %s261
      %p270 = scmp.eq.s32.totalorder %s40, 0
      %p271 = por %p269, %p270
      %p272 = scmp.ne.s32.totalorder %s260, %s261
      %p273 = scmp.eq.s32.totalorder %s41, 1
      %p274 = por %p272, %p273
      %p276 = scmp.ne.s32.totalorder %s261, %s275
      %p277 = scmp.eq.s32.totalorder %s41, 0
      %p278 = por %p276, %p277
      %s280 = sadd.s32 %s279, 1
      %p283 = scmp.eq.s32.totalorder %s35, 1
      %p284 = scmp.ne.s32.totalorder %s279, %s281
      %p285 = scmp.eq.s32.totalorder %s35, 0
      %p286 = por %p284, %p285
      %p287 = scmp.ne.s32.totalorder %s279, %s281
      %p288 = scmp.eq.s32.totalorder %s40, 1
      %p289 = por %p287, %p288
      %p290 = scmp.ne.s32.totalorder %s281, %s282
      %p291 = scmp.eq.s32.totalorder %s40, 0
      %p292 = por %p290, %p291
      %p293 = scmp.ne.s32.totalorder %s281, %s282
      %p294 = scmp.eq.s32.totalorder %s41, 1
      %p295 = por %p293, %p294
      %p297 = scmp.ne.s32.totalorder %s282, %s296
      %p298 = scmp.eq.s32.totalorder %s41, 0
      %p299 = por %p297, %p298
      %s301 = sadd.s32 %s300, 1
      %p304 = scmp.eq.s32.totalorder %s35, 1
      %p305 = scmp.ne.s32.totalorder %s300, %s302
      %p306 = scmp.eq.s32.totalorder %s35, 0
      %p307 = por %p305, %p306
      %p308 = scmp.ne.s32.totalorder %s300, %s302
      %p309 = scmp.eq.s32.totalorder %s40, 1
      %p310 = por %p308, %p309
      %p311 = scmp.ne.s32.totalorder %s302, %s303
      %p312 = scmp.eq.s32.totalorder %s40, 0
      %p313 = por %p311, %p312
      %p314 = scmp.ne.s32.totalorder %s302, %s303
      %p315 = scmp.eq.s32.totalorder %s41, 1
      %p316 = por %p314, %p315
      %p318 = scmp.ne.s32.totalorder %s303, %s317
      %p319 = scmp.eq.s32.totalorder %s41, 0
      %p320 = por %p318, %p319
      %s322 = sadd.s32 %s321, 1
      %p325 = scmp.eq.s32.totalorder %s35, 1
      %p326 = scmp.ne.s32.totalorder %s321, %s323
      %p327 = scmp.eq.s32.totalorder %s35, 0
      %p328 = por %p326, %p327
      %p329 = scmp.ne.s32.totalorder %s321, %s323
      %p330 = scmp.eq.s32.totalorder %s40, 1
      %p331 = por %p329, %p330
      %p332 = scmp.ne.s32.totalorder %s323, %s324
      %p333 = scmp.eq.s32.totalorder %s40, 0
      %p334 = por %p332, %p333
      %p335 = scmp.ne.s32.totalorder %s323, %s324
      %p336 = scmp.eq.s32.totalorder %s41, 1
      %p337 = por %p335, %p336
      %p339 = scmp.ne.s32.totalorder %s324, %s338
      %p340 = scmp.eq.s32.totalorder %s41, 0
      %p341 = por %p339, %p340
      %s342 = ssub.s32 %s35, %s42
      %p343 = scmp.eq.s32.totalorder %s342, 0
      %s345 = sadd.s32 %s344, 1
      %s346 = scalar_select %p343, %s344, %s345
      %p349 = pneg %p343
      %p350 = scmp.eq.s32.totalorder %s35, 1
      %p351 = por %p349, %p350
      %p352 = scmp.ne.s32.totalorder %s344, %s347
      %p353 = scmp.eq.s32.totalorder %s35, 0
      %p354 = por %p352, %p353
      %p355 = scmp.ne.s32.totalorder %s344, %s347
      %p356 = scmp.eq.s32.totalorder %s40, 1
      %p357 = por %p355, %p356
      %p358 = scmp.ne.s32.totalorder %s347, %s348
      %p359 = scmp.eq.s32.totalorder %s40, 0
      %p360 = por %p358, %p359
      %p361 = scmp.ne.s32.totalorder %s347, %s348
      %p362 = scmp.eq.s32.totalorder %s41, 1
      %p363 = por %p361, %p362
      %p365 = scmp.ne.s32.totalorder %s348, %s364
      %p366 = scmp.eq.s32.totalorder %s41, 0
      %p367 = por %p365, %p366
      %s368 = ssub.s32 %s35, %s42
      %p369 = scmp.eq.s32.totalorder %s368, 0
      %s371 = sadd.s32 %s370, 1
      %s372 = scalar_select %p369, %s370, %s371
      %p375 = pneg %p369
      %p376 = scmp.eq.s32.totalorder %s35, 1
      %p377 = por %p375, %p376
      %p378 = scmp.ne.s32.totalorder %s370, %s373
      %p379 = scmp.eq.s32.totalorder %s35, 0
      %p380 = por %p378, %p379
      %p381 = scmp.ne.s32.totalorder %s370, %s373
      %p382 = scmp.eq.s32.totalorder %s40, 1
      %p383 = por %p381, %p382
      %p384 = scmp.ne.s32.totalorder %s373, %s374
      %p385 = scmp.eq.s32.totalorder %s40, 0
      %p386 = por %p384, %p385
      %p387 = scmp.ne.s32.totalorder %s373, %s374
      %p388 = scmp.eq.s32.totalorder %s41, 1
      %p389 = por %p387, %p388
      %p391 = scmp.ne.s32.totalorder %s374, %s390
      %p392 = scmp.eq.s32.totalorder %s41, 0
      %p393 = por %p391, %p392
      %p394 = scmp.le.s32.totalorder 1, %s35
      %p395 = scmp.lt.s32.totalorder %s35, 3
      %p396 = pnand %p394, %p395
      %p397 = pneg %p396
      // Predicated region
      $region9: #{tpu_custom_call.1} parent=5 // pred_check
        _
      $region10: #{tpu_custom_call.1} parent=5 // pred_check_branch
        %399 = sbr.rel (%p396) target = $region12
      $region11: #{tpu_custom_call.1} parent=5 // pred_region
        %s400 = ssub.s32 %s35, 1
        // Predicated region
        $region13: #{tpu_custom_call.1} parent=11 // pred_check
          %p401 = pneg %p82
        $region14: #{tpu_custom_call.1} parent=11 // pred_check_branch
          %403 = sbr.rel (%p401) target = $region16
        $region15: #{tpu_custom_call.1} parent=11 // pred_region
          %405 = vsyncadd [#allocation6], 0
          %s406 = sshll.u32 %s1, 4
          %s407 = int_to_ptr.hbm [resolvable:$true] %s406
          %s408 = sshll.u32 [#allocation5], 4
          %s409 = int_to_ptr.vmem [resolvable:$true] %s408
          %414 = dma.hbm_to_vmem [thread:$0]  %s407, 13824, %s409, [#allocation6], 4608, 4608, 288
        $region16: #{tpu_custom_call.1} parent=11 // pred_fallthru
          _
        // Predicated region
        $region17: #{tpu_custom_call.1} parent=11 // pred_check
          %p415 = pneg %p103
        $region18: #{tpu_custom_call.1} parent=11 // pred_check_branch
          %417 = sbr.rel (%p415) target = $region20
        $region19: #{tpu_custom_call.1} parent=11 // pred_region
          %419 = vsyncadd [#allocation6], 0
          %s421 = sshll.u32 %s2, 4
          %s422 = int_to_ptr.hbm [resolvable:$true] %s421
          %s423 = sshll.u32 [#allocation7], 4
          %s424 = int_to_ptr.vmem [resolvable:$true] %s423
          %426 = dma.hbm_to_vmem [thread:$0]  %s422, 576, %s424, [#allocation6]
        $region20: #{tpu_custom_call.1} parent=11 // pred_fallthru
          _
        // Predicated region
        $region21: #{tpu_custom_call.1} parent=11 // pred_check
          %p427 = pneg %p124
        $region22: #{tpu_custom_call.1} parent=11 // pred_check_branch
          %429 = sbr.rel (%p427) target = $region24
        $region23: #{tpu_custom_call.1} parent=11 // pred_region
          %431 = vsyncadd [#allocation9], 0
          %s432 = sshll.u32 %s3, 4
          %s433 = int_to_ptr.hbm [resolvable:$true] %s432
          %s434 = sshll.u32 [#allocation8], 4
          %s435 = int_to_ptr.vmem [resolvable:$true] %s434
          %440 = dma.hbm_to_vmem [thread:$0]  %s433, 8192, %s435, [#allocation9], 512, 512, 32
        $region24: #{tpu_custom_call.1} parent=11 // pred_fallthru
          _
        // Predicated region
        $region25: #{tpu_custom_call.1} parent=11 // pred_check
          %p441 = pneg %p145
        $region26: #{tpu_custom_call.1} parent=11 // pred_check_branch
          %443 = sbr.rel (%p441) target = $region28
        $region27: #{tpu_custom_call.1} parent=11 // pred_region
          %445 = vsyncadd [#allocation9], 0
          %s446 = sshll.u32 %s4, 4
          %s447 = int_to_ptr.hbm [resolvable:$true] %s446
          %s448 = sshll.u32 [#allocation10], 4
          %s449 = int_to_ptr.vmem [resolvable:$true] %s448
          %454 = dma.hbm_to_vmem [thread:$0]  %s447, 2048, %s449, [#allocation9], 128, 128, 8
        $region28: #{tpu_custom_call.1} parent=11 // pred_fallthru
          _
        // Predicated region
        $region29: #{tpu_custom_call.1} parent=11 // pred_check
          %p455 = pneg %p166
        $region30: #{tpu_custom_call.1} parent=11 // pred_check_branch
          %457 = sbr.rel (%p455) target = $region32
        $region31: #{tpu_custom_call.1} parent=11 // pred_region
          _
        $region32: #{tpu_custom_call.1} parent=11 // pred_fallthru
          _
        // Predicated region
        $region33: #{tpu_custom_call.1} parent=11 // pred_check
          %p458 = pneg %p187
        $region34: #{tpu_custom_call.1} parent=11 // pred_check_branch
          %460 = sbr.rel (%p458) target = $region36
        $region35: #{tpu_custom_call.1} parent=11 // pred_region
          %462 = vsyncadd [#allocation12], 0
          %s463 = sshll.u32 %s6, 4
          %s464 = int_to_ptr.hbm [resolvable:$true] %s463
          %s465 = sshll.u32 [#allocation11], 4
          %s466 = int_to_ptr.vmem [resolvable:$true] %s465
          %471 = dma.hbm_to_vmem [thread:$0]  %s464, 2048, %s466, [#allocation12], 128, 128, 8
        $region36: #{tpu_custom_call.1} parent=11 // pred_fallthru
          _
        // Predicated region
        $region37: #{tpu_custom_call.1} parent=11 // pred_check
          %p472 = pneg %p208
        $region38: #{tpu_custom_call.1} parent=11 // pred_check_branch
          %474 = sbr.rel (%p472) target = $region40
        $region39: #{tpu_custom_call.1} parent=11 // pred_region
          _
        $region40: #{tpu_custom_call.1} parent=11 // pred_fallthru
          _
        // Predicated region
        $region41: #{tpu_custom_call.1} parent=11 // pred_check
          %p475 = pneg %p229
        $region42: #{tpu_custom_call.1} parent=11 // pred_check_branch
          %477 = sbr.rel (%p475) target = $region44
        $region43: #{tpu_custom_call.1} parent=11 // pred_region
          %479 = vsyncadd [#allocation12], 0
          %s480 = sshll.u32 %s8, 4
          %s481 = int_to_ptr.hbm [resolvable:$true] %s480
          %s482 = sshll.u32 [#allocation13], 4
          %s483 = int_to_ptr.vmem [resolvable:$true] %s482
          %488 = dma.hbm_to_vmem [thread:$0]  %s481, 2048, %s483, [#allocation12], 128, 128, 8
        $region44: #{tpu_custom_call.1} parent=11 // pred_fallthru
          _
        // Predicated region
        $region45: #{tpu_custom_call.1} parent=11 // pred_check
          %p489 = pneg %p250
        $region46: #{tpu_custom_call.1} parent=11 // pred_check_branch
          %491 = sbr.rel (%p489) target = $region48
        $region47: #{tpu_custom_call.1} parent=11 // pred_region
          _
        $region48: #{tpu_custom_call.1} parent=11 // pred_fallthru
          _
        // Predicated region
        $region49: #{tpu_custom_call.1} parent=11 // pred_check
          %p492 = pneg %p271
        $region50: #{tpu_custom_call.1} parent=11 // pred_check_branch
          %494 = sbr.rel (%p492) target = $region52
        $region51: #{tpu_custom_call.1} parent=11 // pred_region
          %496 = vsyncadd [#allocation15], 0
          %s497 = sshll.u32 %s10, 4
          %s498 = int_to_ptr.hbm [resolvable:$true] %s497
          %s499 = sshll.u32 [#allocation14], 4
          %s500 = int_to_ptr.vmem [resolvable:$true] %s499
          %505 = dma.hbm_to_vmem [thread:$0]  %s498, 6144, %s500, [#allocation15], 384, 384, 24
        $region52: #{tpu_custom_call.1} parent=11 // pred_fallthru
          _
        // Predicated region
        $region53: #{tpu_custom_call.1} parent=11 // pred_check
          %p506 = pneg %p292
        $region54: #{tpu_custom_call.1} parent=11 // pred_check_branch
          %508 = sbr.rel (%p506) target = $region56
        $region55: #{tpu_custom_call.1} parent=11 // pred_region
          _
        $region56: #{tpu_custom_call.1} parent=11 // pred_fallthru
          _
        // Predicated region
        $region57: #{tpu_custom_call.1} parent=11 // pred_check
          %p509 = pneg %p313
        $region58: #{tpu_custom_call.1} parent=11 // pred_check_branch
          %511 = sbr.rel (%p509) target = $region60
        $region59: #{tpu_custom_call.1} parent=11 // pred_region
          %513 = vsyncadd [#allocation15], 0
          %s514 = sshll.u32 %s12, 4
          %s515 = int_to_ptr.hbm [resolvable:$true] %s514
          %s516 = sshll.u32 [#allocation16], 4
          %s517 = int_to_ptr.vmem [resolvable:$true] %s516
          %522 = dma.hbm_to_vmem [thread:$0]  %s515, 4096, %s517, [#allocation15], 128, 128, 8
        $region60: #{tpu_custom_call.1} parent=11 // pred_fallthru
          _
        // Predicated region
        $region61: #{tpu_custom_call.1} parent=11 // pred_check
          %p523 = pneg %p334
        $region62: #{tpu_custom_call.1} parent=11 // pred_check_branch
          %525 = sbr.rel (%p523) target = $region64
        $region63: #{tpu_custom_call.1} parent=11 // pred_region
          _
        $region64: #{tpu_custom_call.1} parent=11 // pred_fallthru
          _
      $region12: #{tpu_custom_call.1} parent=5 // pred_fallthru
        _
      %p526 = scmp.lt.s32.totalorder %s35, 2
      // Predicated region
      $region65: #{tpu_custom_call.1} parent=5 // pred_check
        %p527 = pneg %p526
      $region66: #{tpu_custom_call.1} parent=5 // pred_check_branch
        %529 = sbr.rel (%p527) target = $region68
      $region67: #{tpu_custom_call.1} parent=5 // pred_region
        // Predicated region
        $region69: #{tpu_custom_call.1} parent=67 // pred_check
          %p530 = pneg %p55
        $region70: #{tpu_custom_call.1} parent=67 // pred_check_branch
          %532 = sbr.rel (%p530) target = $region72
        $region71: #{tpu_custom_call.1} parent=67 // pred_region
          %s533 = sand.u32 %s45, 1
          %s534 = scalar_lea.sflag [#allocation3], %s533
          %s535 = sand.u32 %s45, 1
          %s536 = smul.addr %s535, 8
          %s537 = scalar_lea.vmem [#allocation2], %s536
          %539 = vsyncadd %s534, 0
          %s540 = smul.addr %s35, 8
          %s541 = scalar_lea.hbm %s0, %s540
          %s543 = sshll.u32 %s541, 4
          %s544 = int_to_ptr.hbm [resolvable:$true] %s543
          %s545 = sshll.u32 %s537, 4
          %s546 = int_to_ptr.vmem [resolvable:$true] %s545
          %548 = dma.hbm_to_vmem [thread:$0]  %s544, 128, %s546, %s534
        $region72: #{tpu_custom_call.1} parent=67 // pred_fallthru
          _
      $region68: #{tpu_custom_call.1} parent=5 // pred_fallthru
        _
      %p549 = scmp.le.s32.totalorder 1, %s35
      %p550 = scmp.lt.s32.totalorder %s35, 3
      %p551 = pnand %p549, %p550
      %p552 = pneg %p551
      // Predicated region
      $region73: #{tpu_custom_call.1} parent=5 // pred_check
        _
      $region74: #{tpu_custom_call.1} parent=5 // pred_check_branch
        %554 = sbr.rel (%p551) target = $region76
      $region75: #{tpu_custom_call.1} parent=5 // pred_region
        %s555 = ssub.s32 %s35, 1
        %s556 = sand.u32 %s48, 1
        %s557 = scalar_lea.sflag [#allocation3], %s556
        %s558 = sand.u32 %s48, 1
        %s559 = smul.addr %s558, 8
        %s560 = scalar_lea.vmem [#allocation2], %s559
        // Predicated region
        $region77: #{tpu_custom_call.1} parent=75 // pred_check
          %p561 = pneg %p61
        $region78: #{tpu_custom_call.1} parent=75 // pred_check_branch
          %563 = sbr.rel (%p561) target = $region80
        $region79: #{tpu_custom_call.1} parent=75 // pred_region
          %565 = dma.done %s557, 128
        $region80: #{tpu_custom_call.1} parent=75 // pred_fallthru
          _
        // Predicated region
        $region81: #{tpu_custom_call.1} parent=75 // pred_check
          %p566 = pneg %p82
        $region82: #{tpu_custom_call.1} parent=75 // pred_check_branch
          %568 = sbr.rel (%p566) target = $region84
        $region83: #{tpu_custom_call.1} parent=75 // pred_region
          %570 = dma.done [#allocation6], 13824
        $region84: #{tpu_custom_call.1} parent=75 // pred_fallthru
          _
        // Predicated region
        $region85: #{tpu_custom_call.1} parent=75 // pred_check
          %p571 = pneg %p103
        $region86: #{tpu_custom_call.1} parent=75 // pred_check_branch
          %573 = sbr.rel (%p571) target = $region88
        $region87: #{tpu_custom_call.1} parent=75 // pred_region
          %575 = dma.done [#allocation6], 576
        $region88: #{tpu_custom_call.1} parent=75 // pred_fallthru
          _
        // Predicated region
        $region89: #{tpu_custom_call.1} parent=75 // pred_check
          %p576 = pneg %p124
        $region90: #{tpu_custom_call.1} parent=75 // pred_check_branch
          %578 = sbr.rel (%p576) target = $region92
        $region91: #{tpu_custom_call.1} parent=75 // pred_region
          %580 = dma.done [#allocation9], 8192
        $region92: #{tpu_custom_call.1} parent=75 // pred_fallthru
          _
        // Predicated region
        $region93: #{tpu_custom_call.1} parent=75 // pred_check
          %p581 = pneg %p145
        $region94: #{tpu_custom_call.1} parent=75 // pred_check_branch
          %583 = sbr.rel (%p581) target = $region96
        $region95: #{tpu_custom_call.1} parent=75 // pred_region
          %585 = dma.done [#allocation9], 2048
        $region96: #{tpu_custom_call.1} parent=75 // pred_fallthru
          _
        // Predicated region
        $region97: #{tpu_custom_call.1} parent=75 // pred_check
          %p586 = pneg %p187
        $region98: #{tpu_custom_call.1} parent=75 // pred_check_branch
          %588 = sbr.rel (%p586) target = $region100
        $region99: #{tpu_custom_call.1} parent=75 // pred_region
          %590 = dma.done [#allocation12], 2048
        $region100: #{tpu_custom_call.1} parent=75 // pred_fallthru
          _
        // Predicated region
        $region101: #{tpu_custom_call.1} parent=75 // pred_check
          %p591 = pneg %p229
        $region102: #{tpu_custom_call.1} parent=75 // pred_check_branch
          %593 = sbr.rel (%p591) target = $region104
        $region103: #{tpu_custom_call.1} parent=75 // pred_region
          %595 = dma.done [#allocation12], 2048
        $region104: #{tpu_custom_call.1} parent=75 // pred_fallthru
          _
        // Predicated region
        $region105: #{tpu_custom_call.1} parent=75 // pred_check
          %p596 = pneg %p271
        $region106: #{tpu_custom_call.1} parent=75 // pred_check_branch
          %598 = sbr.rel (%p596) target = $region108
        $region107: #{tpu_custom_call.1} parent=75 // pred_region
          %600 = dma.done [#allocation15], 6144
        $region108: #{tpu_custom_call.1} parent=75 // pred_fallthru
          _
        // Predicated region
        $region109: #{tpu_custom_call.1} parent=75 // pred_check
          %p601 = pneg %p313
        $region110: #{tpu_custom_call.1} parent=75 // pred_check_branch
          %603 = sbr.rel (%p601) target = $region112
        $region111: #{tpu_custom_call.1} parent=75 // pred_region
          %605 = dma.done [#allocation15], 4096
        $region112: #{tpu_custom_call.1} parent=75 // pred_fallthru
          _
        %s606 = sand.u32 %s48, 1
        %s607 = scalar_lea.sflag [#allocation3], %s606
        %s608 = sand.u32 %s48, 1
        %s609 = smul.addr %s608, 8
        %s610 = scalar_lea.vmem [#allocation2], %s609
        %p611 = pneg %p61
        %p612 = pneg %p58
        %p613 = pneg %p82
        %p614 = pneg %p79
        %p615 = pneg %p103
        %p616 = pneg %p100
        %p617 = pneg %p124
        %p618 = pneg %p121
        %p619 = pneg %p145
        %p620 = pneg %p142
        %p621 = pneg %p166
        %p622 = pneg %p163
        %p623 = pneg %p187
        %p624 = pneg %p184
        %p625 = pneg %p208
        %p626 = pneg %p205
        %p627 = pneg %p229
        %p628 = pneg %p226
        %p629 = pneg %p250
        %p630 = pneg %p247
        %p631 = pneg %p271
        %p632 = pneg %p268
        %p633 = pneg %p292
        %p634 = pneg %p289
        %p635 = pneg %p313
        %p636 = pneg %p310
        %p637 = pneg %p334
        %p638 = pneg %p331
        %p639 = pneg %p360
        %p640 = pneg %p357
        %s641 = sand.u32 %s347, 1
        %s642 = scalar_lea.sflag [#allocation4], %s641
        %s643 = sand.u32 %s347, 1
        %s644 = smul.addr %s643, 8
        %s645 = scalar_lea.vmem [#allocation17], %s644
        %p646 = pneg %p386
        %p647 = pneg %p383
        %s648 = sand.u32 %s373, 1
        %s649 = scalar_lea.sflag [#allocation19], %s648
        %s650 = sand.u32 %s373, 1
        %s651 = smul.addr %s650, 16
        %s652 = scalar_lea.vmem [#allocation18], %s651
        %v653 = vld [vmem:[%s560] sm:$0xff]
        %v654 = vld [vmem:[#allocation5] sm:$0xff]
        %v655 = vld [vmem:[#allocation5 + $0x8] sm:$0xff]
        %v656 = vld [vmem:[#allocation5 + $0x10] sm:$0xff]
        %v657 = vld [vmem:[#allocation5 + $0x18] sm:$0xff]
        %v658 = vld [vmem:[#allocation5 + $0x20] sm:$0xff]
        %v659 = vld [vmem:[#allocation5 + $0x28] sm:$0xff]
        %v660 = vld [vmem:[#allocation5 + $0x30] sm:$0xff]
        %v661 = vld [vmem:[#allocation5 + $0x38] sm:$0xff]
        %v662 = vld [vmem:[#allocation5 + $0x40] sm:$0xff]
        %v663 = vld [vmem:[#allocation5 + $0x48] sm:$0xff]
        %v664 = vld [vmem:[#allocation5 + $0x50] sm:$0xff]
        %v665 = vld [vmem:[#allocation5 + $0x58] sm:$0xff]
        %v666 = vld [vmem:[#allocation5 + $0x60] sm:$0xff]
        %v667 = vld [vmem:[#allocation5 + $0x68] sm:$0xff]
        %v668 = vld [vmem:[#allocation5 + $0x70] sm:$0xff]
        %v669 = vld [vmem:[#allocation5 + $0x78] sm:$0xff]
        %v670 = vld [vmem:[#allocation5 + $0x80] sm:$0xff]
        %v671 = vld [vmem:[#allocation5 + $0x88] sm:$0xff]
        %v672 = vld [vmem:[#allocation5 + $0x90] sm:$0xff]
        %v673 = vld [vmem:[#allocation5 + $0x98] sm:$0xff]
        %v674 = vld [vmem:[#allocation5 + $0xa0] sm:$0xff]
        %v675 = vld [vmem:[#allocation5 + $0xa8] sm:$0xff]
        %v676 = vld [vmem:[#allocation5 + $0xb0] sm:$0xff]
        %v677 = vld [vmem:[#allocation5 + $0xb8] sm:$0xff]
        %v678 = vld [vmem:[#allocation5 + $0xc0] sm:$0xff]
        %v679 = vld [vmem:[#allocation5 + $0xc8] sm:$0xff]
        %v680 = vld [vmem:[#allocation5 + $0xd0] sm:$0xff]
        %v681 = vld [vmem:[#allocation5 + $0xd8] sm:$0xff]
        %v682 = vld [vmem:[#allocation5 + $0xe0] sm:$0xff]
        %v683 = vld [vmem:[#allocation5 + $0xe8] sm:$0xff]
        %v684 = vld [vmem:[#allocation5 + $0xf0] sm:$0xff]
        %v685 = vld [vmem:[#allocation5 + $0xf8] sm:$0xff]
        %v686 = vld [vmem:[#allocation5 + $0x100] sm:$0xff]
        %v687 = vld [vmem:[#allocation5 + $0x108] sm:$0xff]
        %v688 = vld [vmem:[#allocation5 + $0x110] sm:$0xff]
        %v689 = vld [vmem:[#allocation5 + $0x118] sm:$0xff]
        %v690 = vld [vmem:[#allocation5 + $0x120] sm:$0xff]
        %v691 = vld [vmem:[#allocation5 + $0x128] sm:$0xff]
        %v692 = vld [vmem:[#allocation5 + $0x130] sm:$0xff]
        %v693 = vld [vmem:[#allocation5 + $0x138] sm:$0xff]
        %v694 = vld [vmem:[#allocation5 + $0x140] sm:$0xff]
        %v695 = vld [vmem:[#allocation5 + $0x148] sm:$0xff]
        %v696 = vld [vmem:[#allocation5 + $0x150] sm:$0xff]
        %v697 = vld [vmem:[#allocation5 + $0x158] sm:$0xff]
        %v698 = vld [vmem:[#allocation5 + $0x160] sm:$0xff]
        %v699 = vld [vmem:[#allocation5 + $0x168] sm:$0xff]
        %v700 = vld [vmem:[#allocation5 + $0x170] sm:$0xff]
        %v701 = vld [vmem:[#allocation5 + $0x178] sm:$0xff]
        %v702 = vld [vmem:[#allocation5 + $0x180] sm:$0xff]
        %v703 = vld [vmem:[#allocation5 + $0x188] sm:$0xff]
        %v704 = vld [vmem:[#allocation5 + $0x190] sm:$0xff]
        %v705 = vld [vmem:[#allocation5 + $0x198] sm:$0xff]
        %v706 = vld [vmem:[#allocation5 + $0x1a0] sm:$0xff]
        %v707 = vld [vmem:[#allocation5 + $0x1a8] sm:$0xff]
        %v708 = vld [vmem:[#allocation5 + $0x1b0] sm:$0xff]
        %v709 = vld [vmem:[#allocation5 + $0x1b8] sm:$0xff]
        %v710 = vld [vmem:[#allocation5 + $0x1c0] sm:$0xff]
        %v711 = vld [vmem:[#allocation5 + $0x1c8] sm:$0xff]
        %v712 = vld [vmem:[#allocation5 + $0x1d0] sm:$0xff]
        %v713 = vld [vmem:[#allocation5 + $0x1d8] sm:$0xff]
        %v714 = vld [vmem:[#allocation5 + $0x1e0] sm:$0xff]
        %v715 = vld [vmem:[#allocation5 + $0x1e8] sm:$0xff]
        %v716 = vld [vmem:[#allocation5 + $0x1f0] sm:$0xff]
        %v717 = vld [vmem:[#allocation5 + $0x1f8] sm:$0xff]
        %v718 = vld [vmem:[#allocation5 + $0x200] sm:$0xff]
        %v719 = vld [vmem:[#allocation5 + $0x208] sm:$0xff]
        %v720 = vld [vmem:[#allocation5 + $0x210] sm:$0xff]
        %v721 = vld [vmem:[#allocation5 + $0x218] sm:$0xff]
        %v722 = vld [vmem:[#allocation5 + $0x220] sm:$0xff]
        %v723 = vld [vmem:[#allocation5 + $0x228] sm:$0xff]
        %v724 = vld [vmem:[#allocation5 + $0x230] sm:$0xff]
        %v725 = vld [vmem:[#allocation5 + $0x238] sm:$0xff]
        %v726 = vld [vmem:[#allocation5 + $0x240] sm:$0x3]
        %v727 = vld [vmem:[#allocation5 + $0x248] sm:$0x3]
        %v728 = vld [vmem:[#allocation5 + $0x250] sm:$0x3]
        %v729 = vld [vmem:[#allocation5 + $0x258] sm:$0x3]
        %v730 = vld [vmem:[#allocation5 + $0x260] sm:$0x3]
        %v731 = vld [vmem:[#allocation5 + $0x268] sm:$0x3]
        %v732 = vld [vmem:[#allocation5 + $0x270] sm:$0x3]
        %v733 = vld [vmem:[#allocation5 + $0x278] sm:$0x3]
        %v734 = vld [vmem:[#allocation5 + $0x280] sm:$0x3]
        %v735 = vld [vmem:[#allocation5 + $0x288] sm:$0x3]
        %v736 = vld [vmem:[#allocation5 + $0x290] sm:$0x3]
        %v737 = vld [vmem:[#allocation5 + $0x298] sm:$0x3]
        %v738 = vld [vmem:[#allocation5 + $0x2a0] sm:$0x3]
        %v739 = vld [vmem:[#allocation5 + $0x2a8] sm:$0x3]
        %v740 = vld [vmem:[#allocation5 + $0x2b0] sm:$0x3]
        %v741 = vld [vmem:[#allocation5 + $0x2b8] sm:$0x3]
        %v742 = vld [vmem:[#allocation5 + $0x2c0] sm:$0x3]
        %v743 = vld [vmem:[#allocation5 + $0x2c8] sm:$0x3]
        %v744 = vld [vmem:[#allocation5 + $0x2d0] sm:$0x3]
        %v745 = vld [vmem:[#allocation5 + $0x2d8] sm:$0x3]
        %v746 = vld [vmem:[#allocation5 + $0x2e0] sm:$0x3]
        %v747 = vld [vmem:[#allocation5 + $0x2e8] sm:$0x3]
        %v748 = vld [vmem:[#allocation5 + $0x2f0] sm:$0x3]
        %v749 = vld [vmem:[#allocation5 + $0x2f8] sm:$0x3]
        %v750 = vld [vmem:[#allocation5 + $0x300] sm:$0x3]
        %v751 = vld [vmem:[#allocation5 + $0x308] sm:$0x3]
        %v752 = vld [vmem:[#allocation5 + $0x310] sm:$0x3]
        %v753 = vld [vmem:[#allocation5 + $0x318] sm:$0x3]
        %v754 = vld [vmem:[#allocation5 + $0x320] sm:$0x3]
        %v755 = vld [vmem:[#allocation5 + $0x328] sm:$0x3]
        %v756 = vld [vmem:[#allocation5 + $0x330] sm:$0x3]
        %v757 = vld [vmem:[#allocation5 + $0x338] sm:$0x3]
        %v758 = vld [vmem:[#allocation5 + $0x340] sm:$0x3]
        %v759 = vld [vmem:[#allocation5 + $0x348] sm:$0x3]
        %v760 = vld [vmem:[#allocation5 + $0x350] sm:$0x3]
        %v761 = vld [vmem:[#allocation5 + $0x358] sm:$0x3]
        %v762 = vld [vmem:[#allocation7] sm:$0xff]
        %v763 = vld [vmem:[#allocation7 + $0x8] sm:$0xff]
        %v764 = vld [vmem:[#allocation7 + $0x10] sm:$0xff]
        %v765 = vld [vmem:[#allocation7 + $0x18] sm:$0xff]
        %v766 = vld [vmem:[#allocation7 + $0x20] sm:$0xf]
        %v772 = vperm.slane %v762, 0
        %v773 = vperm.slane %v762, 1
        %v774 = vperm.slane %v762, 2
        %v775 = vperm.slane %v762, 3
        %v776 = vperm.slane %v762, 4
        %v777 = vperm.slane %v762, 5
        %v778 = vperm.slane %v762, 6
        %v779 = vperm.slane %v762, 7
        %v780 = vperm.slane %v763, 0
        %v781 = vperm.slane %v763, 1
        %v782 = vperm.slane %v763, 2
        %v783 = vperm.slane %v763, 3
        %v784 = vperm.slane %v763, 4
        %v785 = vperm.slane %v763, 5
        %v786 = vperm.slane %v763, 6
        %v787 = vperm.slane %v763, 7
        %v788 = vperm.slane %v764, 0
        %v789 = vperm.slane %v764, 1
        %v790 = vperm.slane %v764, 2
        %v791 = vperm.slane %v764, 3
        %v792 = vperm.slane %v764, 4
        %v793 = vperm.slane %v764, 5
        %v794 = vperm.slane %v764, 6
        %v795 = vperm.slane %v764, 7
        %v796 = vperm.slane %v765, 0
        %v797 = vperm.slane %v765, 1
        %v798 = vperm.slane %v765, 2
        %v799 = vperm.slane %v765, 3
        %v800 = vperm.slane %v765, 4
        %v801 = vperm.slane %v765, 5
        %v802 = vperm.slane %v765, 6
        %v803 = vperm.slane %v765, 7
        %v804 = vperm.slane %v766, 0
        %v805 = vperm.slane %v766, 1
        %v806 = vperm.slane %v766, 2
        %v807 = vperm.slane %v766, 3
        %vm844 = vcmask 146432
        %v846 = vsel %vm844, %v653, 0
        %vm848 = vcmask 1041408
        %v850 = vsel %vm848, %v726, 0
        %v853 = vsel %vm848, %v727, 0
        %v856 = vsel %vm848, %v728, 0
        %v859 = vsel %vm848, %v729, 0
        %v862 = vsel %vm848, %v730, 0
        %v865 = vsel %vm848, %v731, 0
        %v868 = vsel %vm848, %v732, 0
        %v871 = vsel %vm848, %v733, 0
        %v874 = vsel %vm848, %v734, 0
        %v877 = vsel %vm848, %v735, 0
        %v880 = vsel %vm848, %v736, 0
        %v883 = vsel %vm848, %v737, 0
        %v886 = vsel %vm848, %v738, 0
        %v889 = vsel %vm848, %v739, 0
        %v892 = vsel %vm848, %v740, 0
        %v895 = vsel %vm848, %v741, 0
        %v898 = vsel %vm848, %v742, 0
        %v901 = vsel %vm848, %v743, 0
        %v904 = vsel %vm848, %v744, 0
        %v907 = vsel %vm848, %v745, 0
        %v910 = vsel %vm848, %v746, 0
        %v913 = vsel %vm848, %v747, 0
        %v916 = vsel %vm848, %v748, 0
        %v919 = vsel %vm848, %v749, 0
        %v922 = vsel %vm848, %v750, 0
        %v925 = vsel %vm848, %v751, 0
        %v928 = vsel %vm848, %v752, 0
        %v931 = vsel %vm848, %v753, 0
        %v934 = vsel %vm848, %v754, 0
        %v937 = vsel %vm848, %v755, 0
        %v940 = vsel %vm848, %v756, 0
        %v943 = vsel %vm848, %v757, 0
        %v946 = vsel %vm848, %v758, 0
        %v949 = vsel %vm848, %v759, 0
        %v952 = vsel %vm848, %v760, 0
        %v955 = vsel %vm848, %v761, 0
        %957 = vmatpush.msra.mxu0 0.0
        %958 = vmatpush.msra.mxu0 0.0
        %959 = vmatpush.msra.mxu0 0.0
        %960 = vmatpush.msra.mxu0 0.0
        %961 = vmatpush.msra.mxu0 0.0
        %962 = vmatpush.msra.mxu0 0.0
        %963 = vmatpush.msra.mxu0 0.0
        %964 = vmatpush.msra.mxu0 0.0
        %965 = vmatpush.msra.mxu0 0.0
        %966 = vmatpush.msra.mxu0 0.0
        %967 = vmatpush.msra.mxu0 0.0
        %968 = vmatpush.msra.mxu0 0.0
        %969 = vmatpush.msra.mxu0 0.0
        %970 = vmatpush.msra.mxu0 %v850
        %971 = vmatpush.msra.mxu0 %v690
        %972 = vmatpush.msra.mxu0 %v654
        %973 = vmatmul.f32.gmra.mxu0 %v846
        %v974 = vpop.f32.mrf.mxu0
        %v975 = vadd.f32 %v772, %v974
        %976 = vdwg.mxu0
        %977 = vmatpush.msra.mxu0 0.0
        %978 = vmatpush.msra.mxu0 0.0
        %979 = vmatpush.msra.mxu0 0.0
        %980 = vmatpush.msra.mxu0 0.0
        %981 = vmatpush.msra.mxu0 0.0
        %982 = vmatpush.msra.mxu0 0.0
        %983 = vmatpush.msra.mxu0 0.0
        %984 = vmatpush.msra.mxu0 0.0
        %985 = vmatpush.msra.mxu0 0.0
        %986 = vmatpush.msra.mxu0 0.0
        %987 = vmatpush.msra.mxu0 0.0
        %988 = vmatpush.msra.mxu0 0.0
        %989 = vmatpush.msra.mxu0 0.0
        %990 = vmatpush.msra.mxu0 %v853
        %991 = vmatpush.msra.mxu0 %v691
        %992 = vmatpush.msra.mxu0 %v655
        %993 = vmatmul.f32.gmra.mxu0 %v846
        %v994 = vpop.f32.mrf.mxu0
        %v995 = vadd.f32 %v773, %v994
        %996 = vdwg.mxu0
        %997 = vmatpush.msra.mxu0 0.0
        %998 = vmatpush.msra.mxu0 0.0
        %999 = vmatpush.msra.mxu0 0.0
        %1000 = vmatpush.msra.mxu0 0.0
        %1001 = vmatpush.msra.mxu0 0.0
        %1002 = vmatpush.msra.mxu0 0.0
        %1003 = vmatpush.msra.mxu0 0.0
        %1004 = vmatpush.msra.mxu0 0.0
        %1005 = vmatpush.msra.mxu0 0.0
        %1006 = vmatpush.msra.mxu0 0.0
        %1007 = vmatpush.msra.mxu0 0.0
        %1008 = vmatpush.msra.mxu0 0.0
        %1009 = vmatpush.msra.mxu0 0.0
        %1010 = vmatpush.msra.mxu0 %v856
        %1011 = vmatpush.msra.mxu0 %v692
        %1012 = vmatpush.msra.mxu0 %v656
        %1013 = vmatmul.f32.gmra.mxu0 %v846
        %v1014 = vpop.f32.mrf.mxu0
        %v1015 = vadd.f32 %v774, %v1014
        %1016 = vdwg.mxu0
        %1017 = vmatpush.msra.mxu0 0.0
        %1018 = vmatpush.msra.mxu0 0.0
        %1019 = vmatpush.msra.mxu0 0.0
        %1020 = vmatpush.msra.mxu0 0.0
        %1021 = vmatpush.msra.mxu0 0.0
        %1022 = vmatpush.msra.mxu0 0.0
        %1023 = vmatpush.msra.mxu0 0.0
        %1024 = vmatpush.msra.mxu0 0.0
        %1025 = vmatpush.msra.mxu0 0.0
        %1026 = vmatpush.msra.mxu0 0.0
        %1027 = vmatpush.msra.mxu0 0.0
        %1028 = vmatpush.msra.mxu0 0.0
        %1029 = vmatpush.msra.mxu0 0.0
        %1030 = vmatpush.msra.mxu0 %v859
        %1031 = vmatpush.msra.mxu0 %v693
        %1032 = vmatpush.msra.mxu0 %v657
        %1033 = vmatmul.f32.gmra.mxu0 %v846
        %v1034 = vpop.f32.mrf.mxu0
        %v1035 = vadd.f32 %v775, %v1034
        %1036 = vdwg.mxu0
        %1037 = vmatpush.msra.mxu0 0.0
        %1038 = vmatpush.msra.mxu0 0.0
        %1039 = vmatpush.msra.mxu0 0.0
        %1040 = vmatpush.msra.mxu0 0.0
        %1041 = vmatpush.msra.mxu0 0.0
        %1042 = vmatpush.msra.mxu0 0.0
        %1043 = vmatpush.msra.mxu0 0.0
        %1044 = vmatpush.msra.mxu0 0.0
        %1045 = vmatpush.msra.mxu0 0.0
        %1046 = vmatpush.msra.mxu0 0.0
        %1047 = vmatpush.msra.mxu0 0.0
        %1048 = vmatpush.msra.mxu0 0.0
        %1049 = vmatpush.msra.mxu0 0.0
        %1050 = vmatpush.msra.mxu0 %v862
        %1051 = vmatpush.msra.mxu0 %v694
        %1052 = vmatpush.msra.mxu0 %v658
        %1053 = vmatmul.f32.gmra.mxu0 %v846
        %v1054 = vpop.f32.mrf.mxu0
        %v1055 = vadd.f32 %v776, %v1054
        %1056 = vdwg.mxu0
        %1057 = vmatpush.msra.mxu0 0.0
        %1058 = vmatpush.msra.mxu0 0.0
        %1059 = vmatpush.msra.mxu0 0.0
        %1060 = vmatpush.msra.mxu0 0.0
        %1061 = vmatpush.msra.mxu0 0.0
        %1062 = vmatpush.msra.mxu0 0.0
        %1063 = vmatpush.msra.mxu0 0.0
        %1064 = vmatpush.msra.mxu0 0.0
        %1065 = vmatpush.msra.mxu0 0.0
        %1066 = vmatpush.msra.mxu0 0.0
        %1067 = vmatpush.msra.mxu0 0.0
        %1068 = vmatpush.msra.mxu0 0.0
        %1069 = vmatpush.msra.mxu0 0.0
        %1070 = vmatpush.msra.mxu0 %v865
        %1071 = vmatpush.msra.mxu0 %v695
        %1072 = vmatpush.msra.mxu0 %v659
        %1073 = vmatmul.f32.gmra.mxu0 %v846
        %v1074 = vpop.f32.mrf.mxu0
        %v1075 = vadd.f32 %v777, %v1074
        %1076 = vdwg.mxu0
        %1077 = vmatpush.msra.mxu0 0.0
        %1078 = vmatpush.msra.mxu0 0.0
        %1079 = vmatpush.msra.mxu0 0.0
        %1080 = vmatpush.msra.mxu0 0.0
        %1081 = vmatpush.msra.mxu0 0.0
        %1082 = vmatpush.msra.mxu0 0.0
        %1083 = vmatpush.msra.mxu0 0.0
        %1084 = vmatpush.msra.mxu0 0.0
        %1085 = vmatpush.msra.mxu0 0.0
        %1086 = vmatpush.msra.mxu0 0.0
        %1087 = vmatpush.msra.mxu0 0.0
        %1088 = vmatpush.msra.mxu0 0.0
        %1089 = vmatpush.msra.mxu0 0.0
        %1090 = vmatpush.msra.mxu0 %v868
        %1091 = vmatpush.msra.mxu0 %v696
        %1092 = vmatpush.msra.mxu0 %v660
        %1093 = vmatmul.f32.gmra.mxu0 %v846
        %v1094 = vpop.f32.mrf.mxu0
        %v1095 = vadd.f32 %v778, %v1094
        %1096 = vdwg.mxu0
        %1097 = vmatpush.msra.mxu0 0.0
        %1098 = vmatpush.msra.mxu0 0.0
        %1099 = vmatpush.msra.mxu0 0.0
        %1100 = vmatpush.msra.mxu0 0.0
        %1101 = vmatpush.msra.mxu0 0.0
        %1102 = vmatpush.msra.mxu0 0.0
        %1103 = vmatpush.msra.mxu0 0.0
        %1104 = vmatpush.msra.mxu0 0.0
        %1105 = vmatpush.msra.mxu0 0.0
        %1106 = vmatpush.msra.mxu0 0.0
        %1107 = vmatpush.msra.mxu0 0.0
        %1108 = vmatpush.msra.mxu0 0.0
        %1109 = vmatpush.msra.mxu0 0.0
        %1110 = vmatpush.msra.mxu0 %v871
        %1111 = vmatpush.msra.mxu0 %v697
        %1112 = vmatpush.msra.mxu0 %v661
        %1113 = vmatmul.f32.gmra.mxu0 %v846
        %v1114 = vpop.f32.mrf.mxu0
        %v1115 = vadd.f32 %v779, %v1114
        %1116 = vdwg.mxu0
        %1117 = vmatpush.msra.mxu0 0.0
        %1118 = vmatpush.msra.mxu0 0.0
        %1119 = vmatpush.msra.mxu0 0.0
        %1120 = vmatpush.msra.mxu0 0.0
        %1121 = vmatpush.msra.mxu0 0.0
        %1122 = vmatpush.msra.mxu0 0.0
        %1123 = vmatpush.msra.mxu0 0.0
        %1124 = vmatpush.msra.mxu0 0.0
        %1125 = vmatpush.msra.mxu0 0.0
        %1126 = vmatpush.msra.mxu0 0.0
        %1127 = vmatpush.msra.mxu0 0.0
        %1128 = vmatpush.msra.mxu0 0.0
        %1129 = vmatpush.msra.mxu0 0.0
        %1130 = vmatpush.msra.mxu0 %v874
        %1131 = vmatpush.msra.mxu0 %v698
        %1132 = vmatpush.msra.mxu0 %v662
        %1133 = vmatmul.f32.gmra.mxu0 %v846
        %v1134 = vpop.f32.mrf.mxu0
        %v1135 = vadd.f32 %v780, %v1134
        %1136 = vdwg.mxu0
        %1137 = vmatpush.msra.mxu0 0.0
        %1138 = vmatpush.msra.mxu0 0.0
        %1139 = vmatpush.msra.mxu0 0.0
        %1140 = vmatpush.msra.mxu0 0.0
        %1141 = vmatpush.msra.mxu0 0.0
        %1142 = vmatpush.msra.mxu0 0.0
        %1143 = vmatpush.msra.mxu0 0.0
        %1144 = vmatpush.msra.mxu0 0.0
        %1145 = vmatpush.msra.mxu0 0.0
        %1146 = vmatpush.msra.mxu0 0.0
        %1147 = vmatpush.msra.mxu0 0.0
        %1148 = vmatpush.msra.mxu0 0.0
        %1149 = vmatpush.msra.mxu0 0.0
        %1150 = vmatpush.msra.mxu0 %v877
        %1151 = vmatpush.msra.mxu0 %v699
        %1152 = vmatpush.msra.mxu0 %v663
        %1153 = vmatmul.f32.gmra.mxu0 %v846
        %v1154 = vpop.f32.mrf.mxu0
        %v1155 = vadd.f32 %v781, %v1154
        %1156 = vdwg.mxu0
        %1157 = vmatpush.msra.mxu0 0.0
        %1158 = vmatpush.msra.mxu0 0.0
        %1159 = vmatpush.msra.mxu0 0.0
        %1160 = vmatpush.msra.mxu0 0.0
        %1161 = vmatpush.msra.mxu0 0.0
        %1162 = vmatpush.msra.mxu0 0.0
        %1163 = vmatpush.msra.mxu0 0.0
        %1164 = vmatpush.msra.mxu0 0.0
        %1165 = vmatpush.msra.mxu0 0.0
        %1166 = vmatpush.msra.mxu0 0.0
        %1167 = vmatpush.msra.mxu0 0.0
        %1168 = vmatpush.msra.mxu0 0.0
        %1169 = vmatpush.msra.mxu0 0.0
        %1170 = vmatpush.msra.mxu0 %v880
        %1171 = vmatpush.msra.mxu0 %v700
        %1172 = vmatpush.msra.mxu0 %v664
        %1173 = vmatmul.f32.gmra.mxu0 %v846
        %v1174 = vpop.f32.mrf.mxu0
        %v1175 = vadd.f32 %v782, %v1174
        %1176 = vdwg.mxu0
        %1177 = vmatpush.msra.mxu0 0.0
        %1178 = vmatpush.msra.mxu0 0.0
        %1179 = vmatpush.msra.mxu0 0.0
        %1180 = vmatpush.msra.mxu0 0.0
        %1181 = vmatpush.msra.mxu0 0.0
        %1182 = vmatpush.msra.mxu0 0.0
        %1183 = vmatpush.msra.mxu0 0.0
        %1184 = vmatpush.msra.mxu0 0.0
        %1185 = vmatpush.msra.mxu0 0.0
        %1186 = vmatpush.msra.mxu0 0.0
        %1187 = vmatpush.msra.mxu0 0.0
        %1188 = vmatpush.msra.mxu0 0.0
        %1189 = vmatpush.msra.mxu0 0.0
        %1190 = vmatpush.msra.mxu0 %v883
        %1191 = vmatpush.msra.mxu0 %v701
        %1192 = vmatpush.msra.mxu0 %v665
        %1193 = vmatmul.f32.gmra.mxu0 %v846
        %v1194 = vpop.f32.mrf.mxu0
        %v1195 = vadd.f32 %v783, %v1194
        %1196 = vdwg.mxu0
        %1197 = vmatpush.msra.mxu0 0.0
        %1198 = vmatpush.msra.mxu0 0.0
        %1199 = vmatpush.msra.mxu0 0.0
        %1200 = vmatpush.msra.mxu0 0.0
        %1201 = vmatpush.msra.mxu0 0.0
        %1202 = vmatpush.msra.mxu0 0.0
        %1203 = vmatpush.msra.mxu0 0.0
        %1204 = vmatpush.msra.mxu0 0.0
        %1205 = vmatpush.msra.mxu0 0.0
        %1206 = vmatpush.msra.mxu0 0.0
        %1207 = vmatpush.msra.mxu0 0.0
        %1208 = vmatpush.msra.mxu0 0.0
        %1209 = vmatpush.msra.mxu0 0.0
        %1210 = vmatpush.msra.mxu0 %v886
        %1211 = vmatpush.msra.mxu0 %v702
        %1212 = vmatpush.msra.mxu0 %v666
        %1213 = vmatmul.f32.gmra.mxu0 %v846
        %v1214 = vpop.f32.mrf.mxu0
        %v1215 = vadd.f32 %v784, %v1214
        %1216 = vdwg.mxu0
        %1217 = vmatpush.msra.mxu0 0.0
        %1218 = vmatpush.msra.mxu0 0.0
        %1219 = vmatpush.msra.mxu0 0.0
        %1220 = vmatpush.msra.mxu0 0.0
        %1221 = vmatpush.msra.mxu0 0.0
        %1222 = vmatpush.msra.mxu0 0.0
        %1223 = vmatpush.msra.mxu0 0.0
        %1224 = vmatpush.msra.mxu0 0.0
        %1225 = vmatpush.msra.mxu0 0.0
        %1226 = vmatpush.msra.mxu0 0.0
        %1227 = vmatpush.msra.mxu0 0.0
        %1228 = vmatpush.msra.mxu0 0.0
        %1229 = vmatpush.msra.mxu0 0.0
        %1230 = vmatpush.msra.mxu0 %v889
        %1231 = vmatpush.msra.mxu0 %v703
        %1232 = vmatpush.msra.mxu0 %v667
        %1233 = vmatmul.f32.gmra.mxu0 %v846
        %v1234 = vpop.f32.mrf.mxu0
        %v1235 = vadd.f32 %v785, %v1234
        %1236 = vdwg.mxu0
        %1237 = vmatpush.msra.mxu0 0.0
        %1238 = vmatpush.msra.mxu0 0.0
        %1239 = vmatpush.msra.mxu0 0.0
        %1240 = vmatpush.msra.mxu0 0.0
        %1241 = vmatpush.msra.mxu0 0.0
        %1242 = vmatpush.msra.mxu0 0.0
        %1243 = vmatpush.msra.mxu0 0.0
        %1244 = vmatpush.msra.mxu0 0.0
        %1245 = vmatpush.msra.mxu0 0.0
        %1246 = vmatpush.msra.mxu0 0.0
        %1247 = vmatpush.msra.mxu0 0.0
        %1248 = vmatpush.msra.mxu0 0.0
        %1249 = vmatpush.msra.mxu0 0.0
        %1250 = vmatpush.msra.mxu0 %v892
        %1251 = vmatpush.msra.mxu0 %v704
        %1252 = vmatpush.msra.mxu0 %v668
        %1253 = vmatmul.f32.gmra.mxu0 %v846
        %v1254 = vpop.f32.mrf.mxu0
        %v1255 = vadd.f32 %v786, %v1254
        %1256 = vdwg.mxu0
        %1257 = vmatpush.msra.mxu0 0.0
        %1258 = vmatpush.msra.mxu0 0.0
        %1259 = vmatpush.msra.mxu0 0.0
        %1260 = vmatpush.msra.mxu0 0.0
        %1261 = vmatpush.msra.mxu0 0.0
        %1262 = vmatpush.msra.mxu0 0.0
        %1263 = vmatpush.msra.mxu0 0.0
        %1264 = vmatpush.msra.mxu0 0.0
        %1265 = vmatpush.msra.mxu0 0.0
        %1266 = vmatpush.msra.mxu0 0.0
        %1267 = vmatpush.msra.mxu0 0.0
        %1268 = vmatpush.msra.mxu0 0.0
        %1269 = vmatpush.msra.mxu0 0.0
        %1270 = vmatpush.msra.mxu0 %v895
        %1271 = vmatpush.msra.mxu0 %v705
        %1272 = vmatpush.msra.mxu0 %v669
        %1273 = vmatmul.f32.gmra.mxu0 %v846
        %v1274 = vpop.f32.mrf.mxu0
        %v1275 = vadd.f32 %v787, %v1274
        %1276 = vdwg.mxu0
        %1277 = vmatpush.msra.mxu0 0.0
        %1278 = vmatpush.msra.mxu0 0.0
        %1279 = vmatpush.msra.mxu0 0.0
        %1280 = vmatpush.msra.mxu0 0.0
        %1281 = vmatpush.msra.mxu0 0.0
        %1282 = vmatpush.msra.mxu0 0.0
        %1283 = vmatpush.msra.mxu0 0.0
        %1284 = vmatpush.msra.mxu0 0.0
        %1285 = vmatpush.msra.mxu0 0.0
        %1286 = vmatpush.msra.mxu0 0.0
        %1287 = vmatpush.msra.mxu0 0.0
        %1288 = vmatpush.msra.mxu0 0.0
        %1289 = vmatpush.msra.mxu0 0.0
        %1290 = vmatpush.msra.mxu0 %v898
        %1291 = vmatpush.msra.mxu0 %v706
        %1292 = vmatpush.msra.mxu0 %v670
        %1293 = vmatmul.f32.gmra.mxu0 %v846
        %v1294 = vpop.f32.mrf.mxu0
        %v1295 = vadd.f32 %v788, %v1294
        %1296 = vdwg.mxu0
        %1297 = vmatpush.msra.mxu0 0.0
        %1298 = vmatpush.msra.mxu0 0.0
        %1299 = vmatpush.msra.mxu0 0.0
        %1300 = vmatpush.msra.mxu0 0.0
        %1301 = vmatpush.msra.mxu0 0.0
        %1302 = vmatpush.msra.mxu0 0.0
        %1303 = vmatpush.msra.mxu0 0.0
        %1304 = vmatpush.msra.mxu0 0.0
        %1305 = vmatpush.msra.mxu0 0.0
        %1306 = vmatpush.msra.mxu0 0.0
        %1307 = vmatpush.msra.mxu0 0.0
        %1308 = vmatpush.msra.mxu0 0.0
        %1309 = vmatpush.msra.mxu0 0.0
        %1310 = vmatpush.msra.mxu0 %v901
        %1311 = vmatpush.msra.mxu0 %v707
        %1312 = vmatpush.msra.mxu0 %v671
        %1313 = vmatmul.f32.gmra.mxu0 %v846
        %v1314 = vpop.f32.mrf.mxu0
        %v1315 = vadd.f32 %v789, %v1314
        %1316 = vdwg.mxu0
        %1317 = vmatpush.msra.mxu0 0.0
        %1318 = vmatpush.msra.mxu0 0.0
        %1319 = vmatpush.msra.mxu0 0.0
        %1320 = vmatpush.msra.mxu0 0.0
        %1321 = vmatpush.msra.mxu0 0.0
        %1322 = vmatpush.msra.mxu0 0.0
        %1323 = vmatpush.msra.mxu0 0.0
        %1324 = vmatpush.msra.mxu0 0.0
        %1325 = vmatpush.msra.mxu0 0.0
        %1326 = vmatpush.msra.mxu0 0.0
        %1327 = vmatpush.msra.mxu0 0.0
        %1328 = vmatpush.msra.mxu0 0.0
        %1329 = vmatpush.msra.mxu0 0.0
        %1330 = vmatpush.msra.mxu0 %v904
        %1331 = vmatpush.msra.mxu0 %v708
        %1332 = vmatpush.msra.mxu0 %v672
        %1333 = vmatmul.f32.gmra.mxu0 %v846
        %v1334 = vpop.f32.mrf.mxu0
        %v1335 = vadd.f32 %v790, %v1334
        %1336 = vdwg.mxu0
        %1337 = vmatpush.msra.mxu0 0.0
        %1338 = vmatpush.msra.mxu0 0.0
        %1339 = vmatpush.msra.mxu0 0.0
        %1340 = vmatpush.msra.mxu0 0.0
        %1341 = vmatpush.msra.mxu0 0.0
        %1342 = vmatpush.msra.mxu0 0.0
        %1343 = vmatpush.msra.mxu0 0.0
        %1344 = vmatpush.msra.mxu0 0.0
        %1345 = vmatpush.msra.mxu0 0.0
        %1346 = vmatpush.msra.mxu0 0.0
        %1347 = vmatpush.msra.mxu0 0.0
        %1348 = vmatpush.msra.mxu0 0.0
        %1349 = vmatpush.msra.mxu0 0.0
        %1350 = vmatpush.msra.mxu0 %v907
        %1351 = vmatpush.msra.mxu0 %v709
        %1352 = vmatpush.msra.mxu0 %v673
        %1353 = vmatmul.f32.gmra.mxu0 %v846
        %v1354 = vpop.f32.mrf.mxu0
        %v1355 = vadd.f32 %v791, %v1354
        %1356 = vdwg.mxu0
        %1357 = vmatpush.msra.mxu0 0.0
        %1358 = vmatpush.msra.mxu0 0.0
        %1359 = vmatpush.msra.mxu0 0.0
        %1360 = vmatpush.msra.mxu0 0.0
        %1361 = vmatpush.msra.mxu0 0.0
        %1362 = vmatpush.msra.mxu0 0.0
        %1363 = vmatpush.msra.mxu0 0.0
        %1364 = vmatpush.msra.mxu0 0.0
        %1365 = vmatpush.msra.mxu0 0.0
        %1366 = vmatpush.msra.mxu0 0.0
        %1367 = vmatpush.msra.mxu0 0.0
        %1368 = vmatpush.msra.mxu0 0.0
        %1369 = vmatpush.msra.mxu0 0.0
        %1370 = vmatpush.msra.mxu0 %v910
        %1371 = vmatpush.msra.mxu0 %v710
        %1372 = vmatpush.msra.mxu0 %v674
        %1373 = vmatmul.f32.gmra.mxu0 %v846
        %v1374 = vpop.f32.mrf.mxu0
        %v1375 = vadd.f32 %v792, %v1374
        %1376 = vdwg.mxu0
        %1377 = vmatpush.msra.mxu0 0.0
        %1378 = vmatpush.msra.mxu0 0.0
        %1379 = vmatpush.msra.mxu0 0.0
        %1380 = vmatpush.msra.mxu0 0.0
        %1381 = vmatpush.msra.mxu0 0.0
        %1382 = vmatpush.msra.mxu0 0.0
        %1383 = vmatpush.msra.mxu0 0.0
        %1384 = vmatpush.msra.mxu0 0.0
        %1385 = vmatpush.msra.mxu0 0.0
        %1386 = vmatpush.msra.mxu0 0.0
        %1387 = vmatpush.msra.mxu0 0.0
        %1388 = vmatpush.msra.mxu0 0.0
        %1389 = vmatpush.msra.mxu0 0.0
        %1390 = vmatpush.msra.mxu0 %v913
        %1391 = vmatpush.msra.mxu0 %v711
        %1392 = vmatpush.msra.mxu0 %v675
        %1393 = vmatmul.f32.gmra.mxu0 %v846
        %v1394 = vpop.f32.mrf.mxu0
        %v1395 = vadd.f32 %v793, %v1394
        %1396 = vdwg.mxu0
        %1397 = vmatpush.msra.mxu0 0.0
        %1398 = vmatpush.msra.mxu0 0.0
        %1399 = vmatpush.msra.mxu0 0.0
        %1400 = vmatpush.msra.mxu0 0.0
        %1401 = vmatpush.msra.mxu0 0.0
        %1402 = vmatpush.msra.mxu0 0.0
        %1403 = vmatpush.msra.mxu0 0.0
        %1404 = vmatpush.msra.mxu0 0.0
        %1405 = vmatpush.msra.mxu0 0.0
        %1406 = vmatpush.msra.mxu0 0.0
        %1407 = vmatpush.msra.mxu0 0.0
        %1408 = vmatpush.msra.mxu0 0.0
        %1409 = vmatpush.msra.mxu0 0.0
        %1410 = vmatpush.msra.mxu0 %v916
        %1411 = vmatpush.msra.mxu0 %v712
        %1412 = vmatpush.msra.mxu0 %v676
        %1413 = vmatmul.f32.gmra.mxu0 %v846
        %v1414 = vpop.f32.mrf.mxu0
        %v1415 = vadd.f32 %v794, %v1414
        %1416 = vdwg.mxu0
        %1417 = vmatpush.msra.mxu0 0.0
        %1418 = vmatpush.msra.mxu0 0.0
        %1419 = vmatpush.msra.mxu0 0.0
        %1420 = vmatpush.msra.mxu0 0.0
        %1421 = vmatpush.msra.mxu0 0.0
        %1422 = vmatpush.msra.mxu0 0.0
        %1423 = vmatpush.msra.mxu0 0.0
        %1424 = vmatpush.msra.mxu0 0.0
        %1425 = vmatpush.msra.mxu0 0.0
        %1426 = vmatpush.msra.mxu0 0.0
        %1427 = vmatpush.msra.mxu0 0.0
        %1428 = vmatpush.msra.mxu0 0.0
        %1429 = vmatpush.msra.mxu0 0.0
        %1430 = vmatpush.msra.mxu0 %v919
        %1431 = vmatpush.msra.mxu0 %v713
        %1432 = vmatpush.msra.mxu0 %v677
        %1433 = vmatmul.f32.gmra.mxu0 %v846
        %v1434 = vpop.f32.mrf.mxu0
        %v1435 = vadd.f32 %v795, %v1434
        %1436 = vdwg.mxu0
        %1437 = vmatpush.msra.mxu0 0.0
        %1438 = vmatpush.msra.mxu0 0.0
        %1439 = vmatpush.msra.mxu0 0.0
        %1440 = vmatpush.msra.mxu0 0.0
        %1441 = vmatpush.msra.mxu0 0.0
        %1442 = vmatpush.msra.mxu0 0.0
        %1443 = vmatpush.msra.mxu0 0.0
        %1444 = vmatpush.msra.mxu0 0.0
        %1445 = vmatpush.msra.mxu0 0.0
        %1446 = vmatpush.msra.mxu0 0.0
        %1447 = vmatpush.msra.mxu0 0.0
        %1448 = vmatpush.msra.mxu0 0.0
        %1449 = vmatpush.msra.mxu0 0.0
        %1450 = vmatpush.msra.mxu0 %v922
        %1451 = vmatpush.msra.mxu0 %v714
        %1452 = vmatpush.msra.mxu0 %v678
        %1453 = vmatmul.f32.gmra.mxu0 %v846
        %v1454 = vpop.f32.mrf.mxu0
        %v1455 = vadd.f32 %v796, %v1454
        %1456 = vdwg.mxu0
        %1457 = vmatpush.msra.mxu0 0.0
        %1458 = vmatpush.msra.mxu0 0.0
        %1459 = vmatpush.msra.mxu0 0.0
        %1460 = vmatpush.msra.mxu0 0.0
        %1461 = vmatpush.msra.mxu0 0.0
        %1462 = vmatpush.msra.mxu0 0.0
        %1463 = vmatpush.msra.mxu0 0.0
        %1464 = vmatpush.msra.mxu0 0.0
        %1465 = vmatpush.msra.mxu0 0.0
        %1466 = vmatpush.msra.mxu0 0.0
        %1467 = vmatpush.msra.mxu0 0.0
        %1468 = vmatpush.msra.mxu0 0.0
        %1469 = vmatpush.msra.mxu0 0.0
        %1470 = vmatpush.msra.mxu0 %v925
        %1471 = vmatpush.msra.mxu0 %v715
        %1472 = vmatpush.msra.mxu0 %v679
        %1473 = vmatmul.f32.gmra.mxu0 %v846
        %v1474 = vpop.f32.mrf.mxu0
        %v1475 = vadd.f32 %v797, %v1474
        %1476 = vdwg.mxu0
        %1477 = vmatpush.msra.mxu0 0.0
        %1478 = vmatpush.msra.mxu0 0.0
        %1479 = vmatpush.msra.mxu0 0.0
        %1480 = vmatpush.msra.mxu0 0.0
        %1481 = vmatpush.msra.mxu0 0.0
        %1482 = vmatpush.msra.mxu0 0.0
        %1483 = vmatpush.msra.mxu0 0.0
        %1484 = vmatpush.msra.mxu0 0.0
        %1485 = vmatpush.msra.mxu0 0.0
        %1486 = vmatpush.msra.mxu0 0.0
        %1487 = vmatpush.msra.mxu0 0.0
        %1488 = vmatpush.msra.mxu0 0.0
        %1489 = vmatpush.msra.mxu0 0.0
        %1490 = vmatpush.msra.mxu0 %v928
        %1491 = vmatpush.msra.mxu0 %v716
        %1492 = vmatpush.msra.mxu0 %v680
        %1493 = vmatmul.f32.gmra.mxu0 %v846
        %v1494 = vpop.f32.mrf.mxu0
        %v1495 = vadd.f32 %v798, %v1494
        %1496 = vdwg.mxu0
        %1497 = vmatpush.msra.mxu0 0.0
        %1498 = vmatpush.msra.mxu0 0.0
        %1499 = vmatpush.msra.mxu0 0.0
        %1500 = vmatpush.msra.mxu0 0.0
        %1501 = vmatpush.msra.mxu0 0.0
        %1502 = vmatpush.msra.mxu0 0.0
        %1503 = vmatpush.msra.mxu0 0.0
        %1504 = vmatpush.msra.mxu0 0.0
        %1505 = vmatpush.msra.mxu0 0.0
        %1506 = vmatpush.msra.mxu0 0.0
        %1507 = vmatpush.msra.mxu0 0.0
        %1508 = vmatpush.msra.mxu0 0.0
        %1509 = vmatpush.msra.mxu0 0.0
        %1510 = vmatpush.msra.mxu0 %v931
        %1511 = vmatpush.msra.mxu0 %v717
        %1512 = vmatpush.msra.mxu0 %v681
        %1513 = vmatmul.f32.gmra.mxu0 %v846
        %v1514 = vpop.f32.mrf.mxu0
        %v1515 = vadd.f32 %v799, %v1514
        %1516 = vdwg.mxu0
        %1517 = vmatpush.msra.mxu0 0.0
        %1518 = vmatpush.msra.mxu0 0.0
        %1519 = vmatpush.msra.mxu0 0.0
        %1520 = vmatpush.msra.mxu0 0.0
        %1521 = vmatpush.msra.mxu0 0.0
        %1522 = vmatpush.msra.mxu0 0.0
        %1523 = vmatpush.msra.mxu0 0.0
        %1524 = vmatpush.msra.mxu0 0.0
        %1525 = vmatpush.msra.mxu0 0.0
        %1526 = vmatpush.msra.mxu0 0.0
        %1527 = vmatpush.msra.mxu0 0.0
        %1528 = vmatpush.msra.mxu0 0.0
        %1529 = vmatpush.msra.mxu0 0.0
        %1530 = vmatpush.msra.mxu0 %v934
        %1531 = vmatpush.msra.mxu0 %v718
        %1532 = vmatpush.msra.mxu0 %v682
        %1533 = vmatmul.f32.gmra.mxu0 %v846
        %v1534 = vpop.f32.mrf.mxu0
        %v1535 = vadd.f32 %v800, %v1534
        %1536 = vdwg.mxu0
        %1537 = vmatpush.msra.mxu0 0.0
        %1538 = vmatpush.msra.mxu0 0.0
        %1539 = vmatpush.msra.mxu0 0.0
        %1540 = vmatpush.msra.mxu0 0.0
        %1541 = vmatpush.msra.mxu0 0.0
        %1542 = vmatpush.msra.mxu0 0.0
        %1543 = vmatpush.msra.mxu0 0.0
        %1544 = vmatpush.msra.mxu0 0.0
        %1545 = vmatpush.msra.mxu0 0.0
        %1546 = vmatpush.msra.mxu0 0.0
        %1547 = vmatpush.msra.mxu0 0.0
        %1548 = vmatpush.msra.mxu0 0.0
        %1549 = vmatpush.msra.mxu0 0.0
        %1550 = vmatpush.msra.mxu0 %v937
        %1551 = vmatpush.msra.mxu0 %v719
        %1552 = vmatpush.msra.mxu0 %v683
        %1553 = vmatmul.f32.gmra.mxu0 %v846
        %v1554 = vpop.f32.mrf.mxu0
        %v1555 = vadd.f32 %v801, %v1554
        %1556 = vdwg.mxu0
        %1557 = vmatpush.msra.mxu0 0.0
        %1558 = vmatpush.msra.mxu0 0.0
        %1559 = vmatpush.msra.mxu0 0.0
        %1560 = vmatpush.msra.mxu0 0.0
        %1561 = vmatpush.msra.mxu0 0.0
        %1562 = vmatpush.msra.mxu0 0.0
        %1563 = vmatpush.msra.mxu0 0.0
        %1564 = vmatpush.msra.mxu0 0.0
        %1565 = vmatpush.msra.mxu0 0.0
        %1566 = vmatpush.msra.mxu0 0.0
        %1567 = vmatpush.msra.mxu0 0.0
        %1568 = vmatpush.msra.mxu0 0.0
        %1569 = vmatpush.msra.mxu0 0.0
        %1570 = vmatpush.msra.mxu0 %v940
        %1571 = vmatpush.msra.mxu0 %v720
        %1572 = vmatpush.msra.mxu0 %v684
        %1573 = vmatmul.f32.gmra.mxu0 %v846
        %v1574 = vpop.f32.mrf.mxu0
        %v1575 = vadd.f32 %v802, %v1574
        %1576 = vdwg.mxu0
        %1577 = vmatpush.msra.mxu0 0.0
        %1578 = vmatpush.msra.mxu0 0.0
        %1579 = vmatpush.msra.mxu0 0.0
        %1580 = vmatpush.msra.mxu0 0.0
        %1581 = vmatpush.msra.mxu0 0.0
        %1582 = vmatpush.msra.mxu0 0.0
        %1583 = vmatpush.msra.mxu0 0.0
        %1584 = vmatpush.msra.mxu0 0.0
        %1585 = vmatpush.msra.mxu0 0.0
        %1586 = vmatpush.msra.mxu0 0.0
        %1587 = vmatpush.msra.mxu0 0.0
        %1588 = vmatpush.msra.mxu0 0.0
        %1589 = vmatpush.msra.mxu0 0.0
        %1590 = vmatpush.msra.mxu0 %v943
        %1591 = vmatpush.msra.mxu0 %v721
        %1592 = vmatpush.msra.mxu0 %v685
        %1593 = vmatmul.f32.gmra.mxu0 %v846
        %v1594 = vpop.f32.mrf.mxu0
        %v1595 = vadd.f32 %v803, %v1594
        %1596 = vdwg.mxu0
        %1597 = vmatpush.msra.mxu0 0.0
        %1598 = vmatpush.msra.mxu0 0.0
        %1599 = vmatpush.msra.mxu0 0.0
        %1600 = vmatpush.msra.mxu0 0.0
        %1601 = vmatpush.msra.mxu0 0.0
        %1602 = vmatpush.msra.mxu0 0.0
        %1603 = vmatpush.msra.mxu0 0.0
        %1604 = vmatpush.msra.mxu0 0.0
        %1605 = vmatpush.msra.mxu0 0.0
        %1606 = vmatpush.msra.mxu0 0.0
        %1607 = vmatpush.msra.mxu0 0.0
        %1608 = vmatpush.msra.mxu0 0.0
        %1609 = vmatpush.msra.mxu0 0.0
        %1610 = vmatpush.msra.mxu0 %v946
        %1611 = vmatpush.msra.mxu0 %v722
        %1612 = vmatpush.msra.mxu0 %v686
        %1613 = vmatmul.f32.gmra.mxu0 %v846
        %v1614 = vpop.f32.mrf.mxu0
        %v1615 = vadd.f32 %v804, %v1614
        %1616 = vdwg.mxu0
        %1617 = vmatpush.msra.mxu0 0.0
        %1618 = vmatpush.msra.mxu0 0.0
        %1619 = vmatpush.msra.mxu0 0.0
        %1620 = vmatpush.msra.mxu0 0.0
        %1621 = vmatpush.msra.mxu0 0.0
        %1622 = vmatpush.msra.mxu0 0.0
        %1623 = vmatpush.msra.mxu0 0.0
        %1624 = vmatpush.msra.mxu0 0.0
        %1625 = vmatpush.msra.mxu0 0.0
        %1626 = vmatpush.msra.mxu0 0.0
        %1627 = vmatpush.msra.mxu0 0.0
        %1628 = vmatpush.msra.mxu0 0.0
        %1629 = vmatpush.msra.mxu0 0.0
        %1630 = vmatpush.msra.mxu0 %v949
        %1631 = vmatpush.msra.mxu0 %v723
        %1632 = vmatpush.msra.mxu0 %v687
        %1633 = vmatmul.f32.gmra.mxu0 %v846
        %v1634 = vpop.f32.mrf.mxu0
        %v1635 = vadd.f32 %v805, %v1634
        %1636 = vdwg.mxu0
        %1637 = vmatpush.msra.mxu0 0.0
        %1638 = vmatpush.msra.mxu0 0.0
        %1639 = vmatpush.msra.mxu0 0.0
        %1640 = vmatpush.msra.mxu0 0.0
        %1641 = vmatpush.msra.mxu0 0.0
        %1642 = vmatpush.msra.mxu0 0.0
        %1643 = vmatpush.msra.mxu0 0.0
        %1644 = vmatpush.msra.mxu0 0.0
        %1645 = vmatpush.msra.mxu0 0.0
        %1646 = vmatpush.msra.mxu0 0.0
        %1647 = vmatpush.msra.mxu0 0.0
        %1648 = vmatpush.msra.mxu0 0.0
        %1649 = vmatpush.msra.mxu0 0.0
        %1650 = vmatpush.msra.mxu0 %v952
        %1651 = vmatpush.msra.mxu0 %v724
        %1652 = vmatpush.msra.mxu0 %v688
        %1653 = vmatmul.f32.gmra.mxu0 %v846
        %v1654 = vpop.f32.mrf.mxu0
        %v1655 = vadd.f32 %v806, %v1654
        %1656 = vdwg.mxu0
        %1657 = vmatpush.msra.mxu0 0.0
        %1658 = vmatpush.msra.mxu0 0.0
        %1659 = vmatpush.msra.mxu0 0.0
        %1660 = vmatpush.msra.mxu0 0.0
        %1661 = vmatpush.msra.mxu0 0.0
        %1662 = vmatpush.msra.mxu0 0.0
        %1663 = vmatpush.msra.mxu0 0.0
        %1664 = vmatpush.msra.mxu0 0.0
        %1665 = vmatpush.msra.mxu0 0.0
        %1666 = vmatpush.msra.mxu0 0.0
        %1667 = vmatpush.msra.mxu0 0.0
        %1668 = vmatpush.msra.mxu0 0.0
        %1669 = vmatpush.msra.mxu0 0.0
        %1670 = vmatpush.msra.mxu0 %v955
        %1671 = vmatpush.msra.mxu0 %v725
        %1672 = vmatpush.msra.mxu0 %v689
        %1673 = vmatmul.f32.gmra.mxu0 %v846
        %v1674 = vpop.f32.mrf.mxu0
        %v1675 = vadd.f32 %v807, %v1674
        %1676 = vdwg.mxu0
        %v1677 = vld [vmem:[#allocation8] sm:$0xff]
        %v1678 = vld [vmem:[#allocation8 + $0x8] sm:$0xff]
        %v1679 = vld [vmem:[#allocation8 + $0x10] sm:$0xff]
        %v1680 = vld [vmem:[#allocation8 + $0x18] sm:$0xff]
        %v1681 = vld [vmem:[#allocation8 + $0x20] sm:$0xff]
        %v1682 = vld [vmem:[#allocation8 + $0x28] sm:$0xff]
        %v1683 = vld [vmem:[#allocation8 + $0x30] sm:$0xff]
        %v1684 = vld [vmem:[#allocation8 + $0x38] sm:$0xff]
        %v1685 = vld [vmem:[#allocation8 + $0x40] sm:$0xff]
        %v1686 = vld [vmem:[#allocation8 + $0x48] sm:$0xff]
        %v1687 = vld [vmem:[#allocation8 + $0x50] sm:$0xff]
        %v1688 = vld [vmem:[#allocation8 + $0x58] sm:$0xff]
        %v1689 = vld [vmem:[#allocation8 + $0x60] sm:$0xff]
        %v1690 = vld [vmem:[#allocation8 + $0x68] sm:$0xff]
        %v1691 = vld [vmem:[#allocation8 + $0x70] sm:$0xff]
        %v1692 = vld [vmem:[#allocation8 + $0x78] sm:$0xff]
        %v1693 = vld [vmem:[#allocation8 + $0x80] sm:$0xff]
        %v1694 = vld [vmem:[#allocation8 + $0x88] sm:$0xff]
        %v1695 = vld [vmem:[#allocation8 + $0x90] sm:$0xff]
        %v1696 = vld [vmem:[#allocation8 + $0x98] sm:$0xff]
        %v1697 = vld [vmem:[#allocation8 + $0xa0] sm:$0xff]
        %v1698 = vld [vmem:[#allocation8 + $0xa8] sm:$0xff]
        %v1699 = vld [vmem:[#allocation8 + $0xb0] sm:$0xff]
        %v1700 = vld [vmem:[#allocation8 + $0xb8] sm:$0xff]
        %v1701 = vld [vmem:[#allocation8 + $0xc0] sm:$0xff]
        %v1702 = vld [vmem:[#allocation8 + $0xc8] sm:$0xff]
        %v1703 = vld [vmem:[#allocation8 + $0xd0] sm:$0xff]
        %v1704 = vld [vmem:[#allocation8 + $0xd8] sm:$0xff]
        %v1705 = vld [vmem:[#allocation8 + $0xe0] sm:$0xff]
        %v1706 = vld [vmem:[#allocation8 + $0xe8] sm:$0xff]
        %v1707 = vld [vmem:[#allocation8 + $0xf0] sm:$0xff]
        %v1708 = vld [vmem:[#allocation8 + $0xf8] sm:$0xff]
        %v1709 = vld [vmem:[#allocation8 + $0x100] sm:$0xff]
        %v1710 = vld [vmem:[#allocation8 + $0x108] sm:$0xff]
        %v1711 = vld [vmem:[#allocation8 + $0x110] sm:$0xff]
        %v1712 = vld [vmem:[#allocation8 + $0x118] sm:$0xff]
        %v1713 = vld [vmem:[#allocation8 + $0x120] sm:$0xff]
        %v1714 = vld [vmem:[#allocation8 + $0x128] sm:$0xff]
        %v1715 = vld [vmem:[#allocation8 + $0x130] sm:$0xff]
        %v1716 = vld [vmem:[#allocation8 + $0x138] sm:$0xff]
        %v1717 = vld [vmem:[#allocation8 + $0x140] sm:$0xff]
        %v1718 = vld [vmem:[#allocation8 + $0x148] sm:$0xff]
        %v1719 = vld [vmem:[#allocation8 + $0x150] sm:$0xff]
        %v1720 = vld [vmem:[#allocation8 + $0x158] sm:$0xff]
        %v1721 = vld [vmem:[#allocation8 + $0x160] sm:$0xff]
        %v1722 = vld [vmem:[#allocation8 + $0x168] sm:$0xff]
        %v1723 = vld [vmem:[#allocation8 + $0x170] sm:$0xff]
        %v1724 = vld [vmem:[#allocation8 + $0x178] sm:$0xff]
        %v1725 = vld [vmem:[#allocation8 + $0x180] sm:$0xff]
        %v1726 = vld [vmem:[#allocation8 + $0x188] sm:$0xff]
        %v1727 = vld [vmem:[#allocation8 + $0x190] sm:$0xff]
        %v1728 = vld [vmem:[#allocation8 + $0x198] sm:$0xff]
        %v1729 = vld [vmem:[#allocation8 + $0x1a0] sm:$0xff]
        %v1730 = vld [vmem:[#allocation8 + $0x1a8] sm:$0xff]
        %v1731 = vld [vmem:[#allocation8 + $0x1b0] sm:$0xff]
        %v1732 = vld [vmem:[#allocation8 + $0x1b8] sm:$0xff]
        %v1733 = vld [vmem:[#allocation8 + $0x1c0] sm:$0xff]
        %v1734 = vld [vmem:[#allocation8 + $0x1c8] sm:$0xff]
        %v1735 = vld [vmem:[#allocation8 + $0x1d0] sm:$0xff]
        %v1736 = vld [vmem:[#allocation8 + $0x1d8] sm:$0xff]
        %v1737 = vld [vmem:[#allocation8 + $0x1e0] sm:$0xff]
        %v1738 = vld [vmem:[#allocation8 + $0x1e8] sm:$0xff]
        %v1739 = vld [vmem:[#allocation8 + $0x1f0] sm:$0xff]
        %v1740 = vld [vmem:[#allocation8 + $0x1f8] sm:$0xff]
        %1741 = vmatpush.msra.mxu0 %v1737
        %1742 = vmatpush.msra.mxu0 %v1733
        %1743 = vmatpush.msra.mxu0 %v1729
        %1744 = vmatpush.msra.mxu0 %v1725
        %1745 = vmatpush.msra.mxu0 %v1721
        %1746 = vmatpush.msra.mxu0 %v1717
        %1747 = vmatpush.msra.mxu0 %v1713
        %1748 = vmatpush.msra.mxu0 %v1709
        %1749 = vmatpush.msra.mxu0 %v1705
        %1750 = vmatpush.msra.mxu0 %v1701
        %1751 = vmatpush.msra.mxu0 %v1697
        %1752 = vmatpush.msra.mxu0 %v1693
        %1753 = vmatpush.msra.mxu0 %v1689
        %1754 = vmatpush.msra.mxu0 %v1685
        %1755 = vmatpush.msra.mxu0 %v1681
        %1756 = vmatpush.msra.mxu0 %v1677
        %1757 = vmatmul.f32.gmra.mxu0 0.0
        %v1758 = vpop.f32.mrf.mxu0
        %v1759 = vadd.f32 0.0, %v1758
        %1760 = vdwg.mxu0
        %1761 = vmatpush.msra.mxu0 %v1738
        %1762 = vmatpush.msra.mxu0 %v1734
        %1763 = vmatpush.msra.mxu0 %v1730
        %1764 = vmatpush.msra.mxu0 %v1726
        %1765 = vmatpush.msra.mxu0 %v1722
        %1766 = vmatpush.msra.mxu0 %v1718
        %1767 = vmatpush.msra.mxu0 %v1714
        %1768 = vmatpush.msra.mxu0 %v1710
        %1769 = vmatpush.msra.mxu0 %v1706
        %1770 = vmatpush.msra.mxu0 %v1702
        %1771 = vmatpush.msra.mxu0 %v1698
        %1772 = vmatpush.msra.mxu0 %v1694
        %1773 = vmatpush.msra.mxu0 %v1690
        %1774 = vmatpush.msra.mxu0 %v1686
        %1775 = vmatpush.msra.mxu0 %v1682
        %1776 = vmatpush.msra.mxu0 %v1678
        %1777 = vmatmul.f32.gmra.mxu0 0.0
        %v1778 = vpop.f32.mrf.mxu0
        %v1779 = vadd.f32 0.0, %v1778
        %1780 = vdwg.mxu0
        %1781 = vmatpush.msra.mxu0 %v1739
        %1782 = vmatpush.msra.mxu0 %v1735
        %1783 = vmatpush.msra.mxu0 %v1731
        %1784 = vmatpush.msra.mxu0 %v1727
        %1785 = vmatpush.msra.mxu0 %v1723
        %1786 = vmatpush.msra.mxu0 %v1719
        %1787 = vmatpush.msra.mxu0 %v1715
        %1788 = vmatpush.msra.mxu0 %v1711
        %1789 = vmatpush.msra.mxu0 %v1707
        %1790 = vmatpush.msra.mxu0 %v1703
        %1791 = vmatpush.msra.mxu0 %v1699
        %1792 = vmatpush.msra.mxu0 %v1695
        %1793 = vmatpush.msra.mxu0 %v1691
        %1794 = vmatpush.msra.mxu0 %v1687
        %1795 = vmatpush.msra.mxu0 %v1683
        %1796 = vmatpush.msra.mxu0 %v1679
        %1797 = vmatmul.f32.gmra.mxu0 0.0
        %v1798 = vpop.f32.mrf.mxu0
        %v1799 = vadd.f32 0.0, %v1798
        %1800 = vdwg.mxu0
        %1801 = vmatpush.msra.mxu0 %v1740
        %1802 = vmatpush.msra.mxu0 %v1736
        %1803 = vmatpush.msra.mxu0 %v1732
        %1804 = vmatpush.msra.mxu0 %v1728
        %1805 = vmatpush.msra.mxu0 %v1724
        %1806 = vmatpush.msra.mxu0 %v1720
        %1807 = vmatpush.msra.mxu0 %v1716
        %1808 = vmatpush.msra.mxu0 %v1712
        %1809 = vmatpush.msra.mxu0 %v1708
        %1810 = vmatpush.msra.mxu0 %v1704
        %1811 = vmatpush.msra.mxu0 %v1700
        %1812 = vmatpush.msra.mxu0 %v1696
        %1813 = vmatpush.msra.mxu0 %v1692
        %1814 = vmatpush.msra.mxu0 %v1688
        %1815 = vmatpush.msra.mxu0 %v1684
        %1816 = vmatpush.msra.mxu0 %v1680
        %1817 = vmatmul.f32.gmra.mxu0 0.0
        %v1818 = vpop.f32.mrf.mxu0
        %v1819 = vadd.f32 0.0, %v1818
        %1820 = vdwg.mxu0
        %v1821 = vadd.f32 %v975, %v1759
        %v1822 = vadd.f32 %v995, %v1779
        %v1823 = vadd.f32 %v1015, %v1799
        %v1824 = vadd.f32 %v1035, %v1819
        %v1825 = vxor.u32 %v1821, 2147483648
        %v1826 = vmul.f32 %v1825, 1.442695
        %v1827 = vpow.pop %v1826
        %v1828 = vadd.f32 %v1827, 1.0
        %v1829 = vrcp.pop %v1828
        %v1830 = vmul.f32 %v1828, %v1829
        %v1831 = vsub.f32 1.0, %v1830
        %v1832 = vmul.f32 %v1829, %v1831
        %v1833 = vadd.f32 %v1829, %v1832
        %vm1834 = vweird.f32 %v1828
        %vm1835 = vweird.f32 %v1829
        %vm1836 = vmor %vm1834, %vm1835
        %v1837 = vsel %vm1836, %v1829, %v1833
        %v1838 = vand.u32 2147483647, %v1828
        %vm1839 = vcmp.eq.f32.partialorder %v1838, 8.507059e+37
        %v1840 = vand.u32 %v1828, 2147483648
        %v1841 = vor.u32 1.1754944e-38, %v1840
        %v1842 = vsel %vm1839, %v1841, %v1837
        %v1843 = vmul.f32 1.0, %v1842
        %v1844 = vxor.u32 %v1822, 2147483648
        %v1845 = vmul.f32 %v1844, 1.442695
        %v1846 = vpow.pop %v1845
        %v1847 = vadd.f32 %v1846, 1.0
        %v1848 = vrcp.pop %v1847
        %v1849 = vmul.f32 %v1847, %v1848
        %v1850 = vsub.f32 1.0, %v1849
        %v1851 = vmul.f32 %v1848, %v1850
        %v1852 = vadd.f32 %v1848, %v1851
        %vm1853 = vweird.f32 %v1847
        %vm1854 = vweird.f32 %v1848
        %vm1855 = vmor %vm1853, %vm1854
        %v1856 = vsel %vm1855, %v1848, %v1852
        %v1857 = vand.u32 2147483647, %v1847
        %vm1858 = vcmp.eq.f32.partialorder %v1857, 8.507059e+37
        %v1859 = vand.u32 %v1847, 2147483648
        %v1860 = vor.u32 1.1754944e-38, %v1859
        %v1861 = vsel %vm1858, %v1860, %v1856
        %v1862 = vmul.f32 1.0, %v1861
        %v1863 = vtanh.pop %v1823
        %v1864 = vxor.u32 %v1824, 2147483648
        %v1865 = vmul.f32 %v1864, 1.442695
        %v1866 = vpow.pop %v1865
        %v1867 = vadd.f32 %v1866, 1.0
        %v1868 = vrcp.pop %v1867
        %v1869 = vmul.f32 %v1867, %v1868
        %v1870 = vsub.f32 1.0, %v1869
        %v1871 = vmul.f32 %v1868, %v1870
        %v1872 = vadd.f32 %v1868, %v1871
        %vm1873 = vweird.f32 %v1867
        %vm1874 = vweird.f32 %v1868
        %vm1875 = vmor %vm1873, %vm1874
        %v1876 = vsel %vm1875, %v1868, %v1872
        %v1877 = vand.u32 2147483647, %v1867
        %vm1878 = vcmp.eq.f32.partialorder %v1877, 8.507059e+37
        %v1879 = vand.u32 %v1867, 2147483648
        %v1880 = vor.u32 1.1754944e-38, %v1879
        %v1881 = vsel %vm1878, %v1880, %v1876
        %v1882 = vmul.f32 1.0, %v1881
        %v1883 = vmul.f32 %v1862, 0.0
        %v1884 = vmul.f32 %v1843, %v1863
        %v1885 = vadd.f32 %v1883, %v1884
        %v1886 = vtanh.pop %v1885
        %v1887 = vmul.f32 %v1882, %v1886
        %1888 = vmatpush.msra.mxu0 %v1737
        %1889 = vmatpush.msra.mxu0 %v1733
        %1890 = vmatpush.msra.mxu0 %v1729
        %1891 = vmatpush.msra.mxu0 %v1725
        %1892 = vmatpush.msra.mxu0 %v1721
        %1893 = vmatpush.msra.mxu0 %v1717
        %1894 = vmatpush.msra.mxu0 %v1713
        %1895 = vmatpush.msra.mxu0 %v1709
        %1896 = vmatpush.msra.mxu0 %v1705
        %1897 = vmatpush.msra.mxu0 %v1701
        %1898 = vmatpush.msra.mxu0 %v1697
        %1899 = vmatpush.msra.mxu0 %v1693
        %1900 = vmatpush.msra.mxu0 %v1689
        %1901 = vmatpush.msra.mxu0 %v1685
        %1902 = vmatpush.msra.mxu0 %v1681
        %1903 = vmatpush.msra.mxu0 %v1677
        %1904 = vmatmul.f32.gmra.mxu0 %v1887
        %v1905 = vpop.f32.mrf.mxu0
        %v1906 = vadd.f32 0.0, %v1905
        %1907 = vdwg.mxu0
        %1908 = vmatpush.msra.mxu0 %v1738
        %1909 = vmatpush.msra.mxu0 %v1734
        %1910 = vmatpush.msra.mxu0 %v1730
        %1911 = vmatpush.msra.mxu0 %v1726
        %1912 = vmatpush.msra.mxu0 %v1722
        %1913 = vmatpush.msra.mxu0 %v1718
        %1914 = vmatpush.msra.mxu0 %v1714
        %1915 = vmatpush.msra.mxu0 %v1710
        %1916 = vmatpush.msra.mxu0 %v1706
        %1917 = vmatpush.msra.mxu0 %v1702
        %1918 = vmatpush.msra.mxu0 %v1698
        %1919 = vmatpush.msra.mxu0 %v1694
        %1920 = vmatpush.msra.mxu0 %v1690
        %1921 = vmatpush.msra.mxu0 %v1686
        %1922 = vmatpush.msra.mxu0 %v1682
        %1923 = vmatpush.msra.mxu0 %v1678
        %1924 = vmatmul.f32.gmra.mxu0 %v1887
        %v1925 = vpop.f32.mrf.mxu0
        %v1926 = vadd.f32 0.0, %v1925
        %1927 = vdwg.mxu0
        %1928 = vmatpush.msra.mxu0 %v1739
        %1929 = vmatpush.msra.mxu0 %v1735
        %1930 = vmatpush.msra.mxu0 %v1731
        %1931 = vmatpush.msra.mxu0 %v1727
        %1932 = vmatpush.msra.mxu0 %v1723
        %1933 = vmatpush.msra.mxu0 %v1719
        %1934 = vmatpush.msra.mxu0 %v1715
        %1935 = vmatpush.msra.mxu0 %v1711
        %1936 = vmatpush.msra.mxu0 %v1707
        %1937 = vmatpush.msra.mxu0 %v1703
        %1938 = vmatpush.msra.mxu0 %v1699
        %1939 = vmatpush.msra.mxu0 %v1695
        %1940 = vmatpush.msra.mxu0 %v1691
        %1941 = vmatpush.msra.mxu0 %v1687
        %1942 = vmatpush.msra.mxu0 %v1683
        %1943 = vmatpush.msra.mxu0 %v1679
        %1944 = vmatmul.f32.gmra.mxu0 %v1887
        %v1945 = vpop.f32.mrf.mxu0
        %v1946 = vadd.f32 0.0, %v1945
        %1947 = vdwg.mxu0
        %1948 = vmatpush.msra.mxu0 %v1740
        %1949 = vmatpush.msra.mxu0 %v1736
        %1950 = vmatpush.msra.mxu0 %v1732
        %1951 = vmatpush.msra.mxu0 %v1728
        %1952 = vmatpush.msra.mxu0 %v1724
        %1953 = vmatpush.msra.mxu0 %v1720
        %1954 = vmatpush.msra.mxu0 %v1716
        %1955 = vmatpush.msra.mxu0 %v1712
        %1956 = vmatpush.msra.mxu0 %v1708
        %1957 = vmatpush.msra.mxu0 %v1704
        %1958 = vmatpush.msra.mxu0 %v1700
        %1959 = vmatpush.msra.mxu0 %v1696
        %1960 = vmatpush.msra.mxu0 %v1692
        %1961 = vmatpush.msra.mxu0 %v1688
        %1962 = vmatpush.msra.mxu0 %v1684
        %1963 = vmatpush.msra.mxu0 %v1680
        %1964 = vmatmul.f32.gmra.mxu0 %v1887
        %v1965 = vpop.f32.mrf.mxu0
        %v1966 = vadd.f32 0.0, %v1965
        %1967 = vdwg.mxu0
        %v1968 = vadd.f32 %v1055, %v1906
        %v1969 = vadd.f32 %v1075, %v1926
        %v1970 = vadd.f32 %v1095, %v1946
        %v1971 = vadd.f32 %v1115, %v1966
        %v1972 = vxor.u32 %v1968, 2147483648
        %v1973 = vmul.f32 %v1972, 1.442695
        %v1974 = vpow.pop %v1973
        %v1975 = vadd.f32 %v1974, 1.0
        %v1976 = vrcp.pop %v1975
        %v1977 = vmul.f32 %v1975, %v1976
        %v1978 = vsub.f32 1.0, %v1977
        %v1979 = vmul.f32 %v1976, %v1978
        %v1980 = vadd.f32 %v1976, %v1979
        %vm1981 = vweird.f32 %v1975
        %vm1982 = vweird.f32 %v1976
        %vm1983 = vmor %vm1981, %vm1982
        %v1984 = vsel %vm1983, %v1976, %v1980
        %v1985 = vand.u32 2147483647, %v1975
        %vm1986 = vcmp.eq.f32.partialorder %v1985, 8.507059e+37
        %v1987 = vand.u32 %v1975, 2147483648
        %v1988 = vor.u32 1.1754944e-38, %v1987
        %v1989 = vsel %vm1986, %v1988, %v1984
        %v1990 = vmul.f32 1.0, %v1989
        %v1991 = vxor.u32 %v1969, 2147483648
        %v1992 = vmul.f32 %v1991, 1.442695
        %v1993 = vpow.pop %v1992
        %v1994 = vadd.f32 %v1993, 1.0
        %v1995 = vrcp.pop %v1994
        %v1996 = vmul.f32 %v1994, %v1995
        %v1997 = vsub.f32 1.0, %v1996
        %v1998 = vmul.f32 %v1995, %v1997
        %v1999 = vadd.f32 %v1995, %v1998
        %vm2000 = vweird.f32 %v1994
        %vm2001 = vweird.f32 %v1995
        %vm2002 = vmor %vm2000, %vm2001
        %v2003 = vsel %vm2002, %v1995, %v1999
        %v2004 = vand.u32 2147483647, %v1994
        %vm2005 = vcmp.eq.f32.partialorder %v2004, 8.507059e+37
        %v2006 = vand.u32 %v1994, 2147483648
        %v2007 = vor.u32 1.1754944e-38, %v2006
        %v2008 = vsel %vm2005, %v2007, %v2003
        %v2009 = vmul.f32 1.0, %v2008
        %v2010 = vtanh.pop %v1970
        %v2011 = vxor.u32 %v1971, 2147483648
        %v2012 = vmul.f32 %v2011, 1.442695
        %v2013 = vpow.pop %v2012
        %v2014 = vadd.f32 %v2013, 1.0
        %v2015 = vrcp.pop %v2014
        %v2016 = vmul.f32 %v2014, %v2015
        %v2017 = vsub.f32 1.0, %v2016
        %v2018 = vmul.f32 %v2015, %v2017
        %v2019 = vadd.f32 %v2015, %v2018
        %vm2020 = vweird.f32 %v2014
        %vm2021 = vweird.f32 %v2015
        %vm2022 = vmor %vm2020, %vm2021
        %v2023 = vsel %vm2022, %v2015, %v2019
        %v2024 = vand.u32 2147483647, %v2014
        %vm2025 = vcmp.eq.f32.partialorder %v2024, 8.507059e+37
        %v2026 = vand.u32 %v2014, 2147483648
        %v2027 = vor.u32 1.1754944e-38, %v2026
        %v2028 = vsel %vm2025, %v2027, %v2023
        %v2029 = vmul.f32 1.0, %v2028
        %v2030 = vmul.f32 %v2009, %v1885
        %v2031 = vmul.f32 %v1990, %v2010
        %v2032 = vadd.f32 %v2030, %v2031
        %v2033 = vtanh.pop %v2032
        %v2034 = vmul.f32 %v2029, %v2033
        %2035 = vmatpush.msra.mxu0 %v1737
        %2036 = vmatpush.msra.mxu0 %v1733
        %2037 = vmatpush.msra.mxu0 %v1729
        %2038 = vmatpush.msra.mxu0 %v1725
        %2039 = vmatpush.msra.mxu0 %v1721
        %2040 = vmatpush.msra.mxu0 %v1717
        %2041 = vmatpush.msra.mxu0 %v1713
        %2042 = vmatpush.msra.mxu0 %v1709
        %2043 = vmatpush.msra.mxu0 %v1705
        %2044 = vmatpush.msra.mxu0 %v1701
        %2045 = vmatpush.msra.mxu0 %v1697
        %2046 = vmatpush.msra.mxu0 %v1693
        %2047 = vmatpush.msra.mxu0 %v1689
        %2048 = vmatpush.msra.mxu0 %v1685
        %2049 = vmatpush.msra.mxu0 %v1681
        %2050 = vmatpush.msra.mxu0 %v1677
        %2051 = vmatmul.f32.gmra.mxu0 %v2034
        %v2052 = vpop.f32.mrf.mxu0
        %v2053 = vadd.f32 0.0, %v2052
        %2054 = vdwg.mxu0
        %2055 = vmatpush.msra.mxu0 %v1738
        %2056 = vmatpush.msra.mxu0 %v1734
        %2057 = vmatpush.msra.mxu0 %v1730
        %2058 = vmatpush.msra.mxu0 %v1726
        %2059 = vmatpush.msra.mxu0 %v1722
        %2060 = vmatpush.msra.mxu0 %v1718
        %2061 = vmatpush.msra.mxu0 %v1714
        %2062 = vmatpush.msra.mxu0 %v1710
        %2063 = vmatpush.msra.mxu0 %v1706
        %2064 = vmatpush.msra.mxu0 %v1702
        %2065 = vmatpush.msra.mxu0 %v1698
        %2066 = vmatpush.msra.mxu0 %v1694
        %2067 = vmatpush.msra.mxu0 %v1690
        %2068 = vmatpush.msra.mxu0 %v1686
        %2069 = vmatpush.msra.mxu0 %v1682
        %2070 = vmatpush.msra.mxu0 %v1678
        %2071 = vmatmul.f32.gmra.mxu0 %v2034
        %v2072 = vpop.f32.mrf.mxu0
        %v2073 = vadd.f32 0.0, %v2072
        %2074 = vdwg.mxu0
        %2075 = vmatpush.msra.mxu0 %v1739
        %2076 = vmatpush.msra.mxu0 %v1735
        %2077 = vmatpush.msra.mxu0 %v1731
        %2078 = vmatpush.msra.mxu0 %v1727
        %2079 = vmatpush.msra.mxu0 %v1723
        %2080 = vmatpush.msra.mxu0 %v1719
        %2081 = vmatpush.msra.mxu0 %v1715
        %2082 = vmatpush.msra.mxu0 %v1711
        %2083 = vmatpush.msra.mxu0 %v1707
        %2084 = vmatpush.msra.mxu0 %v1703
        %2085 = vmatpush.msra.mxu0 %v1699
        %2086 = vmatpush.msra.mxu0 %v1695
        %2087 = vmatpush.msra.mxu0 %v1691
        %2088 = vmatpush.msra.mxu0 %v1687
        %2089 = vmatpush.msra.mxu0 %v1683
        %2090 = vmatpush.msra.mxu0 %v1679
        %2091 = vmatmul.f32.gmra.mxu0 %v2034
        %v2092 = vpop.f32.mrf.mxu0
        %v2093 = vadd.f32 0.0, %v2092
        %2094 = vdwg.mxu0
        %2095 = vmatpush.msra.mxu0 %v1740
        %2096 = vmatpush.msra.mxu0 %v1736
        %2097 = vmatpush.msra.mxu0 %v1732
        %2098 = vmatpush.msra.mxu0 %v1728
        %2099 = vmatpush.msra.mxu0 %v1724
        %2100 = vmatpush.msra.mxu0 %v1720
        %2101 = vmatpush.msra.mxu0 %v1716
        %2102 = vmatpush.msra.mxu0 %v1712
        %2103 = vmatpush.msra.mxu0 %v1708
        %2104 = vmatpush.msra.mxu0 %v1704
        %2105 = vmatpush.msra.mxu0 %v1700
        %2106 = vmatpush.msra.mxu0 %v1696
        %2107 = vmatpush.msra.mxu0 %v1692
        %2108 = vmatpush.msra.mxu0 %v1688
        %2109 = vmatpush.msra.mxu0 %v1684
        %2110 = vmatpush.msra.mxu0 %v1680
        %2111 = vmatmul.f32.gmra.mxu0 %v2034
        %v2112 = vpop.f32.mrf.mxu0
        %v2113 = vadd.f32 0.0, %v2112
        %2114 = vdwg.mxu0
        %v2115 = vadd.f32 %v1135, %v2053
        %v2116 = vadd.f32 %v1155, %v2073
        %v2117 = vadd.f32 %v1175, %v2093
        %v2118 = vadd.f32 %v1195, %v2113
        %v2119 = vxor.u32 %v2115, 2147483648
        %v2120 = vmul.f32 %v2119, 1.442695
        %v2121 = vpow.pop %v2120
        %v2122 = vadd.f32 %v2121, 1.0
        %v2123 = vrcp.pop %v2122
        %v2124 = vmul.f32 %v2122, %v2123
        %v2125 = vsub.f32 1.0, %v2124
        %v2126 = vmul.f32 %v2123, %v2125
        %v2127 = vadd.f32 %v2123, %v2126
        %vm2128 = vweird.f32 %v2122
        %vm2129 = vweird.f32 %v2123
        %vm2130 = vmor %vm2128, %vm2129
        %v2131 = vsel %vm2130, %v2123, %v2127
        %v2132 = vand.u32 2147483647, %v2122
        %vm2133 = vcmp.eq.f32.partialorder %v2132, 8.507059e+37
        %v2134 = vand.u32 %v2122, 2147483648
        %v2135 = vor.u32 1.1754944e-38, %v2134
        %v2136 = vsel %vm2133, %v2135, %v2131
        %v2137 = vmul.f32 1.0, %v2136
        %v2138 = vxor.u32 %v2116, 2147483648
        %v2139 = vmul.f32 %v2138, 1.442695
        %v2140 = vpow.pop %v2139
        %v2141 = vadd.f32 %v2140, 1.0
        %v2142 = vrcp.pop %v2141
        %v2143 = vmul.f32 %v2141, %v2142
        %v2144 = vsub.f32 1.0, %v2143
        %v2145 = vmul.f32 %v2142, %v2144
        %v2146 = vadd.f32 %v2142, %v2145
        %vm2147 = vweird.f32 %v2141
        %vm2148 = vweird.f32 %v2142
        %vm2149 = vmor %vm2147, %vm2148
        %v2150 = vsel %vm2149, %v2142, %v2146
        %v2151 = vand.u32 2147483647, %v2141
        %vm2152 = vcmp.eq.f32.partialorder %v2151, 8.507059e+37
        %v2153 = vand.u32 %v2141, 2147483648
        %v2154 = vor.u32 1.1754944e-38, %v2153
        %v2155 = vsel %vm2152, %v2154, %v2150
        %v2156 = vmul.f32 1.0, %v2155
        %v2157 = vtanh.pop %v2117
        %v2158 = vxor.u32 %v2118, 2147483648
        %v2159 = vmul.f32 %v2158, 1.442695
        %v2160 = vpow.pop %v2159
        %v2161 = vadd.f32 %v2160, 1.0
        %v2162 = vrcp.pop %v2161
        %v2163 = vmul.f32 %v2161, %v2162
        %v2164 = vsub.f32 1.0, %v2163
        %v2165 = vmul.f32 %v2162, %v2164
        %v2166 = vadd.f32 %v2162, %v2165
        %vm2167 = vweird.f32 %v2161
        %vm2168 = vweird.f32 %v2162
        %vm2169 = vmor %vm2167, %vm2168
        %v2170 = vsel %vm2169, %v2162, %v2166
        %v2171 = vand.u32 2147483647, %v2161
        %vm2172 = vcmp.eq.f32.partialorder %v2171, 8.507059e+37
        %v2173 = vand.u32 %v2161, 2147483648
        %v2174 = vor.u32 1.1754944e-38, %v2173
        %v2175 = vsel %vm2172, %v2174, %v2170
        %v2176 = vmul.f32 1.0, %v2175
        %v2177 = vmul.f32 %v2156, %v2032
        %v2178 = vmul.f32 %v2137, %v2157
        %v2179 = vadd.f32 %v2177, %v2178
        %v2180 = vtanh.pop %v2179
        %v2181 = vmul.f32 %v2176, %v2180
        %2182 = vmatpush.msra.mxu0 %v1737
        %2183 = vmatpush.msra.mxu0 %v1733
        %2184 = vmatpush.msra.mxu0 %v1729
        %2185 = vmatpush.msra.mxu0 %v1725
        %2186 = vmatpush.msra.mxu0 %v1721
        %2187 = vmatpush.msra.mxu0 %v1717
        %2188 = vmatpush.msra.mxu0 %v1713
        %2189 = vmatpush.msra.mxu0 %v1709
        %2190 = vmatpush.msra.mxu0 %v1705
        %2191 = vmatpush.msra.mxu0 %v1701
        %2192 = vmatpush.msra.mxu0 %v1697
        %2193 = vmatpush.msra.mxu0 %v1693
        %2194 = vmatpush.msra.mxu0 %v1689
        %2195 = vmatpush.msra.mxu0 %v1685
        %2196 = vmatpush.msra.mxu0 %v1681
        %2197 = vmatpush.msra.mxu0 %v1677
        %2198 = vmatmul.f32.gmra.mxu0 %v2181
        %v2199 = vpop.f32.mrf.mxu0
        %v2200 = vadd.f32 0.0, %v2199
        %2201 = vdwg.mxu0
        %2202 = vmatpush.msra.mxu0 %v1738
        %2203 = vmatpush.msra.mxu0 %v1734
        %2204 = vmatpush.msra.mxu0 %v1730
        %2205 = vmatpush.msra.mxu0 %v1726
        %2206 = vmatpush.msra.mxu0 %v1722
        %2207 = vmatpush.msra.mxu0 %v1718
        %2208 = vmatpush.msra.mxu0 %v1714
        %2209 = vmatpush.msra.mxu0 %v1710
        %2210 = vmatpush.msra.mxu0 %v1706
        %2211 = vmatpush.msra.mxu0 %v1702
        %2212 = vmatpush.msra.mxu0 %v1698
        %2213 = vmatpush.msra.mxu0 %v1694
        %2214 = vmatpush.msra.mxu0 %v1690
        %2215 = vmatpush.msra.mxu0 %v1686
        %2216 = vmatpush.msra.mxu0 %v1682
        %2217 = vmatpush.msra.mxu0 %v1678
        %2218 = vmatmul.f32.gmra.mxu0 %v2181
        %v2219 = vpop.f32.mrf.mxu0
        %v2220 = vadd.f32 0.0, %v2219
        %2221 = vdwg.mxu0
        %2222 = vmatpush.msra.mxu0 %v1739
        %2223 = vmatpush.msra.mxu0 %v1735
        %2224 = vmatpush.msra.mxu0 %v1731
        %2225 = vmatpush.msra.mxu0 %v1727
        %2226 = vmatpush.msra.mxu0 %v1723
        %2227 = vmatpush.msra.mxu0 %v1719
        %2228 = vmatpush.msra.mxu0 %v1715
        %2229 = vmatpush.msra.mxu0 %v1711
        %2230 = vmatpush.msra.mxu0 %v1707
        %2231 = vmatpush.msra.mxu0 %v1703
        %2232 = vmatpush.msra.mxu0 %v1699
        %2233 = vmatpush.msra.mxu0 %v1695
        %2234 = vmatpush.msra.mxu0 %v1691
        %2235 = vmatpush.msra.mxu0 %v1687
        %2236 = vmatpush.msra.mxu0 %v1683
        %2237 = vmatpush.msra.mxu0 %v1679
        %2238 = vmatmul.f32.gmra.mxu0 %v2181
        %v2239 = vpop.f32.mrf.mxu0
        %v2240 = vadd.f32 0.0, %v2239
        %2241 = vdwg.mxu0
        %2242 = vmatpush.msra.mxu0 %v1740
        %2243 = vmatpush.msra.mxu0 %v1736
        %2244 = vmatpush.msra.mxu0 %v1732
        %2245 = vmatpush.msra.mxu0 %v1728
        %2246 = vmatpush.msra.mxu0 %v1724
        %2247 = vmatpush.msra.mxu0 %v1720
        %2248 = vmatpush.msra.mxu0 %v1716
        %2249 = vmatpush.msra.mxu0 %v1712
        %2250 = vmatpush.msra.mxu0 %v1708
        %2251 = vmatpush.msra.mxu0 %v1704
        %2252 = vmatpush.msra.mxu0 %v1700
        %2253 = vmatpush.msra.mxu0 %v1696
        %2254 = vmatpush.msra.mxu0 %v1692
        %2255 = vmatpush.msra.mxu0 %v1688
        %2256 = vmatpush.msra.mxu0 %v1684
        %2257 = vmatpush.msra.mxu0 %v1680
        %2258 = vmatmul.f32.gmra.mxu0 %v2181
        %v2259 = vpop.f32.mrf.mxu0
        %v2260 = vadd.f32 0.0, %v2259
        %2261 = vdwg.mxu0
        %v2262 = vadd.f32 %v1215, %v2200
        %v2263 = vadd.f32 %v1235, %v2220
        %v2264 = vadd.f32 %v1255, %v2240
        %v2265 = vadd.f32 %v1275, %v2260
        %v2266 = vxor.u32 %v2262, 2147483648
        %v2267 = vmul.f32 %v2266, 1.442695
        %v2268 = vpow.pop %v2267
        %v2269 = vadd.f32 %v2268, 1.0
        %v2270 = vrcp.pop %v2269
        %v2271 = vmul.f32 %v2269, %v2270
        %v2272 = vsub.f32 1.0, %v2271
        %v2273 = vmul.f32 %v2270, %v2272
        %v2274 = vadd.f32 %v2270, %v2273
        %vm2275 = vweird.f32 %v2269
        %vm2276 = vweird.f32 %v2270
        %vm2277 = vmor %vm2275, %vm2276
        %v2278 = vsel %vm2277, %v2270, %v2274
        %v2279 = vand.u32 2147483647, %v2269
        %vm2280 = vcmp.eq.f32.partialorder %v2279, 8.507059e+37
        %v2281 = vand.u32 %v2269, 2147483648
        %v2282 = vor.u32 1.1754944e-38, %v2281
        %v2283 = vsel %vm2280, %v2282, %v2278
        %v2284 = vmul.f32 1.0, %v2283
        %v2285 = vxor.u32 %v2263, 2147483648
        %v2286 = vmul.f32 %v2285, 1.442695
        %v2287 = vpow.pop %v2286
        %v2288 = vadd.f32 %v2287, 1.0
        %v2289 = vrcp.pop %v2288
        %v2290 = vmul.f32 %v2288, %v2289
        %v2291 = vsub.f32 1.0, %v2290
        %v2292 = vmul.f32 %v2289, %v2291
        %v2293 = vadd.f32 %v2289, %v2292
        %vm2294 = vweird.f32 %v2288
        %vm2295 = vweird.f32 %v2289
        %vm2296 = vmor %vm2294, %vm2295
        %v2297 = vsel %vm2296, %v2289, %v2293
        %v2298 = vand.u32 2147483647, %v2288
        %vm2299 = vcmp.eq.f32.partialorder %v2298, 8.507059e+37
        %v2300 = vand.u32 %v2288, 2147483648
        %v2301 = vor.u32 1.1754944e-38, %v2300
        %v2302 = vsel %vm2299, %v2301, %v2297
        %v2303 = vmul.f32 1.0, %v2302
        %v2304 = vtanh.pop %v2264
        %v2305 = vxor.u32 %v2265, 2147483648
        %v2306 = vmul.f32 %v2305, 1.442695
        %v2307 = vpow.pop %v2306
        %v2308 = vadd.f32 %v2307, 1.0
        %v2309 = vrcp.pop %v2308
        %v2310 = vmul.f32 %v2308, %v2309
        %v2311 = vsub.f32 1.0, %v2310
        %v2312 = vmul.f32 %v2309, %v2311
        %v2313 = vadd.f32 %v2309, %v2312
        %vm2314 = vweird.f32 %v2308
        %vm2315 = vweird.f32 %v2309
        %vm2316 = vmor %vm2314, %vm2315
        %v2317 = vsel %vm2316, %v2309, %v2313
        %v2318 = vand.u32 2147483647, %v2308
        %vm2319 = vcmp.eq.f32.partialorder %v2318, 8.507059e+37
        %v2320 = vand.u32 %v2308, 2147483648
        %v2321 = vor.u32 1.1754944e-38, %v2320
        %v2322 = vsel %vm2319, %v2321, %v2317
        %v2323 = vmul.f32 1.0, %v2322
        %v2324 = vmul.f32 %v2303, %v2179
        %v2325 = vmul.f32 %v2284, %v2304
        %v2326 = vadd.f32 %v2324, %v2325
        %v2327 = vtanh.pop %v2326
        %v2328 = vmul.f32 %v2323, %v2327
        %2329 = vmatpush.msra.mxu0 %v1737
        %2330 = vmatpush.msra.mxu0 %v1733
        %2331 = vmatpush.msra.mxu0 %v1729
        %2332 = vmatpush.msra.mxu0 %v1725
        %2333 = vmatpush.msra.mxu0 %v1721
        %2334 = vmatpush.msra.mxu0 %v1717
        %2335 = vmatpush.msra.mxu0 %v1713
        %2336 = vmatpush.msra.mxu0 %v1709
        %2337 = vmatpush.msra.mxu0 %v1705
        %2338 = vmatpush.msra.mxu0 %v1701
        %2339 = vmatpush.msra.mxu0 %v1697
        %2340 = vmatpush.msra.mxu0 %v1693
        %2341 = vmatpush.msra.mxu0 %v1689
        %2342 = vmatpush.msra.mxu0 %v1685
        %2343 = vmatpush.msra.mxu0 %v1681
        %2344 = vmatpush.msra.mxu0 %v1677
        %2345 = vmatmul.f32.gmra.mxu0 %v2328
        %v2346 = vpop.f32.mrf.mxu0
        %v2347 = vadd.f32 0.0, %v2346
        %2348 = vdwg.mxu0
        %2349 = vmatpush.msra.mxu0 %v1738
        %2350 = vmatpush.msra.mxu0 %v1734
        %2351 = vmatpush.msra.mxu0 %v1730
        %2352 = vmatpush.msra.mxu0 %v1726
        %2353 = vmatpush.msra.mxu0 %v1722
        %2354 = vmatpush.msra.mxu0 %v1718
        %2355 = vmatpush.msra.mxu0 %v1714
        %2356 = vmatpush.msra.mxu0 %v1710
        %2357 = vmatpush.msra.mxu0 %v1706
        %2358 = vmatpush.msra.mxu0 %v1702
        %2359 = vmatpush.msra.mxu0 %v1698
        %2360 = vmatpush.msra.mxu0 %v1694
        %2361 = vmatpush.msra.mxu0 %v1690
        %2362 = vmatpush.msra.mxu0 %v1686
        %2363 = vmatpush.msra.mxu0 %v1682
        %2364 = vmatpush.msra.mxu0 %v1678
        %2365 = vmatmul.f32.gmra.mxu0 %v2328
        %v2366 = vpop.f32.mrf.mxu0
        %v2367 = vadd.f32 0.0, %v2366
        %2368 = vdwg.mxu0
        %2369 = vmatpush.msra.mxu0 %v1739
        %2370 = vmatpush.msra.mxu0 %v1735
        %2371 = vmatpush.msra.mxu0 %v1731
        %2372 = vmatpush.msra.mxu0 %v1727
        %2373 = vmatpush.msra.mxu0 %v1723
        %2374 = vmatpush.msra.mxu0 %v1719
        %2375 = vmatpush.msra.mxu0 %v1715
        %2376 = vmatpush.msra.mxu0 %v1711
        %2377 = vmatpush.msra.mxu0 %v1707
        %2378 = vmatpush.msra.mxu0 %v1703
        %2379 = vmatpush.msra.mxu0 %v1699
        %2380 = vmatpush.msra.mxu0 %v1695
        %2381 = vmatpush.msra.mxu0 %v1691
        %2382 = vmatpush.msra.mxu0 %v1687
        %2383 = vmatpush.msra.mxu0 %v1683
        %2384 = vmatpush.msra.mxu0 %v1679
        %2385 = vmatmul.f32.gmra.mxu0 %v2328
        %v2386 = vpop.f32.mrf.mxu0
        %v2387 = vadd.f32 0.0, %v2386
        %2388 = vdwg.mxu0
        %2389 = vmatpush.msra.mxu0 %v1740
        %2390 = vmatpush.msra.mxu0 %v1736
        %2391 = vmatpush.msra.mxu0 %v1732
        %2392 = vmatpush.msra.mxu0 %v1728
        %2393 = vmatpush.msra.mxu0 %v1724
        %2394 = vmatpush.msra.mxu0 %v1720
        %2395 = vmatpush.msra.mxu0 %v1716
        %2396 = vmatpush.msra.mxu0 %v1712
        %2397 = vmatpush.msra.mxu0 %v1708
        %2398 = vmatpush.msra.mxu0 %v1704
        %2399 = vmatpush.msra.mxu0 %v1700
        %2400 = vmatpush.msra.mxu0 %v1696
        %2401 = vmatpush.msra.mxu0 %v1692
        %2402 = vmatpush.msra.mxu0 %v1688
        %2403 = vmatpush.msra.mxu0 %v1684
        %2404 = vmatpush.msra.mxu0 %v1680
        %2405 = vmatmul.f32.gmra.mxu0 %v2328
        %v2406 = vpop.f32.mrf.mxu0
        %v2407 = vadd.f32 0.0, %v2406
        %2408 = vdwg.mxu0
        %v2409 = vadd.f32 %v1295, %v2347
        %v2410 = vadd.f32 %v1315, %v2367
        %v2411 = vadd.f32 %v1335, %v2387
        %v2412 = vadd.f32 %v1355, %v2407
        %v2413 = vxor.u32 %v2409, 2147483648
        %v2414 = vmul.f32 %v2413, 1.442695
        %v2415 = vpow.pop %v2414
        %v2416 = vadd.f32 %v2415, 1.0
        %v2417 = vrcp.pop %v2416
        %v2418 = vmul.f32 %v2416, %v2417
        %v2419 = vsub.f32 1.0, %v2418
        %v2420 = vmul.f32 %v2417, %v2419
        %v2421 = vadd.f32 %v2417, %v2420
        %vm2422 = vweird.f32 %v2416
        %vm2423 = vweird.f32 %v2417
        %vm2424 = vmor %vm2422, %vm2423
        %v2425 = vsel %vm2424, %v2417, %v2421
        %v2426 = vand.u32 2147483647, %v2416
        %vm2427 = vcmp.eq.f32.partialorder %v2426, 8.507059e+37
        %v2428 = vand.u32 %v2416, 2147483648
        %v2429 = vor.u32 1.1754944e-38, %v2428
        %v2430 = vsel %vm2427, %v2429, %v2425
        %v2431 = vmul.f32 1.0, %v2430
        %v2432 = vxor.u32 %v2410, 2147483648
        %v2433 = vmul.f32 %v2432, 1.442695
        %v2434 = vpow.pop %v2433
        %v2435 = vadd.f32 %v2434, 1.0
        %v2436 = vrcp.pop %v2435
        %v2437 = vmul.f32 %v2435, %v2436
        %v2438 = vsub.f32 1.0, %v2437
        %v2439 = vmul.f32 %v2436, %v2438
        %v2440 = vadd.f32 %v2436, %v2439
        %vm2441 = vweird.f32 %v2435
        %vm2442 = vweird.f32 %v2436
        %vm2443 = vmor %vm2441, %vm2442
        %v2444 = vsel %vm2443, %v2436, %v2440
        %v2445 = vand.u32 2147483647, %v2435
        %vm2446 = vcmp.eq.f32.partialorder %v2445, 8.507059e+37
        %v2447 = vand.u32 %v2435, 2147483648
        %v2448 = vor.u32 1.1754944e-38, %v2447
        %v2449 = vsel %vm2446, %v2448, %v2444
        %v2450 = vmul.f32 1.0, %v2449
        %v2451 = vtanh.pop %v2411
        %v2452 = vxor.u32 %v2412, 2147483648
        %v2453 = vmul.f32 %v2452, 1.442695
        %v2454 = vpow.pop %v2453
        %v2455 = vadd.f32 %v2454, 1.0
        %v2456 = vrcp.pop %v2455
        %v2457 = vmul.f32 %v2455, %v2456
        %v2458 = vsub.f32 1.0, %v2457
        %v2459 = vmul.f32 %v2456, %v2458
        %v2460 = vadd.f32 %v2456, %v2459
        %vm2461 = vweird.f32 %v2455
        %vm2462 = vweird.f32 %v2456
        %vm2463 = vmor %vm2461, %vm2462
        %v2464 = vsel %vm2463, %v2456, %v2460
        %v2465 = vand.u32 2147483647, %v2455
        %vm2466 = vcmp.eq.f32.partialorder %v2465, 8.507059e+37
        %v2467 = vand.u32 %v2455, 2147483648
        %v2468 = vor.u32 1.1754944e-38, %v2467
        %v2469 = vsel %vm2466, %v2468, %v2464
        %v2470 = vmul.f32 1.0, %v2469
        %v2471 = vmul.f32 %v2450, %v2326
        %v2472 = vmul.f32 %v2431, %v2451
        %v2473 = vadd.f32 %v2471, %v2472
        %v2474 = vtanh.pop %v2473
        %v2475 = vmul.f32 %v2470, %v2474
        %2476 = vmatpush.msra.mxu0 %v1737
        %2477 = vmatpush.msra.mxu0 %v1733
        %2478 = vmatpush.msra.mxu0 %v1729
        %2479 = vmatpush.msra.mxu0 %v1725
        %2480 = vmatpush.msra.mxu0 %v1721
        %2481 = vmatpush.msra.mxu0 %v1717
        %2482 = vmatpush.msra.mxu0 %v1713
        %2483 = vmatpush.msra.mxu0 %v1709
        %2484 = vmatpush.msra.mxu0 %v1705
        %2485 = vmatpush.msra.mxu0 %v1701
        %2486 = vmatpush.msra.mxu0 %v1697
        %2487 = vmatpush.msra.mxu0 %v1693
        %2488 = vmatpush.msra.mxu0 %v1689
        %2489 = vmatpush.msra.mxu0 %v1685
        %2490 = vmatpush.msra.mxu0 %v1681
        %2491 = vmatpush.msra.mxu0 %v1677
        %2492 = vmatmul.f32.gmra.mxu0 %v2475
        %v2493 = vpop.f32.mrf.mxu0
        %v2494 = vadd.f32 0.0, %v2493
        %2495 = vdwg.mxu0
        %2496 = vmatpush.msra.mxu0 %v1738
        %2497 = vmatpush.msra.mxu0 %v1734
        %2498 = vmatpush.msra.mxu0 %v1730
        %2499 = vmatpush.msra.mxu0 %v1726
        %2500 = vmatpush.msra.mxu0 %v1722
        %2501 = vmatpush.msra.mxu0 %v1718
        %2502 = vmatpush.msra.mxu0 %v1714
        %2503 = vmatpush.msra.mxu0 %v1710
        %2504 = vmatpush.msra.mxu0 %v1706
        %2505 = vmatpush.msra.mxu0 %v1702
        %2506 = vmatpush.msra.mxu0 %v1698
        %2507 = vmatpush.msra.mxu0 %v1694
        %2508 = vmatpush.msra.mxu0 %v1690
        %2509 = vmatpush.msra.mxu0 %v1686
        %2510 = vmatpush.msra.mxu0 %v1682
        %2511 = vmatpush.msra.mxu0 %v1678
        %2512 = vmatmul.f32.gmra.mxu0 %v2475
        %v2513 = vpop.f32.mrf.mxu0
        %v2514 = vadd.f32 0.0, %v2513
        %2515 = vdwg.mxu0
        %2516 = vmatpush.msra.mxu0 %v1739
        %2517 = vmatpush.msra.mxu0 %v1735
        %2518 = vmatpush.msra.mxu0 %v1731
        %2519 = vmatpush.msra.mxu0 %v1727
        %2520 = vmatpush.msra.mxu0 %v1723
        %2521 = vmatpush.msra.mxu0 %v1719
        %2522 = vmatpush.msra.mxu0 %v1715
        %2523 = vmatpush.msra.mxu0 %v1711
        %2524 = vmatpush.msra.mxu0 %v1707
        %2525 = vmatpush.msra.mxu0 %v1703
        %2526 = vmatpush.msra.mxu0 %v1699
        %2527 = vmatpush.msra.mxu0 %v1695
        %2528 = vmatpush.msra.mxu0 %v1691
        %2529 = vmatpush.msra.mxu0 %v1687
        %2530 = vmatpush.msra.mxu0 %v1683
        %2531 = vmatpush.msra.mxu0 %v1679
        %2532 = vmatmul.f32.gmra.mxu0 %v2475
        %v2533 = vpop.f32.mrf.mxu0
        %v2534 = vadd.f32 0.0, %v2533
        %2535 = vdwg.mxu0
        %2536 = vmatpush.msra.mxu0 %v1740
        %2537 = vmatpush.msra.mxu0 %v1736
        %2538 = vmatpush.msra.mxu0 %v1732
        %2539 = vmatpush.msra.mxu0 %v1728
        %2540 = vmatpush.msra.mxu0 %v1724
        %2541 = vmatpush.msra.mxu0 %v1720
        %2542 = vmatpush.msra.mxu0 %v1716
        %2543 = vmatpush.msra.mxu0 %v1712
        %2544 = vmatpush.msra.mxu0 %v1708
        %2545 = vmatpush.msra.mxu0 %v1704
        %2546 = vmatpush.msra.mxu0 %v1700
        %2547 = vmatpush.msra.mxu0 %v1696
        %2548 = vmatpush.msra.mxu0 %v1692
        %2549 = vmatpush.msra.mxu0 %v1688
        %2550 = vmatpush.msra.mxu0 %v1684
        %2551 = vmatpush.msra.mxu0 %v1680
        %2552 = vmatmul.f32.gmra.mxu0 %v2475
        %v2553 = vpop.f32.mrf.mxu0
        %v2554 = vadd.f32 0.0, %v2553
        %2555 = vdwg.mxu0
        %v2556 = vadd.f32 %v1375, %v2494
        %v2557 = vadd.f32 %v1395, %v2514
        %v2558 = vadd.f32 %v1415, %v2534
        %v2559 = vadd.f32 %v1435, %v2554
        %v2560 = vxor.u32 %v2556, 2147483648
        %v2561 = vmul.f32 %v2560, 1.442695
        %v2562 = vpow.pop %v2561
        %v2563 = vadd.f32 %v2562, 1.0
        %v2564 = vrcp.pop %v2563
        %v2565 = vmul.f32 %v2563, %v2564
        %v2566 = vsub.f32 1.0, %v2565
        %v2567 = vmul.f32 %v2564, %v2566
        %v2568 = vadd.f32 %v2564, %v2567
        %vm2569 = vweird.f32 %v2563
        %vm2570 = vweird.f32 %v2564
        %vm2571 = vmor %vm2569, %vm2570
        %v2572 = vsel %vm2571, %v2564, %v2568
        %v2573 = vand.u32 2147483647, %v2563
        %vm2574 = vcmp.eq.f32.partialorder %v2573, 8.507059e+37
        %v2575 = vand.u32 %v2563, 2147483648
        %v2576 = vor.u32 1.1754944e-38, %v2575
        %v2577 = vsel %vm2574, %v2576, %v2572
        %v2578 = vmul.f32 1.0, %v2577
        %v2579 = vxor.u32 %v2557, 2147483648
        %v2580 = vmul.f32 %v2579, 1.442695
        %v2581 = vpow.pop %v2580
        %v2582 = vadd.f32 %v2581, 1.0
        %v2583 = vrcp.pop %v2582
        %v2584 = vmul.f32 %v2582, %v2583
        %v2585 = vsub.f32 1.0, %v2584
        %v2586 = vmul.f32 %v2583, %v2585
        %v2587 = vadd.f32 %v2583, %v2586
        %vm2588 = vweird.f32 %v2582
        %vm2589 = vweird.f32 %v2583
        %vm2590 = vmor %vm2588, %vm2589
        %v2591 = vsel %vm2590, %v2583, %v2587
        %v2592 = vand.u32 2147483647, %v2582
        %vm2593 = vcmp.eq.f32.partialorder %v2592, 8.507059e+37
        %v2594 = vand.u32 %v2582, 2147483648
        %v2595 = vor.u32 1.1754944e-38, %v2594
        %v2596 = vsel %vm2593, %v2595, %v2591
        %v2597 = vmul.f32 1.0, %v2596
        %v2598 = vtanh.pop %v2558
        %v2599 = vxor.u32 %v2559, 2147483648
        %v2600 = vmul.f32 %v2599, 1.442695
        %v2601 = vpow.pop %v2600
        %v2602 = vadd.f32 %v2601, 1.0
        %v2603 = vrcp.pop %v2602
        %v2604 = vmul.f32 %v2602, %v2603
        %v2605 = vsub.f32 1.0, %v2604
        %v2606 = vmul.f32 %v2603, %v2605
        %v2607 = vadd.f32 %v2603, %v2606
        %vm2608 = vweird.f32 %v2602
        %vm2609 = vweird.f32 %v2603
        %vm2610 = vmor %vm2608, %vm2609
        %v2611 = vsel %vm2610, %v2603, %v2607
        %v2612 = vand.u32 2147483647, %v2602
        %vm2613 = vcmp.eq.f32.partialorder %v2612, 8.507059e+37
        %v2614 = vand.u32 %v2602, 2147483648
        %v2615 = vor.u32 1.1754944e-38, %v2614
        %v2616 = vsel %vm2613, %v2615, %v2611
        %v2617 = vmul.f32 1.0, %v2616
        %v2618 = vmul.f32 %v2597, %v2473
        %v2619 = vmul.f32 %v2578, %v2598
        %v2620 = vadd.f32 %v2618, %v2619
        %v2621 = vtanh.pop %v2620
        %v2622 = vmul.f32 %v2617, %v2621
        %2623 = vmatpush.msra.mxu0 %v1737
        %2624 = vmatpush.msra.mxu0 %v1733
        %2625 = vmatpush.msra.mxu0 %v1729
        %2626 = vmatpush.msra.mxu0 %v1725
        %2627 = vmatpush.msra.mxu0 %v1721
        %2628 = vmatpush.msra.mxu0 %v1717
        %2629 = vmatpush.msra.mxu0 %v1713
        %2630 = vmatpush.msra.mxu0 %v1709
        %2631 = vmatpush.msra.mxu0 %v1705
        %2632 = vmatpush.msra.mxu0 %v1701
        %2633 = vmatpush.msra.mxu0 %v1697
        %2634 = vmatpush.msra.mxu0 %v1693
        %2635 = vmatpush.msra.mxu0 %v1689
        %2636 = vmatpush.msra.mxu0 %v1685
        %2637 = vmatpush.msra.mxu0 %v1681
        %2638 = vmatpush.msra.mxu0 %v1677
        %2639 = vmatmul.f32.gmra.mxu0 %v2622
        %v2640 = vpop.f32.mrf.mxu0
        %v2641 = vadd.f32 0.0, %v2640
        %2642 = vdwg.mxu0
        %2643 = vmatpush.msra.mxu0 %v1738
        %2644 = vmatpush.msra.mxu0 %v1734
        %2645 = vmatpush.msra.mxu0 %v1730
        %2646 = vmatpush.msra.mxu0 %v1726
        %2647 = vmatpush.msra.mxu0 %v1722
        %2648 = vmatpush.msra.mxu0 %v1718
        %2649 = vmatpush.msra.mxu0 %v1714
        %2650 = vmatpush.msra.mxu0 %v1710
        %2651 = vmatpush.msra.mxu0 %v1706
        %2652 = vmatpush.msra.mxu0 %v1702
        %2653 = vmatpush.msra.mxu0 %v1698
        %2654 = vmatpush.msra.mxu0 %v1694
        %2655 = vmatpush.msra.mxu0 %v1690
        %2656 = vmatpush.msra.mxu0 %v1686
        %2657 = vmatpush.msra.mxu0 %v1682
        %2658 = vmatpush.msra.mxu0 %v1678
        %2659 = vmatmul.f32.gmra.mxu0 %v2622
        %v2660 = vpop.f32.mrf.mxu0
        %v2661 = vadd.f32 0.0, %v2660
        %2662 = vdwg.mxu0
        %2663 = vmatpush.msra.mxu0 %v1739
        %2664 = vmatpush.msra.mxu0 %v1735
        %2665 = vmatpush.msra.mxu0 %v1731
        %2666 = vmatpush.msra.mxu0 %v1727
        %2667 = vmatpush.msra.mxu0 %v1723
        %2668 = vmatpush.msra.mxu0 %v1719
        %2669 = vmatpush.msra.mxu0 %v1715
        %2670 = vmatpush.msra.mxu0 %v1711
        %2671 = vmatpush.msra.mxu0 %v1707
        %2672 = vmatpush.msra.mxu0 %v1703
        %2673 = vmatpush.msra.mxu0 %v1699
        %2674 = vmatpush.msra.mxu0 %v1695
        %2675 = vmatpush.msra.mxu0 %v1691
        %2676 = vmatpush.msra.mxu0 %v1687
        %2677 = vmatpush.msra.mxu0 %v1683
        %2678 = vmatpush.msra.mxu0 %v1679
        %2679 = vmatmul.f32.gmra.mxu0 %v2622
        %v2680 = vpop.f32.mrf.mxu0
        %v2681 = vadd.f32 0.0, %v2680
        %2682 = vdwg.mxu0
        %2683 = vmatpush.msra.mxu0 %v1740
        %2684 = vmatpush.msra.mxu0 %v1736
        %2685 = vmatpush.msra.mxu0 %v1732
        %2686 = vmatpush.msra.mxu0 %v1728
        %2687 = vmatpush.msra.mxu0 %v1724
        %2688 = vmatpush.msra.mxu0 %v1720
        %2689 = vmatpush.msra.mxu0 %v1716
        %2690 = vmatpush.msra.mxu0 %v1712
        %2691 = vmatpush.msra.mxu0 %v1708
        %2692 = vmatpush.msra.mxu0 %v1704
        %2693 = vmatpush.msra.mxu0 %v1700
        %2694 = vmatpush.msra.mxu0 %v1696
        %2695 = vmatpush.msra.mxu0 %v1692
        %2696 = vmatpush.msra.mxu0 %v1688
        %2697 = vmatpush.msra.mxu0 %v1684
        %2698 = vmatpush.msra.mxu0 %v1680
        %2699 = vmatmul.f32.gmra.mxu0 %v2622
        %v2700 = vpop.f32.mrf.mxu0
        %v2701 = vadd.f32 0.0, %v2700
        %2702 = vdwg.mxu0
        %v2703 = vadd.f32 %v1455, %v2641
        %v2704 = vadd.f32 %v1475, %v2661
        %v2705 = vadd.f32 %v1495, %v2681
        %v2706 = vadd.f32 %v1515, %v2701
        %v2707 = vxor.u32 %v2703, 2147483648
        %v2708 = vmul.f32 %v2707, 1.442695
        %v2709 = vpow.pop %v2708
        %v2710 = vadd.f32 %v2709, 1.0
        %v2711 = vrcp.pop %v2710
        %v2712 = vmul.f32 %v2710, %v2711
        %v2713 = vsub.f32 1.0, %v2712
        %v2714 = vmul.f32 %v2711, %v2713
        %v2715 = vadd.f32 %v2711, %v2714
        %vm2716 = vweird.f32 %v2710
        %vm2717 = vweird.f32 %v2711
        %vm2718 = vmor %vm2716, %vm2717
        %v2719 = vsel %vm2718, %v2711, %v2715
        %v2720 = vand.u32 2147483647, %v2710
        %vm2721 = vcmp.eq.f32.partialorder %v2720, 8.507059e+37
        %v2722 = vand.u32 %v2710, 2147483648
        %v2723 = vor.u32 1.1754944e-38, %v2722
        %v2724 = vsel %vm2721, %v2723, %v2719
        %v2725 = vmul.f32 1.0, %v2724
        %v2726 = vxor.u32 %v2704, 2147483648
        %v2727 = vmul.f32 %v2726, 1.442695
        %v2728 = vpow.pop %v2727
        %v2729 = vadd.f32 %v2728, 1.0
        %v2730 = vrcp.pop %v2729
        %v2731 = vmul.f32 %v2729, %v2730
        %v2732 = vsub.f32 1.0, %v2731
        %v2733 = vmul.f32 %v2730, %v2732
        %v2734 = vadd.f32 %v2730, %v2733
        %vm2735 = vweird.f32 %v2729
        %vm2736 = vweird.f32 %v2730
        %vm2737 = vmor %vm2735, %vm2736
        %v2738 = vsel %vm2737, %v2730, %v2734
        %v2739 = vand.u32 2147483647, %v2729
        %vm2740 = vcmp.eq.f32.partialorder %v2739, 8.507059e+37
        %v2741 = vand.u32 %v2729, 2147483648
        %v2742 = vor.u32 1.1754944e-38, %v2741
        %v2743 = vsel %vm2740, %v2742, %v2738
        %v2744 = vmul.f32 1.0, %v2743
        %v2745 = vtanh.pop %v2705
        %v2746 = vxor.u32 %v2706, 2147483648
        %v2747 = vmul.f32 %v2746, 1.442695
        %v2748 = vpow.pop %v2747
        %v2749 = vadd.f32 %v2748, 1.0
        %v2750 = vrcp.pop %v2749
        %v2751 = vmul.f32 %v2749, %v2750
        %v2752 = vsub.f32 1.0, %v2751
        %v2753 = vmul.f32 %v2750, %v2752
        %v2754 = vadd.f32 %v2750, %v2753
        %vm2755 = vweird.f32 %v2749
        %vm2756 = vweird.f32 %v2750
        %vm2757 = vmor %vm2755, %vm2756
        %v2758 = vsel %vm2757, %v2750, %v2754
        %v2759 = vand.u32 2147483647, %v2749
        %vm2760 = vcmp.eq.f32.partialorder %v2759, 8.507059e+37
        %v2761 = vand.u32 %v2749, 2147483648
        %v2762 = vor.u32 1.1754944e-38, %v2761
        %v2763 = vsel %vm2760, %v2762, %v2758
        %v2764 = vmul.f32 1.0, %v2763
        %v2765 = vmul.f32 %v2744, %v2620
        %v2766 = vmul.f32 %v2725, %v2745
        %v2767 = vadd.f32 %v2765, %v2766
        %v2768 = vtanh.pop %v2767
        %v2769 = vmul.f32 %v2764, %v2768
        %2770 = vmatpush.msra.mxu0 %v1737
        %2771 = vmatpush.msra.mxu0 %v1733
        %2772 = vmatpush.msra.mxu0 %v1729
        %2773 = vmatpush.msra.mxu0 %v1725
        %2774 = vmatpush.msra.mxu0 %v1721
        %2775 = vmatpush.msra.mxu0 %v1717
        %2776 = vmatpush.msra.mxu0 %v1713
        %2777 = vmatpush.msra.mxu0 %v1709
        %2778 = vmatpush.msra.mxu0 %v1705
        %2779 = vmatpush.msra.mxu0 %v1701
        %2780 = vmatpush.msra.mxu0 %v1697
        %2781 = vmatpush.msra.mxu0 %v1693
        %2782 = vmatpush.msra.mxu0 %v1689
        %2783 = vmatpush.msra.mxu0 %v1685
        %2784 = vmatpush.msra.mxu0 %v1681
        %2785 = vmatpush.msra.mxu0 %v1677
        %2786 = vmatmul.f32.gmra.mxu0 %v2769
        %v2787 = vpop.f32.mrf.mxu0
        %v2788 = vadd.f32 0.0, %v2787
        %2789 = vdwg.mxu0
        %2790 = vmatpush.msra.mxu0 %v1738
        %2791 = vmatpush.msra.mxu0 %v1734
        %2792 = vmatpush.msra.mxu0 %v1730
        %2793 = vmatpush.msra.mxu0 %v1726
        %2794 = vmatpush.msra.mxu0 %v1722
        %2795 = vmatpush.msra.mxu0 %v1718
        %2796 = vmatpush.msra.mxu0 %v1714
        %2797 = vmatpush.msra.mxu0 %v1710
        %2798 = vmatpush.msra.mxu0 %v1706
        %2799 = vmatpush.msra.mxu0 %v1702
        %2800 = vmatpush.msra.mxu0 %v1698
        %2801 = vmatpush.msra.mxu0 %v1694
        %2802 = vmatpush.msra.mxu0 %v1690
        %2803 = vmatpush.msra.mxu0 %v1686
        %2804 = vmatpush.msra.mxu0 %v1682
        %2805 = vmatpush.msra.mxu0 %v1678
        %2806 = vmatmul.f32.gmra.mxu0 %v2769
        %v2807 = vpop.f32.mrf.mxu0
        %v2808 = vadd.f32 0.0, %v2807
        %2809 = vdwg.mxu0
        %2810 = vmatpush.msra.mxu0 %v1739
        %2811 = vmatpush.msra.mxu0 %v1735
        %2812 = vmatpush.msra.mxu0 %v1731
        %2813 = vmatpush.msra.mxu0 %v1727
        %2814 = vmatpush.msra.mxu0 %v1723
        %2815 = vmatpush.msra.mxu0 %v1719
        %2816 = vmatpush.msra.mxu0 %v1715
        %2817 = vmatpush.msra.mxu0 %v1711
        %2818 = vmatpush.msra.mxu0 %v1707
        %2819 = vmatpush.msra.mxu0 %v1703
        %2820 = vmatpush.msra.mxu0 %v1699
        %2821 = vmatpush.msra.mxu0 %v1695
        %2822 = vmatpush.msra.mxu0 %v1691
        %2823 = vmatpush.msra.mxu0 %v1687
        %2824 = vmatpush.msra.mxu0 %v1683
        %2825 = vmatpush.msra.mxu0 %v1679
        %2826 = vmatmul.f32.gmra.mxu0 %v2769
        %v2827 = vpop.f32.mrf.mxu0
        %v2828 = vadd.f32 0.0, %v2827
        %2829 = vdwg.mxu0
        %2830 = vmatpush.msra.mxu0 %v1740
        %2831 = vmatpush.msra.mxu0 %v1736
        %2832 = vmatpush.msra.mxu0 %v1732
        %2833 = vmatpush.msra.mxu0 %v1728
        %2834 = vmatpush.msra.mxu0 %v1724
        %2835 = vmatpush.msra.mxu0 %v1720
        %2836 = vmatpush.msra.mxu0 %v1716
        %2837 = vmatpush.msra.mxu0 %v1712
        %2838 = vmatpush.msra.mxu0 %v1708
        %2839 = vmatpush.msra.mxu0 %v1704
        %2840 = vmatpush.msra.mxu0 %v1700
        %2841 = vmatpush.msra.mxu0 %v1696
        %2842 = vmatpush.msra.mxu0 %v1692
        %2843 = vmatpush.msra.mxu0 %v1688
        %2844 = vmatpush.msra.mxu0 %v1684
        %2845 = vmatpush.msra.mxu0 %v1680
        %2846 = vmatmul.f32.gmra.mxu0 %v2769
        %v2847 = vpop.f32.mrf.mxu0
        %v2848 = vadd.f32 0.0, %v2847
        %2849 = vdwg.mxu0
        %v2850 = vadd.f32 %v1535, %v2788
        %v2851 = vadd.f32 %v1555, %v2808
        %v2852 = vadd.f32 %v1575, %v2828
        %v2853 = vadd.f32 %v1595, %v2848
        %v2854 = vxor.u32 %v2850, 2147483648
        %v2855 = vmul.f32 %v2854, 1.442695
        %v2856 = vpow.pop %v2855
        %v2857 = vadd.f32 %v2856, 1.0
        %v2858 = vrcp.pop %v2857
        %v2859 = vmul.f32 %v2857, %v2858
        %v2860 = vsub.f32 1.0, %v2859
        %v2861 = vmul.f32 %v2858, %v2860
        %v2862 = vadd.f32 %v2858, %v2861
        %vm2863 = vweird.f32 %v2857
        %vm2864 = vweird.f32 %v2858
        %vm2865 = vmor %vm2863, %vm2864
        %v2866 = vsel %vm2865, %v2858, %v2862
        %v2867 = vand.u32 2147483647, %v2857
        %vm2868 = vcmp.eq.f32.partialorder %v2867, 8.507059e+37
        %v2869 = vand.u32 %v2857, 2147483648
        %v2870 = vor.u32 1.1754944e-38, %v2869
        %v2871 = vsel %vm2868, %v2870, %v2866
        %v2872 = vmul.f32 1.0, %v2871
        %v2873 = vxor.u32 %v2851, 2147483648
        %v2874 = vmul.f32 %v2873, 1.442695
        %v2875 = vpow.pop %v2874
        %v2876 = vadd.f32 %v2875, 1.0
        %v2877 = vrcp.pop %v2876
        %v2878 = vmul.f32 %v2876, %v2877
        %v2879 = vsub.f32 1.0, %v2878
        %v2880 = vmul.f32 %v2877, %v2879
        %v2881 = vadd.f32 %v2877, %v2880
        %vm2882 = vweird.f32 %v2876
        %vm2883 = vweird.f32 %v2877
        %vm2884 = vmor %vm2882, %vm2883
        %v2885 = vsel %vm2884, %v2877, %v2881
        %v2886 = vand.u32 2147483647, %v2876
        %vm2887 = vcmp.eq.f32.partialorder %v2886, 8.507059e+37
        %v2888 = vand.u32 %v2876, 2147483648
        %v2889 = vor.u32 1.1754944e-38, %v2888
        %v2890 = vsel %vm2887, %v2889, %v2885
        %v2891 = vmul.f32 1.0, %v2890
        %v2892 = vtanh.pop %v2852
        %v2893 = vxor.u32 %v2853, 2147483648
        %v2894 = vmul.f32 %v2893, 1.442695
        %v2895 = vpow.pop %v2894
        %v2896 = vadd.f32 %v2895, 1.0
        %v2897 = vrcp.pop %v2896
        %v2898 = vmul.f32 %v2896, %v2897
        %v2899 = vsub.f32 1.0, %v2898
        %v2900 = vmul.f32 %v2897, %v2899
        %v2901 = vadd.f32 %v2897, %v2900
        %vm2902 = vweird.f32 %v2896
        %vm2903 = vweird.f32 %v2897
        %vm2904 = vmor %vm2902, %vm2903
        %v2905 = vsel %vm2904, %v2897, %v2901
        %v2906 = vand.u32 2147483647, %v2896
        %vm2907 = vcmp.eq.f32.partialorder %v2906, 8.507059e+37
        %v2908 = vand.u32 %v2896, 2147483648
        %v2909 = vor.u32 1.1754944e-38, %v2908
        %v2910 = vsel %vm2907, %v2909, %v2905
        %v2911 = vmul.f32 1.0, %v2910
        %v2912 = vmul.f32 %v2891, %v2767
        %v2913 = vmul.f32 %v2872, %v2892
        %v2914 = vadd.f32 %v2912, %v2913
        %v2915 = vtanh.pop %v2914
        %v2916 = vmul.f32 %v2911, %v2915
        %2917 = vmatpush.msra.mxu0 %v1737
        %2918 = vmatpush.msra.mxu0 %v1733
        %2919 = vmatpush.msra.mxu0 %v1729
        %2920 = vmatpush.msra.mxu0 %v1725
        %2921 = vmatpush.msra.mxu0 %v1721
        %2922 = vmatpush.msra.mxu0 %v1717
        %2923 = vmatpush.msra.mxu0 %v1713
        %2924 = vmatpush.msra.mxu0 %v1709
        %2925 = vmatpush.msra.mxu0 %v1705
        %2926 = vmatpush.msra.mxu0 %v1701
        %2927 = vmatpush.msra.mxu0 %v1697
        %2928 = vmatpush.msra.mxu0 %v1693
        %2929 = vmatpush.msra.mxu0 %v1689
        %2930 = vmatpush.msra.mxu0 %v1685
        %2931 = vmatpush.msra.mxu0 %v1681
        %2932 = vmatpush.msra.mxu0 %v1677
        %2933 = vmatmul.f32.gmra.mxu0 %v2916
        %v2934 = vpop.f32.mrf.mxu0
        %v2935 = vadd.f32 0.0, %v2934
        %2936 = vdwg.mxu0
        %2937 = vmatpush.msra.mxu0 %v1738
        %2938 = vmatpush.msra.mxu0 %v1734
        %2939 = vmatpush.msra.mxu0 %v1730
        %2940 = vmatpush.msra.mxu0 %v1726
        %2941 = vmatpush.msra.mxu0 %v1722
        %2942 = vmatpush.msra.mxu0 %v1718
        %2943 = vmatpush.msra.mxu0 %v1714
        %2944 = vmatpush.msra.mxu0 %v1710
        %2945 = vmatpush.msra.mxu0 %v1706
        %2946 = vmatpush.msra.mxu0 %v1702
        %2947 = vmatpush.msra.mxu0 %v1698
        %2948 = vmatpush.msra.mxu0 %v1694
        %2949 = vmatpush.msra.mxu0 %v1690
        %2950 = vmatpush.msra.mxu0 %v1686
        %2951 = vmatpush.msra.mxu0 %v1682
        %2952 = vmatpush.msra.mxu0 %v1678
        %2953 = vmatmul.f32.gmra.mxu0 %v2916
        %v2954 = vpop.f32.mrf.mxu0
        %v2955 = vadd.f32 0.0, %v2954
        %2956 = vdwg.mxu0
        %2957 = vmatpush.msra.mxu0 %v1739
        %2958 = vmatpush.msra.mxu0 %v1735
        %2959 = vmatpush.msra.mxu0 %v1731
        %2960 = vmatpush.msra.mxu0 %v1727
        %2961 = vmatpush.msra.mxu0 %v1723
        %2962 = vmatpush.msra.mxu0 %v1719
        %2963 = vmatpush.msra.mxu0 %v1715
        %2964 = vmatpush.msra.mxu0 %v1711
        %2965 = vmatpush.msra.mxu0 %v1707
        %2966 = vmatpush.msra.mxu0 %v1703
        %2967 = vmatpush.msra.mxu0 %v1699
        %2968 = vmatpush.msra.mxu0 %v1695
        %2969 = vmatpush.msra.mxu0 %v1691
        %2970 = vmatpush.msra.mxu0 %v1687
        %2971 = vmatpush.msra.mxu0 %v1683
        %2972 = vmatpush.msra.mxu0 %v1679
        %2973 = vmatmul.f32.gmra.mxu0 %v2916
        %v2974 = vpop.f32.mrf.mxu0
        %v2975 = vadd.f32 0.0, %v2974
        %2976 = vdwg.mxu0
        %2977 = vmatpush.msra.mxu0 %v1740
        %2978 = vmatpush.msra.mxu0 %v1736
        %2979 = vmatpush.msra.mxu0 %v1732
        %2980 = vmatpush.msra.mxu0 %v1728
        %2981 = vmatpush.msra.mxu0 %v1724
        %2982 = vmatpush.msra.mxu0 %v1720
        %2983 = vmatpush.msra.mxu0 %v1716
        %2984 = vmatpush.msra.mxu0 %v1712
        %2985 = vmatpush.msra.mxu0 %v1708
        %2986 = vmatpush.msra.mxu0 %v1704
        %2987 = vmatpush.msra.mxu0 %v1700
        %2988 = vmatpush.msra.mxu0 %v1696
        %2989 = vmatpush.msra.mxu0 %v1692
        %2990 = vmatpush.msra.mxu0 %v1688
        %2991 = vmatpush.msra.mxu0 %v1684
        %2992 = vmatpush.msra.mxu0 %v1680
        %2993 = vmatmul.f32.gmra.mxu0 %v2916
        %v2994 = vpop.f32.mrf.mxu0
        %v2995 = vadd.f32 0.0, %v2994
        %2996 = vdwg.mxu0
        %v2997 = vadd.f32 %v1615, %v2935
        %v2998 = vadd.f32 %v1635, %v2955
        %v2999 = vadd.f32 %v1655, %v2975
        %v3000 = vadd.f32 %v1675, %v2995
        %v3001 = vxor.u32 %v2997, 2147483648
        %v3002 = vmul.f32 %v3001, 1.442695
        %v3003 = vpow.pop %v3002
        %v3004 = vadd.f32 %v3003, 1.0
        %v3005 = vrcp.pop %v3004
        %v3006 = vmul.f32 %v3004, %v3005
        %v3007 = vsub.f32 1.0, %v3006
        %v3008 = vmul.f32 %v3005, %v3007
        %v3009 = vadd.f32 %v3005, %v3008
        %vm3010 = vweird.f32 %v3004
        %vm3011 = vweird.f32 %v3005
        %vm3012 = vmor %vm3010, %vm3011
        %v3013 = vsel %vm3012, %v3005, %v3009
        %v3014 = vand.u32 2147483647, %v3004
        %vm3015 = vcmp.eq.f32.partialorder %v3014, 8.507059e+37
        %v3016 = vand.u32 %v3004, 2147483648
        %v3017 = vor.u32 1.1754944e-38, %v3016
        %v3018 = vsel %vm3015, %v3017, %v3013
        %v3019 = vmul.f32 1.0, %v3018
        %v3020 = vxor.u32 %v2998, 2147483648
        %v3021 = vmul.f32 %v3020, 1.442695
        %v3022 = vpow.pop %v3021
        %v3023 = vadd.f32 %v3022, 1.0
        %v3024 = vrcp.pop %v3023
        %v3025 = vmul.f32 %v3023, %v3024
        %v3026 = vsub.f32 1.0, %v3025
        %v3027 = vmul.f32 %v3024, %v3026
        %v3028 = vadd.f32 %v3024, %v3027
        %vm3029 = vweird.f32 %v3023
        %vm3030 = vweird.f32 %v3024
        %vm3031 = vmor %vm3029, %vm3030
        %v3032 = vsel %vm3031, %v3024, %v3028
        %v3033 = vand.u32 2147483647, %v3023
        %vm3034 = vcmp.eq.f32.partialorder %v3033, 8.507059e+37
        %v3035 = vand.u32 %v3023, 2147483648
        %v3036 = vor.u32 1.1754944e-38, %v3035
        %v3037 = vsel %vm3034, %v3036, %v3032
        %v3038 = vmul.f32 1.0, %v3037
        %v3039 = vtanh.pop %v2999
        %v3040 = vxor.u32 %v3000, 2147483648
        %v3041 = vmul.f32 %v3040, 1.442695
        %v3042 = vpow.pop %v3041
        %v3043 = vadd.f32 %v3042, 1.0
        %v3044 = vrcp.pop %v3043
        %v3045 = vmul.f32 %v3043, %v3044
        %v3046 = vsub.f32 1.0, %v3045
        %v3047 = vmul.f32 %v3044, %v3046
        %v3048 = vadd.f32 %v3044, %v3047
        %vm3049 = vweird.f32 %v3043
        %vm3050 = vweird.f32 %v3044
        %vm3051 = vmor %vm3049, %vm3050
        %v3052 = vsel %vm3051, %v3044, %v3048
        %v3053 = vand.u32 2147483647, %v3043
        %vm3054 = vcmp.eq.f32.partialorder %v3053, 8.507059e+37
        %v3055 = vand.u32 %v3043, 2147483648
        %v3056 = vor.u32 1.1754944e-38, %v3055
        %v3057 = vsel %vm3054, %v3056, %v3052
        %v3058 = vmul.f32 1.0, %v3057
        %v3059 = vmul.f32 %v3038, %v2914
        %v3060 = vmul.f32 %v3019, %v3039
        %v3061 = vadd.f32 %v3059, %v3060
        %v3062 = vtanh.pop %v3061
        %v3063 = vmul.f32 %v3058, %v3062
        %v3064 = vmax.f32 %v3063, 0.0
        %v3065 = vld [vmem:[#allocation10] sm:$0xff]
        %v3066 = vld [vmem:[#allocation10 + $0x8] sm:$0xff]
        %v3067 = vld [vmem:[#allocation10 + $0x10] sm:$0xff]
        %v3068 = vld [vmem:[#allocation10 + $0x18] sm:$0xff]
        %v3069 = vld [vmem:[#allocation10 + $0x20] sm:$0xff]
        %v3070 = vld [vmem:[#allocation10 + $0x28] sm:$0xff]
        %v3071 = vld [vmem:[#allocation10 + $0x30] sm:$0xff]
        %v3072 = vld [vmem:[#allocation10 + $0x38] sm:$0xff]
        %v3073 = vld [vmem:[#allocation10 + $0x40] sm:$0xff]
        %v3074 = vld [vmem:[#allocation10 + $0x48] sm:$0xff]
        %v3075 = vld [vmem:[#allocation10 + $0x50] sm:$0xff]
        %v3076 = vld [vmem:[#allocation10 + $0x58] sm:$0xff]
        %v3077 = vld [vmem:[#allocation10 + $0x60] sm:$0xff]
        %v3078 = vld [vmem:[#allocation10 + $0x68] sm:$0xff]
        %v3079 = vld [vmem:[#allocation10 + $0x70] sm:$0xff]
        %v3080 = vld [vmem:[#allocation10 + $0x78] sm:$0xff]
        %v3081 = vld [vmem:[%s5] sm:$0x1]
        %v3083 = vperm.slane %v3081, 0
        %3085 = vmatpush.msra.mxu0 %v3080
        %3086 = vmatpush.msra.mxu0 %v3079
        %3087 = vmatpush.msra.mxu0 %v3078
        %3088 = vmatpush.msra.mxu0 %v3077
        %3089 = vmatpush.msra.mxu0 %v3076
        %3090 = vmatpush.msra.mxu0 %v3075
        %3091 = vmatpush.msra.mxu0 %v3074
        %3092 = vmatpush.msra.mxu0 %v3073
        %3093 = vmatpush.msra.mxu0 %v3072
        %3094 = vmatpush.msra.mxu0 %v3071
        %3095 = vmatpush.msra.mxu0 %v3070
        %3096 = vmatpush.msra.mxu0 %v3069
        %3097 = vmatpush.msra.mxu0 %v3068
        %3098 = vmatpush.msra.mxu0 %v3067
        %3099 = vmatpush.msra.mxu0 %v3066
        %3100 = vmatpush.msra.mxu0 %v3065
        %3101 = vmatmul.f32.gmra.mxu0 %v3064
        %v3102 = vpop.f32.mrf.mxu0
        %v3103 = vadd.f32 %v3083, %v3102
        %3104 = vdwg.mxu0
        %v3105 = vmax.f32 %v3103, 0.0
        %v3106 = vld [vmem:[#allocation11] sm:$0xff]
        %v3107 = vld [vmem:[#allocation11 + $0x8] sm:$0xff]
        %v3108 = vld [vmem:[#allocation11 + $0x10] sm:$0xff]
        %v3109 = vld [vmem:[#allocation11 + $0x18] sm:$0xff]
        %v3110 = vld [vmem:[#allocation11 + $0x20] sm:$0xff]
        %v3111 = vld [vmem:[#allocation11 + $0x28] sm:$0xff]
        %v3112 = vld [vmem:[#allocation11 + $0x30] sm:$0xff]
        %v3113 = vld [vmem:[#allocation11 + $0x38] sm:$0xff]
        %v3114 = vld [vmem:[#allocation11 + $0x40] sm:$0xff]
        %v3115 = vld [vmem:[#allocation11 + $0x48] sm:$0xff]
        %v3116 = vld [vmem:[#allocation11 + $0x50] sm:$0xff]
        %v3117 = vld [vmem:[#allocation11 + $0x58] sm:$0xff]
        %v3118 = vld [vmem:[#allocation11 + $0x60] sm:$0xff]
        %v3119 = vld [vmem:[#allocation11 + $0x68] sm:$0xff]
        %v3120 = vld [vmem:[#allocation11 + $0x70] sm:$0xff]
        %v3121 = vld [vmem:[#allocation11 + $0x78] sm:$0xff]
        %v3122 = vld [vmem:[%s7] sm:$0x1]
        %v3124 = vperm.slane %v3122, 0
        %3126 = vmatpush.msra.mxu0 %v3121
        %3127 = vmatpush.msra.mxu0 %v3120
        %3128 = vmatpush.msra.mxu0 %v3119
        %3129 = vmatpush.msra.mxu0 %v3118
        %3130 = vmatpush.msra.mxu0 %v3117
        %3131 = vmatpush.msra.mxu0 %v3116
        %3132 = vmatpush.msra.mxu0 %v3115
        %3133 = vmatpush.msra.mxu0 %v3114
        %3134 = vmatpush.msra.mxu0 %v3113
        %3135 = vmatpush.msra.mxu0 %v3112
        %3136 = vmatpush.msra.mxu0 %v3111
        %3137 = vmatpush.msra.mxu0 %v3110
        %3138 = vmatpush.msra.mxu0 %v3109
        %3139 = vmatpush.msra.mxu0 %v3108
        %3140 = vmatpush.msra.mxu0 %v3107
        %3141 = vmatpush.msra.mxu0 %v3106
        %3142 = vmatmul.f32.gmra.mxu0 %v3105
        %v3143 = vpop.f32.mrf.mxu0
        %v3144 = vadd.f32 %v3124, %v3143
        %3145 = vdwg.mxu0
        %v3146 = vmax.f32 %v3144, 0.0
        %v3147 = vld [vmem:[#allocation13] sm:$0xff]
        %v3148 = vld [vmem:[#allocation13 + $0x8] sm:$0xff]
        %v3149 = vld [vmem:[#allocation13 + $0x10] sm:$0xff]
        %v3150 = vld [vmem:[#allocation13 + $0x18] sm:$0xff]
        %v3151 = vld [vmem:[#allocation13 + $0x20] sm:$0xff]
        %v3152 = vld [vmem:[#allocation13 + $0x28] sm:$0xff]
        %v3153 = vld [vmem:[#allocation13 + $0x30] sm:$0xff]
        %v3154 = vld [vmem:[#allocation13 + $0x38] sm:$0xff]
        %v3155 = vld [vmem:[#allocation13 + $0x40] sm:$0xff]
        %v3156 = vld [vmem:[#allocation13 + $0x48] sm:$0xff]
        %v3157 = vld [vmem:[#allocation13 + $0x50] sm:$0xff]
        %v3158 = vld [vmem:[#allocation13 + $0x58] sm:$0xff]
        %v3159 = vld [vmem:[#allocation13 + $0x60] sm:$0xff]
        %v3160 = vld [vmem:[#allocation13 + $0x68] sm:$0xff]
        %v3161 = vld [vmem:[#allocation13 + $0x70] sm:$0xff]
        %v3162 = vld [vmem:[#allocation13 + $0x78] sm:$0xff]
        %v3163 = vld [vmem:[%s9] sm:$0x1]
        %v3165 = vperm.slane %v3163, 0
        %3167 = vmatpush.msra.mxu0 %v3162
        %3168 = vmatpush.msra.mxu0 %v3161
        %3169 = vmatpush.msra.mxu0 %v3160
        %3170 = vmatpush.msra.mxu0 %v3159
        %3171 = vmatpush.msra.mxu0 %v3158
        %3172 = vmatpush.msra.mxu0 %v3157
        %3173 = vmatpush.msra.mxu0 %v3156
        %3174 = vmatpush.msra.mxu0 %v3155
        %3175 = vmatpush.msra.mxu0 %v3154
        %3176 = vmatpush.msra.mxu0 %v3153
        %3177 = vmatpush.msra.mxu0 %v3152
        %3178 = vmatpush.msra.mxu0 %v3151
        %3179 = vmatpush.msra.mxu0 %v3150
        %3180 = vmatpush.msra.mxu0 %v3149
        %3181 = vmatpush.msra.mxu0 %v3148
        %3182 = vmatpush.msra.mxu0 %v3147
        %3183 = vmatmul.f32.gmra.mxu0 %v3146
        %v3184 = vpop.f32.mrf.mxu0
        %v3185 = vadd.f32 %v3165, %v3184
        %3186 = vdwg.mxu0
        %v3187 = vmax.f32 %v3185, 0.0
        %v3188 = vld [vmem:[#allocation14] sm:$0xff]
        %v3189 = vld [vmem:[#allocation14 + $0x8] sm:$0xff]
        %v3190 = vld [vmem:[#allocation14 + $0x10] sm:$0xff]
        %v3191 = vld [vmem:[#allocation14 + $0x18] sm:$0xff]
        %v3192 = vld [vmem:[#allocation14 + $0x20] sm:$0xff]
        %v3193 = vld [vmem:[#allocation14 + $0x28] sm:$0xff]
        %v3194 = vld [vmem:[#allocation14 + $0x30] sm:$0xff]
        %v3195 = vld [vmem:[#allocation14 + $0x38] sm:$0xff]
        %v3196 = vld [vmem:[#allocation14 + $0x40] sm:$0xff]
        %v3197 = vld [vmem:[#allocation14 + $0x48] sm:$0xff]
        %v3198 = vld [vmem:[#allocation14 + $0x50] sm:$0xff]
        %v3199 = vld [vmem:[#allocation14 + $0x58] sm:$0xff]
        %v3200 = vld [vmem:[#allocation14 + $0x60] sm:$0xff]
        %v3201 = vld [vmem:[#allocation14 + $0x68] sm:$0xff]
        %v3202 = vld [vmem:[#allocation14 + $0x70] sm:$0xff]
        %v3203 = vld [vmem:[#allocation14 + $0x78] sm:$0xff]
        %v3204 = vld [vmem:[#allocation14 + $0x80] sm:$0xff]
        %v3205 = vld [vmem:[#allocation14 + $0x88] sm:$0xff]
        %v3206 = vld [vmem:[#allocation14 + $0x90] sm:$0xff]
        %v3207 = vld [vmem:[#allocation14 + $0x98] sm:$0xff]
        %v3208 = vld [vmem:[#allocation14 + $0xa0] sm:$0xff]
        %v3209 = vld [vmem:[#allocation14 + $0xa8] sm:$0xff]
        %v3210 = vld [vmem:[#allocation14 + $0xb0] sm:$0xff]
        %v3211 = vld [vmem:[#allocation14 + $0xb8] sm:$0xff]
        %v3212 = vld [vmem:[#allocation14 + $0xc0] sm:$0xff]
        %v3213 = vld [vmem:[#allocation14 + $0xc8] sm:$0xff]
        %v3214 = vld [vmem:[#allocation14 + $0xd0] sm:$0xff]
        %v3215 = vld [vmem:[#allocation14 + $0xd8] sm:$0xff]
        %v3216 = vld [vmem:[#allocation14 + $0xe0] sm:$0xff]
        %v3217 = vld [vmem:[#allocation14 + $0xe8] sm:$0xff]
        %v3218 = vld [vmem:[#allocation14 + $0xf0] sm:$0xff]
        %v3219 = vld [vmem:[#allocation14 + $0xf8] sm:$0xff]
        %v3220 = vld [vmem:[#allocation14 + $0x100] sm:$0xff]
        %v3221 = vld [vmem:[#allocation14 + $0x108] sm:$0xff]
        %v3222 = vld [vmem:[#allocation14 + $0x110] sm:$0xff]
        %v3223 = vld [vmem:[#allocation14 + $0x118] sm:$0xff]
        %v3224 = vld [vmem:[#allocation14 + $0x120] sm:$0xff]
        %v3225 = vld [vmem:[#allocation14 + $0x128] sm:$0xff]
        %v3226 = vld [vmem:[#allocation14 + $0x130] sm:$0xff]
        %v3227 = vld [vmem:[#allocation14 + $0x138] sm:$0xff]
        %v3228 = vld [vmem:[#allocation14 + $0x140] sm:$0xff]
        %v3229 = vld [vmem:[#allocation14 + $0x148] sm:$0xff]
        %v3230 = vld [vmem:[#allocation14 + $0x150] sm:$0xff]
        %v3231 = vld [vmem:[#allocation14 + $0x158] sm:$0xff]
        %v3232 = vld [vmem:[#allocation14 + $0x160] sm:$0xff]
        %v3233 = vld [vmem:[#allocation14 + $0x168] sm:$0xff]
        %v3234 = vld [vmem:[#allocation14 + $0x170] sm:$0xff]
        %v3235 = vld [vmem:[#allocation14 + $0x178] sm:$0xff]
        %v3236 = vld [vmem:[%s11] sm:$0x7]
        %v3238 = vperm.slane %v3236, 0
        %v3239 = vperm.slane %v3236, 1
        %v3240 = vperm.slane %v3236, 2
        %3244 = vmatpush.msra.mxu0 %v3233
        %3245 = vmatpush.msra.mxu0 %v3230
        %3246 = vmatpush.msra.mxu0 %v3227
        %3247 = vmatpush.msra.mxu0 %v3224
        %3248 = vmatpush.msra.mxu0 %v3221
        %3249 = vmatpush.msra.mxu0 %v3218
        %3250 = vmatpush.msra.mxu0 %v3215
        %3251 = vmatpush.msra.mxu0 %v3212
        %3252 = vmatpush.msra.mxu0 %v3209
        %3253 = vmatpush.msra.mxu0 %v3206
        %3254 = vmatpush.msra.mxu0 %v3203
        %3255 = vmatpush.msra.mxu0 %v3200
        %3256 = vmatpush.msra.mxu0 %v3197
        %3257 = vmatpush.msra.mxu0 %v3194
        %3258 = vmatpush.msra.mxu0 %v3191
        %3259 = vmatpush.msra.mxu0 %v3188
        %3260 = vmatmul.f32.gmra.mxu0 %v3187
        %v3261 = vpop.f32.mrf.mxu0
        %v3262 = vadd.f32 %v3238, %v3261
        %3263 = vdwg.mxu0
        %3264 = vmatpush.msra.mxu0 %v3234
        %3265 = vmatpush.msra.mxu0 %v3231
        %3266 = vmatpush.msra.mxu0 %v3228
        %3267 = vmatpush.msra.mxu0 %v3225
        %3268 = vmatpush.msra.mxu0 %v3222
        %3269 = vmatpush.msra.mxu0 %v3219
        %3270 = vmatpush.msra.mxu0 %v3216
        %3271 = vmatpush.msra.mxu0 %v3213
        %3272 = vmatpush.msra.mxu0 %v3210
        %3273 = vmatpush.msra.mxu0 %v3207
        %3274 = vmatpush.msra.mxu0 %v3204
        %3275 = vmatpush.msra.mxu0 %v3201
        %3276 = vmatpush.msra.mxu0 %v3198
        %3277 = vmatpush.msra.mxu0 %v3195
        %3278 = vmatpush.msra.mxu0 %v3192
        %3279 = vmatpush.msra.mxu0 %v3189
        %3280 = vmatmul.f32.gmra.mxu0 %v3187
        %v3281 = vpop.f32.mrf.mxu0
        %v3282 = vadd.f32 %v3239, %v3281
        %3283 = vdwg.mxu0
        %3284 = vmatpush.msra.mxu0 %v3235
        %3285 = vmatpush.msra.mxu0 %v3232
        %3286 = vmatpush.msra.mxu0 %v3229
        %3287 = vmatpush.msra.mxu0 %v3226
        %3288 = vmatpush.msra.mxu0 %v3223
        %3289 = vmatpush.msra.mxu0 %v3220
        %3290 = vmatpush.msra.mxu0 %v3217
        %3291 = vmatpush.msra.mxu0 %v3214
        %3292 = vmatpush.msra.mxu0 %v3211
        %3293 = vmatpush.msra.mxu0 %v3208
        %3294 = vmatpush.msra.mxu0 %v3205
        %3295 = vmatpush.msra.mxu0 %v3202
        %3296 = vmatpush.msra.mxu0 %v3199
        %3297 = vmatpush.msra.mxu0 %v3196
        %3298 = vmatpush.msra.mxu0 %v3193
        %3299 = vmatpush.msra.mxu0 %v3190
        %3300 = vmatmul.f32.gmra.mxu0 %v3187
        %v3301 = vpop.f32.mrf.mxu0
        %v3302 = vadd.f32 %v3240, %v3301
        %3303 = vdwg.mxu0
        %3304 = vmatpush.xpose.msra.mxu0 0.0
        %3305 = vmatpush.xpose.msra.mxu0 0.0
        %3306 = vmatpush.xpose.msra.mxu0 0.0
        %3307 = vmatpush.xpose.msra.mxu0 0.0
        %3308 = vmatpush.xpose.msra.mxu0 0.0
        %3309 = vmatpush.xpose.msra.mxu0 0.0
        %3310 = vmatpush.xpose.msra.mxu0 0.0
        %3311 = vmatpush.xpose.msra.mxu0 0.0
        %3312 = vmatpush.xpose.msra.mxu0 0.0
        %3313 = vmatpush.xpose.msra.mxu0 0.0
        %3314 = vmatpush.xpose.msra.mxu0 0.0
        %3315 = vmatpush.xpose.msra.mxu0 0.0
        %3316 = vmatpush.xpose.msra.mxu0 0.0
        %3317 = vmatpush.xpose.msra.mxu0 0.0
        %3318 = vmatpush.xpose.msra.mxu0 0.0
        %3319 = vmatpush.xpose.msra.mxu0 %v3282
        %3320 = vmatmul.f32.gmra.mxu0 %v3262
        %v3321 = vpop.f32.mrf.mxu0
        %v3322 = vadd.f32 0.0, %v3321
        %3323 = vdwg.mxu0
        %v3324 = vlaneseq
        %v3325 = vand.u32 %v3324, 127
        %vm3326 = vcmp.lt.s32.totalorder %v3325, 5
        %v3327 = vsel %vm3326, %v3322, -1e+30
        %vm3328 = vcmask 64512
        %v3329 = vsel %vm3328, %v3327, -inf
        %3330 = vmax.xlane.f32.xlu0 %v3329
        %v3331 = vpop.xlane.xlu0 %3330
        %v3332 = vsub.f32 %v3327, %v3331
        %v3333 = vmul.f32 %v3332, 1.442695
        %v3334 = vpow.pop %v3333
        %v3335 = vsel %vm3326, %v3334, 0.0
        %v3336 = vsel %vm3328, %v3335, 0.0
        %3337 = vadd.xlane.f32.xlu0 %v3336
        %v3338 = vpop.xlane.xlu0 %3337
        %v3339 = vrcp.pop %v3338
        %v3340 = vmul.f32 %v3335, %v3339
        %v3342 = vsel %vm3328, %v3340, 0
        %3344 = vmatpush.msra.mxu0 0.0
        %3345 = vmatpush.msra.mxu0 0.0
        %3346 = vmatpush.msra.mxu0 0.0
        %3347 = vmatpush.msra.mxu0 0.0
        %3348 = vmatpush.msra.mxu0 0.0
        %3349 = vmatpush.msra.mxu0 0.0
        %3350 = vmatpush.msra.mxu0 0.0
        %3351 = vmatpush.msra.mxu0 0.0
        %3352 = vmatpush.msra.mxu0 0.0
        %3353 = vmatpush.msra.mxu0 0.0
        %3354 = vmatpush.msra.mxu0 0.0
        %3355 = vmatpush.msra.mxu0 0.0
        %3356 = vmatpush.msra.mxu0 0.0
        %3357 = vmatpush.msra.mxu0 0.0
        %3358 = vmatpush.msra.mxu0 0.0
        %3359 = vmatpush.msra.mxu0 %v3302
        %3360 = vmatmul.f32.gmra.mxu0 %v3342
        %v3361 = vpop.f32.mrf.mxu0
        %v3362 = vadd.f32 0.0, %v3361
        %3363 = vdwg.mxu0
        %v3364 = vld [vmem:[#allocation16] sm:$0xff]
        %v3365 = vld [vmem:[#allocation16 + $0x8] sm:$0xff]
        %v3366 = vld [vmem:[#allocation16 + $0x10] sm:$0xff]
        %v3367 = vld [vmem:[#allocation16 + $0x18] sm:$0xff]
        %v3368 = vld [vmem:[#allocation16 + $0x20] sm:$0xff]
        %v3369 = vld [vmem:[#allocation16 + $0x28] sm:$0xff]
        %v3370 = vld [vmem:[#allocation16 + $0x30] sm:$0xff]
        %v3371 = vld [vmem:[#allocation16 + $0x38] sm:$0xff]
        %v3372 = vld [vmem:[#allocation16 + $0x40] sm:$0xff]
        %v3373 = vld [vmem:[#allocation16 + $0x48] sm:$0xff]
        %v3374 = vld [vmem:[#allocation16 + $0x50] sm:$0xff]
        %v3375 = vld [vmem:[#allocation16 + $0x58] sm:$0xff]
        %v3376 = vld [vmem:[#allocation16 + $0x60] sm:$0xff]
        %v3377 = vld [vmem:[#allocation16 + $0x68] sm:$0xff]
        %v3378 = vld [vmem:[#allocation16 + $0x70] sm:$0xff]
        %v3379 = vld [vmem:[#allocation16 + $0x78] sm:$0xff]
        %v3380 = vld [vmem:[#allocation16 + $0x80] sm:$0xff]
        %v3381 = vld [vmem:[#allocation16 + $0x88] sm:$0xff]
        %v3382 = vld [vmem:[#allocation16 + $0x90] sm:$0xff]
        %v3383 = vld [vmem:[#allocation16 + $0x98] sm:$0xff]
        %v3384 = vld [vmem:[#allocation16 + $0xa0] sm:$0xff]
        %v3385 = vld [vmem:[#allocation16 + $0xa8] sm:$0xff]
        %v3386 = vld [vmem:[#allocation16 + $0xb0] sm:$0xff]
        %v3387 = vld [vmem:[#allocation16 + $0xb8] sm:$0xff]
        %v3388 = vld [vmem:[#allocation16 + $0xc0] sm:$0xff]
        %v3389 = vld [vmem:[#allocation16 + $0xc8] sm:$0xff]
        %v3390 = vld [vmem:[#allocation16 + $0xd0] sm:$0xff]
        %v3391 = vld [vmem:[#allocation16 + $0xd8] sm:$0xff]
        %v3392 = vld [vmem:[#allocation16 + $0xe0] sm:$0xff]
        %v3393 = vld [vmem:[#allocation16 + $0xe8] sm:$0xff]
        %v3394 = vld [vmem:[#allocation16 + $0xf0] sm:$0xff]
        %v3395 = vld [vmem:[#allocation16 + $0xf8] sm:$0xff]
        %v3396 = vld [vmem:[%s13] sm:$0x1]
        %v3398 = vperm.slane %v3396, 0
        %3400 = vmatpush.msra.mxu0 %v3379
        %3401 = vmatpush.msra.mxu0 %v3378
        %3402 = vmatpush.msra.mxu0 %v3377
        %3403 = vmatpush.msra.mxu0 %v3376
        %3404 = vmatpush.msra.mxu0 %v3375
        %3405 = vmatpush.msra.mxu0 %v3374
        %3406 = vmatpush.msra.mxu0 %v3373
        %3407 = vmatpush.msra.mxu0 %v3372
        %3408 = vmatpush.msra.mxu0 %v3371
        %3409 = vmatpush.msra.mxu0 %v3370
        %3410 = vmatpush.msra.mxu0 %v3369
        %3411 = vmatpush.msra.mxu0 %v3368
        %3412 = vmatpush.msra.mxu0 %v3367
        %3413 = vmatpush.msra.mxu0 %v3366
        %3414 = vmatpush.msra.mxu0 %v3365
        %3415 = vmatpush.msra.mxu0 %v3364
        %3416 = vmatmul.f32.gmra.mxu0 %v3302
        %v3417 = vpop.f32.mrf.mxu0
        %v3418 = vadd.f32 %v3398, %v3417
        %3419 = vdwg.mxu0
        %3420 = vmatpush.msra.mxu0 %v3395
        %3421 = vmatpush.msra.mxu0 %v3394
        %3422 = vmatpush.msra.mxu0 %v3393
        %3423 = vmatpush.msra.mxu0 %v3392
        %3424 = vmatpush.msra.mxu0 %v3391
        %3425 = vmatpush.msra.mxu0 %v3390
        %3426 = vmatpush.msra.mxu0 %v3389
        %3427 = vmatpush.msra.mxu0 %v3388
        %3428 = vmatpush.msra.mxu0 %v3387
        %3429 = vmatpush.msra.mxu0 %v3386
        %3430 = vmatpush.msra.mxu0 %v3385
        %3431 = vmatpush.msra.mxu0 %v3384
        %3432 = vmatpush.msra.mxu0 %v3383
        %3433 = vmatpush.msra.mxu0 %v3382
        %3434 = vmatpush.msra.mxu0 %v3381
        %3435 = vmatpush.msra.mxu0 %v3380
        %3436 = vmatmul.f32.gmra.mxu0 %v3362
        %v3437 = vpop.f32.mrf.mxu0
        %v3438 = vadd.f32 %v3418, %v3437
        %3439 = vdwg.mxu0
        %3440 = vst [vmem:[%s645] sm:$0xff] %v3438
        %3441 = vst [vmem:[%s652] sm:$0xff] %v3302
        %3442 = vst [vmem:[%s652 + $0x8] sm:$0xff] %v3362
        %s3443 = sand.u32 %s347, 1
        %s3444 = scalar_lea.sflag [#allocation4], %s3443
        %s3445 = sand.u32 %s347, 1
        %s3446 = smul.addr %s3445, 8
        %s3447 = scalar_lea.vmem [#allocation17], %s3446
        %s3448 = sand.u32 %s373, 1
        %s3449 = scalar_lea.sflag [#allocation19], %s3448
        %s3450 = sand.u32 %s373, 1
        %s3451 = smul.addr %s3450, 16
        %s3452 = scalar_lea.vmem [#allocation18], %s3451
        // Predicated region
        $region113: #{tpu_custom_call.1} parent=75 // pred_check
          %p3453 = pneg %p357
        $region114: #{tpu_custom_call.1} parent=75 // pred_check_branch
          %3455 = sbr.rel (%p3453) target = $region116
        $region115: #{tpu_custom_call.1} parent=75 // pred_region
          %3457 = vsyncadd %s3444, 0
          %s3458 = smul.addr %s40, 8
          %s3459 = scalar_lea.hbm %s14, %s3458
          %s3461 = sshll.u32 %s3447, 4
          %s3462 = int_to_ptr.vmem [resolvable:$true] %s3461
          %s3463 = sshll.u32 %s3459, 4
          %s3464 = int_to_ptr.hbm [resolvable:$true] %s3463
          %3466 = dma.vmem_to_hbm [thread:$0]  %s3462, 128, %s3464, %s3444
        $region116: #{tpu_custom_call.1} parent=75 // pred_fallthru
          _
        // Predicated region
        $region117: #{tpu_custom_call.1} parent=75 // pred_check
          %p3467 = pneg %p383
        $region118: #{tpu_custom_call.1} parent=75 // pred_check_branch
          %3469 = sbr.rel (%p3467) target = $region120
        $region119: #{tpu_custom_call.1} parent=75 // pred_region
          %3471 = vsyncadd %s3449, 0
          %s3472 = smul.addr %s40, 2
          %s3473 = smul.addr %s3472, 8
          %s3474 = scalar_lea.hbm %s15, %s3473
          %s3476 = sshll.u32 %s3452, 4
          %s3477 = int_to_ptr.vmem [resolvable:$true] %s3476
          %s3478 = sshll.u32 %s3474, 4
          %s3479 = int_to_ptr.hbm [resolvable:$true] %s3478
          %3481 = dma.vmem_to_hbm [thread:$0]  %s3477, 256, %s3479, %s3449
        $region120: #{tpu_custom_call.1} parent=75 // pred_fallthru
          _
      $region76: #{tpu_custom_call.1} parent=5 // pred_fallthru
        _
      %p3482 = scmp.le.s32.totalorder 2, %s35
      // Predicated region
      $region121: #{tpu_custom_call.1} parent=5 // pred_check
        %p3483 = pneg %p3482
      $region122: #{tpu_custom_call.1} parent=5 // pred_check_branch
        %3485 = sbr.rel (%p3483) target = $region124
      $region123: #{tpu_custom_call.1} parent=5 // pred_region
        %s3486 = ssub.s32 %s35, 2
        // Predicated region
        $region125: #{tpu_custom_call.1} parent=123 // pred_check
          %p3487 = pneg %p363
        $region126: #{tpu_custom_call.1} parent=123 // pred_check_branch
          %3489 = sbr.rel (%p3487) target = $region128
        $region127: #{tpu_custom_call.1} parent=123 // pred_region
          %s3490 = sand.u32 %s348, 1
          %s3491 = scalar_lea.sflag [#allocation4], %s3490
          %s3492 = sand.u32 %s348, 1
          %s3493 = smul.addr %s3492, 8
          %s3494 = scalar_lea.vmem [#allocation17], %s3493
          %3496 = dma.done %s3491, 128
        $region128: #{tpu_custom_call.1} parent=123 // pred_fallthru
          _
        // Predicated region
        $region129: #{tpu_custom_call.1} parent=123 // pred_check
          %p3497 = pneg %p389
        $region130: #{tpu_custom_call.1} parent=123 // pred_check_branch
          %3499 = sbr.rel (%p3497) target = $region132
        $region131: #{tpu_custom_call.1} parent=123 // pred_region
          %s3500 = sand.u32 %s374, 1
          %s3501 = scalar_lea.sflag [#allocation19], %s3500
          %s3502 = sand.u32 %s374, 1
          %s3503 = smul.addr %s3502, 16
          %s3504 = scalar_lea.vmem [#allocation18], %s3503
          %3506 = dma.done %s3501, 256
        $region132: #{tpu_custom_call.1} parent=123 // pred_fallthru
          _
      $region124: #{tpu_custom_call.1} parent=5 // pred_fallthru
        _
    $region6: #{tpu_custom_call.1} parent=1 // loop_footer
      %s39 = sadd.s32 1, %s35
    $region7: #{tpu_custom_call.1} parent=1 // loop_footer_branch
      %34 = sbr.rel target = $region3
    $region8: #{tpu_custom_call.1} parent=1 // loop_exit
      _
    %3507 = vsyncpa [#allocation3], 1
    %s3508 = scalar_lea.sflag [#allocation3], 1
    %3509 = vsyncpa %s3508, 1
    %3510 = vsyncpa [#allocation6], 1
    %3511 = vsyncpa [#allocation9], 1
    %3512 = vsyncpa [#allocation12], 1
    %3513 = vsyncpa [#allocation15], 1
    %3514 = vsyncpa [#allocation4], 1
    %s3515 = scalar_lea.sflag [#allocation4], 1
    %3516 = vsyncpa %s3515, 1
    %3517 = vsyncpa [#allocation19], 1
    %s3518 = scalar_lea.sflag [#allocation19], 1
    %3519 = vsyncpa %s3518, 1

</llo_original>
